<compile_context>
chip_gen: v7x
topology: tpu7x:2x2x1
jax: 0.10.0
libtpu: 0.0.40
codegen_flags: <defaults>
</compile_context>

<pallas_src>
import functools
import math

import jax
import jax.numpy as jnp
from jax import lax
from jax.experimental import pallas as pl
from jax.experimental.pallas import tpu as pltpu

LN_EPS = 1e-5  # nn.LayerNorm default


# ----------------------------- in-kernel helpers -----------------------------
def _layernorm(x, w, b):
    mu = jnp.mean(x, axis=-1, keepdims=True)
    var = jnp.mean((x - mu) ** 2, axis=-1, keepdims=True)
    return (x - mu) * jax.lax.rsqrt(var + LN_EPS) * w + b


def _gelu(x):
    # TODO(synk): nn.GELU uses the exact erf form; tanh approximation used here
    # (erf has no reliable Mosaic lowering), max abs error ~3e-4.
    c = 0.7978845608028654  # sqrt(2/pi)
    return 0.5 * x * (1.0 + jnp.tanh(c * (x + 0.044715 * x * x * x)))


# ------------------------------ tiling helpers --------------------------------
def _pick_batch_tile(B, S, max_rows=512):
    """Largest divisor of B whose flattened row tile (bt * S) fits max_rows."""
    bt = 1
    for cand in range(1, B + 1):
        if B % cand == 0 and cand * S <= max_rows:
            bt = cand
    return bt


def _pick_head_tile(B, S, D, max_bytes=4 << 20):
    """Batch tile for the classifier head.  The (bt, A_pad) output block needs
    bt % 8 == 0 or bt == B (sublane alignment of the output BlockSpec)."""
    cands = sorted({d for d in range(8, B + 1, 8) if B % d == 0} | {B})
    best = cands[0]
    for d in cands:
        if d * S * D * 2 <= max_bytes:
            best = d
    return best


def _stack_vmem_limit(per_layer_weight_bytes, z_block_bytes, scratch_bytes):
    """VMEM budget: double-buffered per-layer weights + buffered z in/out
    blocks + f32 residual scratch + headroom for intermediates/spills,
    clamped to 3/4 of physical VMEM (v7x = 64 MiB per TensorCore)."""
    need = 2 * per_layer_weight_bytes + 4 * z_block_bytes + scratch_bytes
    need = int(need * 1.5) + (4 << 20)
    try:
        phys = int(pltpu.get_tpu_info().vmem_capacity_bytes)
    except Exception:
        phys = 64 << 20
    return max(8 << 20, min(need, (phys * 3) // 4))


# ------------------------------- Pallas kernels -------------------------------
def _embed_linear_kernel(x_ref, w_ref, b_ref, pos_ref, mod_ref, o_ref):
    # (Bt*S, K)bf16 @ (K, D)bf16 -> f32, + bias + positional + modality embed.
    acc = jnp.dot(x_ref[...], w_ref[...], preferred_element_type=jnp.float32)
    o_ref[...] = (acc + b_ref[...] + pos_ref[...] + mod_ref[...]).astype(o_ref.dtype)


def pallas_embed_linear(x, w, b, pos, mod, bt):
    """x:(B,S,K) bf16, w:(K,D) bf16 -> (B,S,D) bf16, fused +pos +mod.
    Rows are flattened to (bt*S, K) per grid step; weight/pos/mod resident."""
    B, S, K = x.shape
    D = w.shape[1]
    nb = B // bt
    mt = bt * S
    x_flat = x.reshape(nb, mt, K)
    pos_tile = jnp.tile(pos.reshape(S, D), (bt, 1)).astype(jnp.float32)  # (mt, D)
    mod2 = mod.reshape(1, D).astype(jnp.float32)

    out = pl.pallas_call(
        _embed_linear_kernel,
        out_shape=jax.ShapeDtypeStruct((nb, mt, D), jnp.bfloat16),
        grid=(nb,),
        in_specs=[pl.BlockSpec((None, mt, K), lambda i: (i, 0, 0)),
                  pl.BlockSpec((K, D), lambda i: (0, 0)),
                  pl.BlockSpec((1, D), lambda i: (0, 0)),
                  pl.BlockSpec((mt, D), lambda i: (0, 0)),
                  pl.BlockSpec((1, D), lambda i: (0, 0))],
        out_specs=pl.BlockSpec((None, mt, D), lambda i: (i, 0, 0)),
        compiler_params=pltpu.CompilerParams(
            dimension_semantics=("parallel",)),
    )(x_flat, w, b, pos_tile, mod2)
    return out.reshape(B, S, D)


def _stacked_block_kernel(z_ref, ln1w, ln1b, qkvw, qkvb, projw, projb,
                          ln2w, ln2b, fc1w, fc1b, fc2w, fc2b,
                          o_ref, z_acc, *, num_heads, seq_len, batch_tile):
    layer = pl.program_id(1)

    @pl.when(layer == 0)
    def _():
        z_acc[...] = z_ref[...].astype(jnp.float32)   # activation read once

    x = z_acc[...]                                    # (M, D) f32 residual, M = Bt*S
    M, D = x.shape
    H = num_heads
    dh = D // H
    S = seq_len
    scale = dh ** -0.5

    # ---- multi-head self-attention (pre-LN, timm Block semantics) ----
    h = _layernorm(x, ln1w[...], ln1b[...])           # f32
    hb = h.astype(jnp.bfloat16)

    def head_body(hh, attn):
        # fused per-head QKV: one (M, D) @ (D, 3*dh) matmul (N = 3*dh).
        qkv = jnp.dot(hb, qkvw[hh],
                      preferred_element_type=jnp.float32) + qkvb[hh]
        q = (qkv[:, :dh] * scale).astype(jnp.bfloat16)
        k = qkv[:, dh:2 * dh].astype(jnp.bfloat16)
        v = qkv[:, 2 * dh:].astype(jnp.bfloat16)
        pvs = []
        for bb in range(batch_tile):                  # attention is per batch elem
            lo, hi = bb * S, (bb + 1) * S
            qb, kb, vb = q[lo:hi], k[lo:hi], v[lo:hi]
            s = lax.dot_general(qb, kb, (((1,), (1,)), ((), ())),
                                preferred_element_type=jnp.float32)
            s = s - jnp.max(s, axis=-1, keepdims=True)
            p = jnp.exp(s)
            p = p * pl.reciprocal(jnp.sum(p, axis=-1, keepdims=True), approx=True)
            pvs.append(jnp.dot(p.astype(jnp.bfloat16), vb,
                               preferred_element_type=jnp.float32))
        pv = pvs[0] if batch_tile == 1 else jnp.concatenate(pvs, axis=0)
        # accumulate this head's contribution through its proj_w rows
        # (sublane-axis weight stacking, no lane concat of heads).
        return attn + jnp.dot(pv.astype(jnp.bfloat16), projw[hh],
                              preferred_element_type=jnp.float32)

    attn = lax.fori_loop(0, H, head_body, jnp.zeros((M, D), jnp.float32),
                         unroll=True)
    x = x + attn + projb[...]

    # ---- MLP ----
    h2 = _layernorm(x, ln2w[...], ln2b[...])          # f32
    h2 = jnp.dot(h2.astype(jnp.bfloat16), fc1w[...],
                 preferred_element_type=jnp.float32) + fc1b[...]
    h2 = _gelu(h2)                                    # f32
    h2 = jnp.dot(h2.astype(jnp.bfloat16), fc2w[...],
                 preferred_element_type=jnp.float32) + fc2b[...]
    x = x + h2

    z_acc[...] = x

    @pl.when(layer == pl.num_programs(1) - 1)
    def _():
        o_ref[...] = x.astype(o_ref.dtype)            # activation write once


def pallas_transformer_stack(z, blk, num_heads):
    """All `depth` blocks in one pallas_call; residual stays VMEM-resident.
    grid = (batch_tiles, depth): weights streamed once per batch *tile*."""
    B, S, D = z.shape
    L = blk['qkv_w'].shape[0]
    bt = _pick_batch_tile(B, S, max_rows=512)
    # NOTE(v7x): with 2 TensorCores, prefer B/bt >= 2 and even when B allows it.
    nb = B // bt
    mt = bt * S
    z_flat = z.reshape(nb, mt, D)

    names = ['ln1_w', 'ln1_b', 'qkv_w', 'qkv_b', 'proj_w', 'proj_b',
             'ln2_w', 'ln2_b', 'fc1_w', 'fc1_b', 'fc2_w', 'fc2_b']
    weights = [blk[n] for n in names]

    def layer_spec(arr):
        nd = arr.ndim
        return pl.BlockSpec((None,) + arr.shape[1:],
                            lambda b, l, _n=nd: (l,) + (0,) * (_n - 1))

    weight_specs = [layer_spec(w) for w in weights]
    per_layer_bytes = sum(math.prod(w.shape[1:]) * w.dtype.itemsize for w in weights)
    vmem_limit = _stack_vmem_limit(per_layer_bytes, mt * D * 2, mt * D * 4)

    out = pl.pallas_call(
        functools.partial(_stacked_block_kernel, num_heads=num_heads,
                          seq_len=S, batch_tile=bt),
        out_shape=jax.ShapeDtypeStruct((nb, mt, D), jnp.bfloat16),
        grid=(nb, L),
        in_specs=[pl.BlockSpec((None, mt, D), lambda b, l: (b, 0, 0))] + weight_specs,
        out_specs=pl.BlockSpec((None, mt, D), lambda b, l: (b, 0, 0)),
        scratch_shapes=[pltpu.VMEM((mt, D), jnp.float32)],
        input_output_aliases={0: 0},
        compiler_params=pltpu.CompilerParams(
            dimension_semantics=("parallel", "arbitrary"),
            vmem_limit_bytes=vmem_limit),
    )(z_flat, *weights)
    return out.reshape(B, S, D)


def _head_kernel(z_ref, lnw, lnb, w1, b1, w2, b2, o_ref):
    z = z_ref[...].astype(jnp.float32)               # (Bt, S, D)
    pooled = jnp.mean(z, axis=1)                     # Reduce('b s c -> b c', 'mean')
    h = _layernorm(pooled, lnw[...], lnb[...])
    h = jnp.dot(h.astype(jnp.bfloat16), w1[...],
                preferred_element_type=jnp.float32) + b1[...]
    h = _gelu(h)
    o_ref[...] = jnp.dot(h.astype(jnp.bfloat16), w2[...],
                         preferred_element_type=jnp.float32) + b2[...]


def pallas_cls_head(z, head, bt):
    B, S, D = z.shape
    A_pad = head['w2'].shape[1]                      # padded to multiple of 128
    nb = B // bt

    def const(shape):
        n = len(shape)
        return pl.BlockSpec(shape, lambda i, _n=n: (0,) * _n)

    return pl.pallas_call(
        _head_kernel,
        out_shape=jax.ShapeDtypeStruct((B, A_pad), jnp.float32),
        grid=(nb,),
        in_specs=[pl.BlockSpec((bt, S, D), lambda i: (i, 0, 0)),
                  const((1, D)), const((1, D)),
                  const((D, D)), const((1, D)),
                  const((D, A_pad)), const((1, A_pad))],
        out_specs=pl.BlockSpec((bt, A_pad), lambda i: (i, 0)),
        compiler_params=pltpu.CompilerParams(
            dimension_semantics=("parallel",)),
    )(z, head['ln_w'], head['ln_b'], head['w1'], head['b1'],
      head['w2'], head['b2'])


# ------------------------------ glue (plain JAX) ------------------------------
def extract_patches(img, p):
    # img: (B, C, H, W) NCHW -> (B, num_patches, C*p*p) (Conv2d flatten order)
    B, C, H, W = img.shape
    gh, gw = H // p, W // p
    x = img.reshape(B, C, gh, p, gw, p)
    x = jnp.transpose(x, (0, 2, 4, 1, 3, 5))         # (B, gh, gw, C, p, p)
    return x.reshape(B, gh * gw, C * p * p)


def forward(params, img, qus, cfg):
    B = img.shape[0]
    D = cfg['embed_dim']
    p = cfg['patch_size']

    # ConvPatchEmbedding (conv k=s=patch -> matmul), fused with +pos[1:] +mod.
    patches = extract_patches(img, p).astype(jnp.bfloat16)          # (B, N, Cpp)
    bt_img = _pick_batch_tile(B, patches.shape[1], max_rows=512)
    x = pallas_embed_linear(patches, params['patch_w'], params['patch_b'],
                            params['img_pos'][:, 1:, :], params['img_mod'], bt_img)
    img_cls = (params['img_cls'] + params['img_pos'][:, :1, :]
               + params['img_mod']).astype(jnp.bfloat16)
    x = jnp.concatenate([jnp.broadcast_to(img_cls, (B, 1, D)), x], axis=1)

    # QusEmbeddingMap: embedding lookup (glue gather) + linear, fused +pos +mod.
    qemb = jnp.take(params['word_emb'], qus, axis=0).astype(jnp.bfloat16)
    bt_qus = _pick_batch_tile(B, qemb.shape[1], max_rows=512)
    y = pallas_embed_linear(qemb, params['qus_w'], params['qus_b'],
                            params['qus_pos'][:, 1:, :], params['qus_mod'], bt_qus)
    qus_cls = (params['qus_cls'] + params['qus_pos'][:, :1, :]
               + params['qus_mod']).astype(jnp.bfloat16)
    y = jnp.concatenate([jnp.broadcast_to(qus_cls, (B, 1, D)), y], axis=1)

    z = jnp.concatenate([x, y], axis=1)                              # (B, S, D)

    # TODO(synk): trans_mix (train-mode mixup) path not implemented; test mode only.
    z = pallas_transformer_stack(z, params['blocks'], cfg['num_heads'])

    bt_head = _pick_head_tile(B, z.shape[1], D)
    logits = pallas_cls_head(z, params['head'], bt_head)             # (B, A_pad)
    return logits[:, :cfg['ans_size']]


# ------------------------------ parameter setup ------------------------------
def init_params(key, cfg):
    D = cfg['embed_dim']
    p = cfg['patch_size']
    C = cfg['in_chans']
    A = cfg['ans_size']
    H = cfg['num_heads']
    L = cfg['depth']
    dh = D // H
    mlp = cfg['mlp_ratio'] * D
    n_patch = (cfg['img_size'] // p) ** 2
    Sq = cfg['qus_seq_len']
    qd = cfg['qus_embedding_dim']
    W = cfg['word_size']
    A_pad = ((A + 127) // 128) * 128

    keys = iter(jax.random.split(key, 32))

    def rnd(shape, scale):
        return jax.random.normal(next(keys), shape, jnp.float32) * scale

    def w_bf16(shape, fan_in):
        return rnd(shape, fan_in ** -0.5).astype(jnp.bfloat16)

    params = {
        # Conv2d(in_chans, D, k=p, s=p) as a matmul over (c,ph,pw)-flat patches
        'patch_w': w_bf16((C * p * p, D), C * p * p),
        'patch_b': jnp.zeros((1, D), jnp.float32),
        # GloVe table replaced with deterministic synthetic embedding
        'word_emb': rnd((W, qd), 0.02),
        'qus_w': w_bf16((qd, D), qd),
        'qus_b': jnp.zeros((1, D), jnp.float32),
        'img_cls': rnd((1, 1, D), 0.02),
        'img_mod': rnd((1, 1, D), 0.02),
        # TODO(synk): sincos positional embeddings replaced by synthetic values.
        'img_pos': rnd((1, n_patch + 1, D), 0.02),
        'qus_cls': rnd((1, 1, D), 0.02),
        'qus_mod': rnd((1, 1, D), 0.02),
        'qus_pos': rnd((1, Sq + 1, D), 0.02),
    }

    params['blocks'] = {
        'ln1_w': jnp.ones((L, 1, D), jnp.float32),
        'ln1_b': jnp.zeros((L, 1, D), jnp.float32),
        # per-head fused QKV: (L, H, D, 3*dh); lane order [q | k | v] per head
        'qkv_w': w_bf16((L, H, D, 3 * dh), D),
        'qkv_b': jnp.zeros((L, H, 1, 3 * dh), jnp.float32),
        'proj_w': w_bf16((L, H, dh, D), D),
        'proj_b': jnp.zeros((L, 1, D), jnp.float32),
        'ln2_w': jnp.ones((L, 1, D), jnp.float32),
        'ln2_b': jnp.zeros((L, 1, D), jnp.float32),
        'fc1_w': w_bf16((L, D, mlp), D), 'fc1_b': jnp.zeros((L, 1, mlp), jnp.float32),
        'fc2_w': w_bf16((L, mlp, D), mlp), 'fc2_b': jnp.zeros((L, 1, D), jnp.float32),
    }

    w2 = jnp.pad(rnd((D, A), D ** -0.5), ((0, 0), (0, A_pad - A)))
    params['head'] = {
        'ln_w': jnp.ones((1, D), jnp.float32),
        'ln_b': jnp.zeros((1, D), jnp.float32),
        'w1': w_bf16((D, D), D),
        'b1': jnp.zeros((1, D), jnp.float32),
        'w2': w2.astype(jnp.bfloat16),
        'b2': jnp.zeros((1, A_pad), jnp.float32),
    }
    return params


# ----------------------------------- main -------------------------------------
if __name__ == "__main__":
    cfg = dict(img_size=16, patch_size=8, in_chans=3, embed_dim=32, depth=2,
               num_heads=4, ans_size=16, mlp_ratio=4, word_size=50,
               qus_embedding_dim=16, qus_seq_len=8)

    root = jax.random.PRNGKey(0)
    k_params, k_img, k_qus = jax.random.split(root, 3)

    params = init_params(k_params, cfg)
    img = jax.random.normal(
        k_img, (2, cfg['in_chans'], cfg['img_size'], cfg['img_size']), jnp.float32)
    qus = jax.random.randint(k_qus, (2, cfg['qus_seq_len']), 0, cfg['word_size'])

    fwd = jax.jit(functools.partial(forward, cfg=cfg))
    out = jax.block_until_ready(fwd(params, img, qus))
    assert out.shape == (2, cfg['ans_size'])
    assert bool(jnp.all(jnp.isfinite(out)))
    print("KERNEL_OK")
</pallas_src>

<mosaic_0001>
module attributes {stable_mosaic.version = 11 : i64} {
  func.func @_embed_linear_kernel(%arg0: i32, %arg1: memref<1x16x16xbf16, #tpu.memory_space<vmem>>, %arg2: memref<16x32xbf16, #tpu.memory_space<vmem>>, %arg3: memref<1x32xf32, #tpu.memory_space<vmem>>, %arg4: memref<16x32xf32, #tpu.memory_space<vmem>>, %arg5: memref<1x32xf32, #tpu.memory_space<vmem>>, %arg6: memref<1x16x32xbf16, #tpu.memory_space<vmem>>) attributes {dimension_semantics = [#tpu.dimension_semantics<parallel>], iteration_bounds = array<i64: 1>, scalar_prefetch = 0 : i64, scratch_operands = 0 : i64, tpu.core_type = #tpu.core_type<tc>, window_params = [{transform_indices = @transform_0, window_bounds = array<i64: 1, 16, 16>}, {pipeline_mode = #tpu.pipeline_mode<synchronous>, transform_indices = @transform_1, window_bounds = array<i64: 16, 32>}, {pipeline_mode = #tpu.pipeline_mode<synchronous>, transform_indices = @transform_2, window_bounds = array<i64: 1, 32>}, {pipeline_mode = #tpu.pipeline_mode<synchronous>, transform_indices = @transform_3, window_bounds = array<i64: 16, 32>}, {pipeline_mode = #tpu.pipeline_mode<synchronous>, transform_indices = @transform_4, window_bounds = array<i64: 1, 32>}, {transform_indices = @transform_5, window_bounds = array<i64: 1, 16, 32>}]} {
    %c0 = arith.constant 0 : index
    %c0_0 = arith.constant 0 : index
    %c0_1 = arith.constant 0 : index
    %0 = vector.load %arg1[%c0, %c0_0, %c0_1] : memref<1x16x16xbf16, #tpu.memory_space<vmem>>, vector<1x16x16xbf16>
    %1 = vector.shape_cast %0 : vector<1x16x16xbf16> to vector<16x16xbf16>
    %c0_2 = arith.constant 0 : index
    %c0_3 = arith.constant 0 : index
    %2 = vector.load %arg2[%c0_2, %c0_3] : memref<16x32xbf16, #tpu.memory_space<vmem>>, vector<16x32xbf16>
    %cst = arith.constant dense<0.000000e+00> : vector<16x32xf32>
    %3 = tpu.matmul %1, %2, %cst {dimension_numbers = #tpu.dot_dimension_numbers<[1], [0], [0], [1], [0, 0, 1, 1], [], []>} : vector<16x16xbf16>, vector<16x32xbf16>, vector<16x32xf32> -> vector<16x32xf32>
    %c0_4 = arith.constant 0 : index
    %c0_5 = arith.constant 0 : index
    %4 = vector.load %arg3[%c0_4, %c0_5] : memref<1x32xf32, #tpu.memory_space<vmem>>, vector<1x32xf32>
    %5 = vector.broadcast %4 : vector<1x32xf32> to vector<16x32xf32>
    %6 = arith.addf %3, %5 : vector<16x32xf32>
    %c0_6 = arith.constant 0 : index
    %c0_7 = arith.constant 0 : index
    %7 = vector.load %arg4[%c0_6, %c0_7] : memref<16x32xf32, #tpu.memory_space<vmem>>, vector<16x32xf32>
    %8 = arith.addf %6, %7 : vector<16x32xf32>
    %c0_8 = arith.constant 0 : index
    %c0_9 = arith.constant 0 : index
    %9 = vector.load %arg5[%c0_8, %c0_9] : memref<1x32xf32, #tpu.memory_space<vmem>>, vector<1x32xf32>
    %10 = vector.broadcast %9 : vector<1x32xf32> to vector<16x32xf32>
    %11 = arith.addf %8, %10 : vector<16x32xf32>
    %12 = arith.truncf %11 : vector<16x32xf32> to vector<16x32xbf16>
    %c0_10 = arith.constant 0 : index
    %c0_11 = arith.constant 0 : index
    %c0_12 = arith.constant 0 : index
    %13 = vector.load %arg6[%c0_10, %c0_11, %c0_12] : memref<1x16x32xbf16, #tpu.memory_space<vmem>>, vector<1x16x32xbf16>
    %14 = vector.shape_cast %13 : vector<1x16x32xbf16> to vector<16x32xbf16>
    %15 = vector.shape_cast %12 : vector<16x32xbf16> to vector<1x16x32xbf16>
    tpu.vector_store %arg6[%c0_10, %c0_11, %c0_12], %15 {strides = array<i32>} : memref<1x16x32xbf16, #tpu.memory_space<vmem>>, vector<1x16x32xbf16>,
    return
  }
  func.func @transform_0(%arg0: i32) -> (i32, i32, i32) {
    %c0_i32 = arith.constant 0 : i32
    %c0_i32_0 = arith.constant 0 : i32
    %c0_i32_1 = arith.constant 0 : i32
    return %arg0, %c0_i32, %c0_i32_0 : i32, i32, i32
  }
  func.func @transform_1(%arg0: i32) -> (i32, i32) {
    %c0_i32 = arith.constant 0 : i32
    %c0_i32_0 = arith.constant 0 : i32
    %c0_i32_1 = arith.constant 0 : i32
    return %c0_i32, %c0_i32_0 : i32, i32
  }
  func.func @transform_2(%arg0: i32) -> (i32, i32) {
    %c0_i32 = arith.constant 0 : i32
    %c0_i32_0 = arith.constant 0 : i32
    %c0_i32_1 = arith.constant 0 : i32
    return %c0_i32, %c0_i32_0 : i32, i32
  }
  func.func @transform_3(%arg0: i32) -> (i32, i32) {
    %c0_i32 = arith.constant 0 : i32
    %c0_i32_0 = arith.constant 0 : i32
    %c0_i32_1 = arith.constant 0 : i32
    return %c0_i32, %c0_i32_0 : i32, i32
  }
  func.func @transform_4(%arg0: i32) -> (i32, i32) {
    %c0_i32 = arith.constant 0 : i32
    %c0_i32_0 = arith.constant 0 : i32
    %c0_i32_1 = arith.constant 0 : i32
    return %c0_i32, %c0_i32_0 : i32, i32
  }
  func.func @transform_5(%arg0: i32) -> (i32, i32, i32) {
    %c0_i32 = arith.constant 0 : i32
    %c0_i32_0 = arith.constant 0 : i32
    %c0_i32_1 = arith.constant 0 : i32
    return %arg0, %c0_i32, %c0_i32_0 : i32, i32, i32
  }
}

module attributes {stable_mosaic.version = 11 : i64} {
  func.func @_embed_linear_kernel(%arg0: i32, %arg1: memref<1x8x192xbf16, #tpu.memory_space<vmem>>, %arg2: memref<192x32xbf16, #tpu.memory_space<vmem>>, %arg3: memref<1x32xf32, #tpu.memory_space<vmem>>, %arg4: memref<8x32xf32, #tpu.memory_space<vmem>>, %arg5: memref<1x32xf32, #tpu.memory_space<vmem>>, %arg6: memref<1x8x32xbf16, #tpu.memory_space<vmem>>) attributes {dimension_semantics = [#tpu.dimension_semantics<parallel>], iteration_bounds = array<i64: 1>, scalar_prefetch = 0 : i64, scratch_operands = 0 : i64, tpu.core_type = #tpu.core_type<tc>, window_params = [{transform_indices = @transform_0, window_bounds = array<i64: 1, 8, 192>}, {pipeline_mode = #tpu.pipeline_mode<synchronous>, transform_indices = @transform_1, window_bounds = array<i64: 192, 32>}, {pipeline_mode = #tpu.pipeline_mode<synchronous>, transform_indices = @transform_2, window_bounds = array<i64: 1, 32>}, {pipeline_mode = #tpu.pipeline_mode<synchronous>, transform_indices = @transform_3, window_bounds = array<i64: 8, 32>}, {pipeline_mode = #tpu.pipeline_mode<synchronous>, transform_indices = @transform_4, window_bounds = array<i64: 1, 32>}, {transform_indices = @transform_5, window_bounds = array<i64: 1, 8, 32>}]} {
    %c0 = arith.constant 0 : index
    %c0_0 = arith.constant 0 : index
    %c0_1 = arith.constant 0 : index
    %0 = vector.load %arg1[%c0, %c0_0, %c0_1] : memref<1x8x192xbf16, #tpu.memory_space<vmem>>, vector<1x8x192xbf16>
    %1 = vector.shape_cast %0 : vector<1x8x192xbf16> to vector<8x192xbf16>
    %c0_2 = arith.constant 0 : index
    %c0_3 = arith.constant 0 : index
    %2 = vector.load %arg2[%c0_2, %c0_3] : memref<192x32xbf16, #tpu.memory_space<vmem>>, vector<192x32xbf16>
    %cst = arith.constant dense<0.000000e+00> : vector<8x32xf32>
    %3 = tpu.matmul %1, %2, %cst {dimension_numbers = #tpu.dot_dimension_numbers<[1], [0], [0], [1], [0, 0, 1, 1], [], []>} : vector<8x192xbf16>, vector<192x32xbf16>, vector<8x32xf32> -> vector<8x32xf32>
    %c0_4 = arith.constant 0 : index
    %c0_5 = arith.constant 0 : index
    %4 = vector.load %arg3[%c0_4, %c0_5] : memref<1x32xf32, #tpu.memory_space<vmem>>, vector<1x32xf32>
    %5 = vector.broadcast %4 : vector<1x32xf32> to vector<8x32xf32>
    %6 = arith.addf %3, %5 : vector<8x32xf32>
    %c0_6 = arith.constant 0 : index
    %c0_7 = arith.constant 0 : index
    %7 = vector.load %arg4[%c0_6, %c0_7] : memref<8x32xf32, #tpu.memory_space<vmem>>, vector<8x32xf32>
    %8 = arith.addf %6, %7 : vector<8x32xf32>
    %c0_8 = arith.constant 0 : index
    %c0_9 = arith.constant 0 : index
    %9 = vector.load %arg5[%c0_8, %c0_9] : memref<1x32xf32, #tpu.memory_space<vmem>>, vector<1x32xf32>
    %10 = vector.broadcast %9 : vector<1x32xf32> to vector<8x32xf32>
    %11 = arith.addf %8, %10 : vector<8x32xf32>
    %12 = arith.truncf %11 : vector<8x32xf32> to vector<8x32xbf16>
    %c0_10 = arith.constant 0 : index
    %c0_11 = arith.constant 0 : index
    %c0_12 = arith.constant 0 : index
    %13 = vector.load %arg6[%c0_10, %c0_11, %c0_12] : memref<1x8x32xbf16, #tpu.memory_space<vmem>>, vector<1x8x32xbf16>
    %14 = vector.shape_cast %13 : vector<1x8x32xbf16> to vector<8x32xbf16>
    %15 = vector.shape_cast %12 : vector<8x32xbf16> to vector<1x8x32xbf16>
    tpu.vector_store %arg6[%c0_10, %c0_11, %c0_12], %15 {strides = array<i32>} : memref<1x8x32xbf16, #tpu.memory_space<vmem>>, vector<1x8x32xbf16>,
    return
  }
  func.func @transform_0(%arg0: i32) -> (i32, i32, i32) {
    %c0_i32 = arith.constant 0 : i32
    %c0_i32_0 = arith.constant 0 : i32
    %c0_i32_1 = arith.constant 0 : i32
    return %arg0, %c0_i32, %c0_i32_0 : i32, i32, i32
  }
  func.func @transform_1(%arg0: i32) -> (i32, i32) {
    %c0_i32 = arith.constant 0 : i32
    %c0_i32_0 = arith.constant 0 : i32
    %c0_i32_1 = arith.constant 0 : i32
    return %c0_i32, %c0_i32_0 : i32, i32
  }
  func.func @transform_2(%arg0: i32) -> (i32, i32) {
    %c0_i32 = arith.constant 0 : i32
    %c0_i32_0 = arith.constant 0 : i32
    %c0_i32_1 = arith.constant 0 : i32
    return %c0_i32, %c0_i32_0 : i32, i32
  }
  func.func @transform_3(%arg0: i32) -> (i32, i32) {
    %c0_i32 = arith.constant 0 : i32
    %c0_i32_0 = arith.constant 0 : i32
    %c0_i32_1 = arith.constant 0 : i32
    return %c0_i32, %c0_i32_0 : i32, i32
  }
  func.func @transform_4(%arg0: i32) -> (i32, i32) {
    %c0_i32 = arith.constant 0 : i32
    %c0_i32_0 = arith.constant 0 : i32
    %c0_i32_1 = arith.constant 0 : i32
    return %c0_i32, %c0_i32_0 : i32, i32
  }
  func.func @transform_5(%arg0: i32) -> (i32, i32, i32) {
    %c0_i32 = arith.constant 0 : i32
    %c0_i32_0 = arith.constant 0 : i32
    %c0_i32_1 = arith.constant 0 : i32
    return %arg0, %c0_i32, %c0_i32_0 : i32, i32, i32
  }
}

module attributes {stable_mosaic.version = 11 : i64} {
  func.func @_stacked_block_kernel(%arg0: i32, %arg1: i32, %arg2: memref<1x28x32xbf16, #tpu.memory_space<vmem>>, %arg3: memref<1x1x32xf32, #tpu.memory_space<vmem>>, %arg4: memref<1x1x32xf32, #tpu.memory_space<vmem>>, %arg5: memref<1x4x32x24xbf16, #tpu.memory_space<vmem>>, %arg6: memref<1x4x1x24xf32, #tpu.memory_space<vmem>>, %arg7: memref<1x4x8x32xbf16, #tpu.memory_space<vmem>>, %arg8: memref<1x1x32xf32, #tpu.memory_space<vmem>>, %arg9: memref<1x1x32xf32, #tpu.memory_space<vmem>>, %arg10: memref<1x1x32xf32, #tpu.memory_space<vmem>>, %arg11: memref<1x32x128xbf16, #tpu.memory_space<vmem>>, %arg12: memref<1x1x128xf32, #tpu.memory_space<vmem>>, %arg13: memref<1x128x32xbf16, #tpu.memory_space<vmem>>, %arg14: memref<1x1x32xf32, #tpu.memory_space<vmem>>, %arg15: memref<1x28x32xbf16, #tpu.memory_space<vmem>>, %arg16: memref<28x32xf32, #tpu.memory_space<vmem>>) attributes {dimension_semantics = [#tpu.dimension_semantics<parallel>, #tpu.dimension_semantics<arbitrary>], iteration_bounds = array<i64: 1, 2>, scalar_prefetch = 0 : i64, scratch_operands = 1 : i64, tpu.core_type = #tpu.core_type<tc>, window_params = [{transform_indices = @transform_0, window_bounds = array<i64: 1, 28, 32>}, {transform_indices = @transform_1, window_bounds = array<i64: 1, 1, 32>}, {transform_indices = @transform_2, window_bounds = array<i64: 1, 1, 32>}, {transform_indices = @transform_3, window_bounds = array<i64: 1, 4, 32, 24>}, {transform_indices = @transform_4, window_bounds = array<i64: 1, 4, 1, 24>}, {transform_indices = @transform_5, window_bounds = array<i64: 1, 4, 8, 32>}, {transform_indices = @transform_6, window_bounds = array<i64: 1, 1, 32>}, {transform_indices = @transform_7, window_bounds = array<i64: 1, 1, 32>}, {transform_indices = @transform_8, window_bounds = array<i64: 1, 1, 32>}, {transform_indices = @transform_9, window_bounds = array<i64: 1, 32, 128>}, {transform_indices = @transform_10, window_bounds = array<i64: 1, 1, 128>}, {transform_indices = @transform_11, window_bounds = array<i64: 1, 128, 32>}, {transform_indices = @transform_12, window_bounds = array<i64: 1, 1, 32>}, {transform_indices = @transform_13, window_bounds = array<i64: 1, 28, 32>}]} {
    %c0_i32 = arith.constant 0 : i32
    %0 = arith.cmpi eq, %arg1, %c0_i32 : i32
    %1 = arith.extui %0 : i1 to i32
    %c0_i32_0 = arith.constant 0 : i32
    %2 = arith.cmpi ne, %1, %c0_i32_0 : i32
    scf.if %2 {
      %c0_130 = arith.constant 0 : index
      %c0_131 = arith.constant 0 : index
      %c0_132 = arith.constant 0 : index
      %321 = vector.load %arg2[%c0_130, %c0_131, %c0_132] : memref<1x28x32xbf16, #tpu.memory_space<vmem>>, vector<1x28x32xbf16>
      %322 = vector.shape_cast %321 : vector<1x28x32xbf16> to vector<28x32xbf16>
      %323 = arith.extf %322 : vector<28x32xbf16> to vector<28x32xf32>
      %c0_133 = arith.constant 0 : index
      %c0_134 = arith.constant 0 : index
      %324 = vector.load %arg16[%c0_133, %c0_134] : memref<28x32xf32, #tpu.memory_space<vmem>>, vector<28x32xf32>
      tpu.vector_store %arg16[%c0_133, %c0_134], %323 {strides = array<i32>} : memref<28x32xf32, #tpu.memory_space<vmem>>, vector<28x32xf32>,
    } else {
    }
    %c0 = arith.constant 0 : index
    %c0_1 = arith.constant 0 : index
    %3 = vector.load %arg16[%c0, %c0_1] : memref<28x32xf32, #tpu.memory_space<vmem>>, vector<28x32xf32>
    %c0_2 = arith.constant 0 : index
    %c0_3 = arith.constant 0 : index
    %c0_4 = arith.constant 0 : index
    %4 = vector.load %arg3[%c0_2, %c0_3, %c0_4] : memref<1x1x32xf32, #tpu.memory_space<vmem>>, vector<1x1x32xf32>
    %5 = vector.shape_cast %4 : vector<1x1x32xf32> to vector<1x32xf32>
    %c0_5 = arith.constant 0 : index
    %c0_6 = arith.constant 0 : index
    %c0_7 = arith.constant 0 : index
    %6 = vector.load %arg4[%c0_5, %c0_6, %c0_7] : memref<1x1x32xf32, #tpu.memory_space<vmem>>, vector<1x1x32xf32>
    %7 = vector.shape_cast %6 : vector<1x1x32xf32> to vector<1x32xf32>
    %cst = arith.constant dense<0.000000e+00> : vector<28xf32>
    %8 = vector.multi_reduction <add>, %3, %cst [1] : vector<28x32xf32> to vector<28xf32>
    %9 = vector.shape_cast %8 : vector<28xf32> to vector<28x1xf32>
    %cst_8 = arith.constant 3.200000e+01 : f32
    %10 = vector.broadcast %cst_8 : f32 to vector<28x1xf32>
    %11 = arith.divf %9, %10 : vector<28x1xf32>
    %12 = vector.broadcast %11 : vector<28x1xf32> to vector<28x32xf32>
    %13 = arith.subf %3, %12 : vector<28x32xf32>
    %14 = arith.mulf %13, %13 : vector<28x32xf32>
    %cst_9 = arith.constant dense<0.000000e+00> : vector<28xf32>
    %15 = vector.multi_reduction <add>, %14, %cst_9 [1] : vector<28x32xf32> to vector<28xf32>
    %16 = vector.shape_cast %15 : vector<28xf32> to vector<28x1xf32>
    %cst_10 = arith.constant 3.200000e+01 : f32
    %17 = vector.broadcast %cst_10 : f32 to vector<28x1xf32>
    %18 = arith.divf %16, %17 : vector<28x1xf32>
    %19 = vector.broadcast %11 : vector<28x1xf32> to vector<28x32xf32>
    %20 = arith.subf %3, %19 : vector<28x32xf32>
    %cst_11 = arith.constant 9.99999974E-6 : f32
    %21 = vector.broadcast %cst_11 : f32 to vector<28x1xf32>
    %22 = arith.addf %18, %21 : vector<28x1xf32>
    %23 = math.rsqrt %22 : vector<28x1xf32>
    %24 = vector.broadcast %23 : vector<28x1xf32> to vector<28x32xf32>
    %25 = arith.mulf %20, %24 : vector<28x32xf32>
    %26 = vector.broadcast %5 : vector<1x32xf32> to vector<28x32xf32>
    %27 = arith.mulf %25, %26 : vector<28x32xf32>
    %28 = vector.broadcast %7 : vector<1x32xf32> to vector<28x32xf32>
    %29 = arith.addf %27, %28 : vector<28x32xf32>
    %30 = arith.truncf %29 : vector<28x32xf32> to vector<28x32xbf16>
    %cst_12 = arith.constant 0.000000e+00 : f32
    %31 = vector.broadcast %cst_12 : f32 to vector<28x32xf32>
    %c0_i32_13 = arith.constant 0 : i32
    %c0_14 = arith.constant 0 : index
    %32 = arith.index_cast %c0_i32_13 : i32 to index
    %c0_15 = arith.constant 0 : index
    %c0_16 = arith.constant 0 : index
    %33 = vector.load %arg5[%c0_14, %32, %c0_15, %c0_16] : memref<1x4x32x24xbf16, #tpu.memory_space<vmem>>, vector<1x1x32x24xbf16>
    %34 = vector.shape_cast %33 : vector<1x1x32x24xbf16> to vector<32x24xbf16>
    %cst_17 = arith.constant dense<0.000000e+00> : vector<28x24xf32>
    %35 = tpu.matmul %30, %34, %cst_17 {dimension_numbers = #tpu.dot_dimension_numbers<[1], [0], [0], [1], [0, 0, 1, 1], [], []>} : vector<28x32xbf16>, vector<32x24xbf16>, vector<28x24xf32> -> vector<28x24xf32>
    %c0_18 = arith.constant 0 : index
    %36 = arith.index_cast %c0_i32_13 : i32 to index
    %c0_19 = arith.constant 0 : index
    %c0_20 = arith.constant 0 : index
    %37 = vector.load %arg6[%c0_18, %36, %c0_19, %c0_20] : memref<1x4x1x24xf32, #tpu.memory_space<vmem>>, vector<1x1x1x24xf32>
    %38 = vector.shape_cast %37 : vector<1x1x1x24xf32> to vector<1x24xf32>
    %39 = vector.broadcast %38 : vector<1x24xf32> to vector<28x24xf32>
    %40 = arith.addf %35, %39 : vector<28x24xf32>
    %41 = vector.extract_strided_slice %40 {offsets = [0, 0], sizes = [28, 8], strides = [1, 1]} : vector<28x24xf32> to vector<28x8xf32>
    %cst_21 = arith.constant 0.353553385 : f32
    %42 = vector.broadcast %cst_21 : f32 to vector<28x8xf32>
    %43 = arith.mulf %41, %42 : vector<28x8xf32>
    %44 = arith.truncf %43 : vector<28x8xf32> to vector<28x8xbf16>
    %45 = vector.extract_strided_slice %40 {offsets = [0, 8], sizes = [28, 8], strides = [1, 1]} : vector<28x24xf32> to vector<28x8xf32>
    %46 = arith.truncf %45 : vector<28x8xf32> to vector<28x8xbf16>
    %47 = vector.extract_strided_slice %40 {offsets = [0, 16], sizes = [28, 8], strides = [1, 1]} : vector<28x24xf32> to vector<28x8xf32>
    %48 = arith.truncf %47 : vector<28x8xf32> to vector<28x8xbf16>
    %49 = vector.extract_strided_slice %44 {offsets = [0, 0], sizes = [14, 8], strides = [1, 1]} : vector<28x8xbf16> to vector<14x8xbf16>
    %50 = vector.extract_strided_slice %46 {offsets = [0, 0], sizes = [14, 8], strides = [1, 1]} : vector<28x8xbf16> to vector<14x8xbf16>
    %51 = vector.extract_strided_slice %48 {offsets = [0, 0], sizes = [14, 8], strides = [1, 1]} : vector<28x8xbf16> to vector<14x8xbf16>
    %cst_22 = arith.constant dense<0.000000e+00> : vector<14x14xf32>
    %52 = tpu.matmul %49, %50, %cst_22 {dimension_numbers = #tpu.dot_dimension_numbers<[1], [1], [0], [0], [0, 0, 1, 0], [], []>} : vector<14x8xbf16>, vector<14x8xbf16>, vector<14x14xf32> -> vector<14x14xf32>
    %cst_23 = arith.constant dense<0xFF800000> : vector<14xf32>
    %53 = vector.multi_reduction <maximumf>, %52, %cst_23 [1] : vector<14x14xf32> to vector<14xf32>
    %54 = vector.shape_cast %53 : vector<14xf32> to vector<14x1xf32>
    %55 = vector.broadcast %54 : vector<14x1xf32> to vector<14x14xf32>
    %56 = arith.subf %52, %55 : vector<14x14xf32>
    %57 = math.exp %56 : vector<14x14xf32>
    %cst_24 = arith.constant dense<0.000000e+00> : vector<14xf32>
    %58 = vector.multi_reduction <add>, %57, %cst_24 [1] : vector<14x14xf32> to vector<14xf32>
    %59 = vector.shape_cast %58 : vector<14xf32> to vector<14x1xf32>
    %60 = tpu.reciprocal %59 {approx = true} : vector<14x1xf32> -> vector<14x1xf32>
    %61 = vector.broadcast %60 : vector<14x1xf32> to vector<14x14xf32>
    %62 = arith.mulf %57, %61 : vector<14x14xf32>
    %63 = arith.truncf %62 : vector<14x14xf32> to vector<14x14xbf16>
    %cst_25 = arith.constant dense<0.000000e+00> : vector<14x8xf32>
    %64 = tpu.matmul %63, %51, %cst_25 {dimension_numbers = #tpu.dot_dimension_numbers<[1], [0], [0], [1], [0, 0, 1, 1], [], []>} : vector<14x14xbf16>, vector<14x8xbf16>, vector<14x8xf32> -> vector<14x8xf32>
    %65 = vector.extract_strided_slice %44 {offsets = [14, 0], sizes = [14, 8], strides = [1, 1]} : vector<28x8xbf16> to vector<14x8xbf16>
    %66 = vector.extract_strided_slice %46 {offsets = [14, 0], sizes = [14, 8], strides = [1, 1]} : vector<28x8xbf16> to vector<14x8xbf16>
    %67 = vector.extract_strided_slice %48 {offsets = [14, 0], sizes = [14, 8], strides = [1, 1]} : vector<28x8xbf16> to vector<14x8xbf16>
    %cst_26 = arith.constant dense<0.000000e+00> : vector<14x14xf32>
    %68 = tpu.matmul %65, %66, %cst_26 {dimension_numbers = #tpu.dot_dimension_numbers<[1], [1], [0], [0], [0, 0, 1, 0], [], []>} : vector<14x8xbf16>, vector<14x8xbf16>, vector<14x14xf32> -> vector<14x14xf32>
    %cst_27 = arith.constant dense<0xFF800000> : vector<14xf32>
    %69 = vector.multi_reduction <maximumf>, %68, %cst_27 [1] : vector<14x14xf32> to vector<14xf32>
    %70 = vector.shape_cast %69 : vector<14xf32> to vector<14x1xf32>
    %71 = vector.broadcast %70 : vector<14x1xf32> to vector<14x14xf32>
    %72 = arith.subf %68, %71 : vector<14x14xf32>
    %73 = math.exp %72 : vector<14x14xf32>
    %cst_28 = arith.constant dense<0.000000e+00> : vector<14xf32>
    %74 = vector.multi_reduction <add>, %73, %cst_28 [1] : vector<14x14xf32> to vector<14xf32>
    %75 = vector.shape_cast %74 : vector<14xf32> to vector<14x1xf32>
    %76 = tpu.reciprocal %75 {approx = true} : vector<14x1xf32> -> vector<14x1xf32>
    %77 = vector.broadcast %76 : vector<14x1xf32> to vector<14x14xf32>
    %78 = arith.mulf %73, %77 : vector<14x14xf32>
    %79 = arith.truncf %78 : vector<14x14xf32> to vector<14x14xbf16>
    %cst_29 = arith.constant dense<0.000000e+00> : vector<14x8xf32>
    %80 = tpu.matmul %79, %67, %cst_29 {dimension_numbers = #tpu.dot_dimension_numbers<[1], [0], [0], [1], [0, 0, 1, 1], [], []>} : vector<14x14xbf16>, vector<14x8xbf16>, vector<14x8xf32> -> vector<14x8xf32>
    %81 = tpu.concatenate %64, %80 in 0 : vector<14x8xf32>, vector<14x8xf32> -> vector<28x8xf32>
    %82 = arith.truncf %81 : vector<28x8xf32> to vector<28x8xbf16>
    %c0_30 = arith.constant 0 : index
    %83 = arith.index_cast %c0_i32_13 : i32 to index
    %c0_31 = arith.constant 0 : index
    %c0_32 = arith.constant 0 : index
    %84 = vector.load %arg7[%c0_30, %83, %c0_31, %c0_32] : memref<1x4x8x32xbf16, #tpu.memory_space<vmem>>, vector<1x1x8x32xbf16>
    %85 = vector.shape_cast %84 : vector<1x1x8x32xbf16> to vector<8x32xbf16>
    %cst_33 = arith.constant dense<0.000000e+00> : vector<28x32xf32>
    %86 = tpu.matmul %82, %85, %cst_33 {dimension_numbers = #tpu.dot_dimension_numbers<[1], [0], [0], [1], [0, 0, 1, 1], [], []>} : vector<28x8xbf16>, vector<8x32xbf16>, vector<28x32xf32> -> vector<28x32xf32>
    %87 = arith.addf %31, %86 : vector<28x32xf32>
    %c1_i32 = arith.constant 1 : i32
    %c0_34 = arith.constant 0 : index
    %88 = arith.index_cast %c1_i32 : i32 to index
    %c0_35 = arith.constant 0 : index
    %c0_36 = arith.constant 0 : index
    %89 = vector.load %arg5[%c0_34, %88, %c0_35, %c0_36] : memref<1x4x32x24xbf16, #tpu.memory_space<vmem>>, vector<1x1x32x24xbf16>
    %90 = vector.shape_cast %89 : vector<1x1x32x24xbf16> to vector<32x24xbf16>
    %cst_37 = arith.constant dense<0.000000e+00> : vector<28x24xf32>
    %91 = tpu.matmul %30, %90, %cst_37 {dimension_numbers = #tpu.dot_dimension_numbers<[1], [0], [0], [1], [0, 0, 1, 1], [], []>} : vector<28x32xbf16>, vector<32x24xbf16>, vector<28x24xf32> -> vector<28x24xf32>
    %c0_38 = arith.constant 0 : index
    %92 = arith.index_cast %c1_i32 : i32 to index
    %c0_39 = arith.constant 0 : index
    %c0_40 = arith.constant 0 : index
    %93 = vector.load %arg6[%c0_38, %92, %c0_39, %c0_40] : memref<1x4x1x24xf32, #tpu.memory_space<vmem>>, vector<1x1x1x24xf32>
    %94 = vector.shape_cast %93 : vector<1x1x1x24xf32> to vector<1x24xf32>
    %95 = vector.broadcast %94 : vector<1x24xf32> to vector<28x24xf32>
    %96 = arith.addf %91, %95 : vector<28x24xf32>
    %97 = vector.extract_strided_slice %96 {offsets = [0, 0], sizes = [28, 8], strides = [1, 1]} : vector<28x24xf32> to vector<28x8xf32>
    %cst_41 = arith.constant 0.353553385 : f32
    %98 = vector.broadcast %cst_41 : f32 to vector<28x8xf32>
    %99 = arith.mulf %97, %98 : vector<28x8xf32>
    %100 = arith.truncf %99 : vector<28x8xf32> to vector<28x8xbf16>
    %101 = vector.extract_strided_slice %96 {offsets = [0, 8], sizes = [28, 8], strides = [1, 1]} : vector<28x24xf32> to vector<28x8xf32>
    %102 = arith.truncf %101 : vector<28x8xf32> to vector<28x8xbf16>
    %103 = vector.extract_strided_slice %96 {offsets = [0, 16], sizes = [28, 8], strides = [1, 1]} : vector<28x24xf32> to vector<28x8xf32>
    %104 = arith.truncf %103 : vector<28x8xf32> to vector<28x8xbf16>
    %105 = vector.extract_strided_slice %100 {offsets = [0, 0], sizes = [14, 8], strides = [1, 1]} : vector<28x8xbf16> to vector<14x8xbf16>
    %106 = vector.extract_strided_slice %102 {offsets = [0, 0], sizes = [14, 8], strides = [1, 1]} : vector<28x8xbf16> to vector<14x8xbf16>
    %107 = vector.extract_strided_slice %104 {offsets = [0, 0], sizes = [14, 8], strides = [1, 1]} : vector<28x8xbf16> to vector<14x8xbf16>
    %cst_42 = arith.constant dense<0.000000e+00> : vector<14x14xf32>
    %108 = tpu.matmul %105, %106, %cst_42 {dimension_numbers = #tpu.dot_dimension_numbers<[1], [1], [0], [0], [0, 0, 1, 0], [], []>} : vector<14x8xbf16>, vector<14x8xbf16>, vector<14x14xf32> -> vector<14x14xf32>
    %cst_43 = arith.constant dense<0xFF800000> : vector<14xf32>
    %109 = vector.multi_reduction <maximumf>, %108, %cst_43 [1] : vector<14x14xf32> to vector<14xf32>
    %110 = vector.shape_cast %109 : vector<14xf32> to vector<14x1xf32>
    %111 = vector.broadcast %110 : vector<14x1xf32> to vector<14x14xf32>
    %112 = arith.subf %108, %111 : vector<14x14xf32>
    %113 = math.exp %112 : vector<14x14xf32>
    %cst_44 = arith.constant dense<0.000000e+00> : vector<14xf32>
    %114 = vector.multi_reduction <add>, %113, %cst_44 [1] : vector<14x14xf32> to vector<14xf32>
    %115 = vector.shape_cast %114 : vector<14xf32> to vector<14x1xf32>
    %116 = tpu.reciprocal %115 {approx = true} : vector<14x1xf32> -> vector<14x1xf32>
    %117 = vector.broadcast %116 : vector<14x1xf32> to vector<14x14xf32>
    %118 = arith.mulf %113, %117 : vector<14x14xf32>
    %119 = arith.truncf %118 : vector<14x14xf32> to vector<14x14xbf16>
    %cst_45 = arith.constant dense<0.000000e+00> : vector<14x8xf32>
    %120 = tpu.matmul %119, %107, %cst_45 {dimension_numbers = #tpu.dot_dimension_numbers<[1], [0], [0], [1], [0, 0, 1, 1], [], []>} : vector<14x14xbf16>, vector<14x8xbf16>, vector<14x8xf32> -> vector<14x8xf32>
    %121 = vector.extract_strided_slice %100 {offsets = [14, 0], sizes = [14, 8], strides = [1, 1]} : vector<28x8xbf16> to vector<14x8xbf16>
    %122 = vector.extract_strided_slice %102 {offsets = [14, 0], sizes = [14, 8], strides = [1, 1]} : vector<28x8xbf16> to vector<14x8xbf16>
    %123 = vector.extract_strided_slice %104 {offsets = [14, 0], sizes = [14, 8], strides = [1, 1]} : vector<28x8xbf16> to vector<14x8xbf16>
    %cst_46 = arith.constant dense<0.000000e+00> : vector<14x14xf32>
    %124 = tpu.matmul %121, %122, %cst_46 {dimension_numbers = #tpu.dot_dimension_numbers<[1], [1], [0], [0], [0, 0, 1, 0], [], []>} : vector<14x8xbf16>, vector<14x8xbf16>, vector<14x14xf32> -> vector<14x14xf32>
    %cst_47 = arith.constant dense<0xFF800000> : vector<14xf32>
    %125 = vector.multi_reduction <maximumf>, %124, %cst_47 [1] : vector<14x14xf32> to vector<14xf32>
    %126 = vector.shape_cast %125 : vector<14xf32> to vector<14x1xf32>
    %127 = vector.broadcast %126 : vector<14x1xf32> to vector<14x14xf32>
    %128 = arith.subf %124, %127 : vector<14x14xf32>
    %129 = math.exp %128 : vector<14x14xf32>
    %cst_48 = arith.constant dense<0.000000e+00> : vector<14xf32>
    %130 = vector.multi_reduction <add>, %129, %cst_48 [1] : vector<14x14xf32> to vector<14xf32>
    %131 = vector.shape_cast %130 : vector<14xf32> to vector<14x1xf32>
    %132 = tpu.reciprocal %131 {approx = true} : vector<14x1xf32> -> vector<14x1xf32>
    %133 = vector.broadcast %132 : vector<14x1xf32> to vector<14x14xf32>
    %134 = arith.mulf %129, %133 : vector<14x14xf32>
    %135 = arith.truncf %134 : vector<14x14xf32> to vector<14x14xbf16>
    %cst_49 = arith.constant dense<0.000000e+00> : vector<14x8xf32>
    %136 = tpu.matmul %135, %123, %cst_49 {dimension_numbers = #tpu.dot_dimension_numbers<[1], [0], [0], [1], [0, 0, 1, 1], [], []>} : vector<14x14xbf16>, vector<14x8xbf16>, vector<14x8xf32> -> vector<14x8xf32>
    %137 = tpu.concatenate %120, %136 in 0 : vector<14x8xf32>, vector<14x8xf32> -> vector<28x8xf32>
    %138 = arith.truncf %137 : vector<28x8xf32> to vector<28x8xbf16>
    %c0_50 = arith.constant 0 : index
    %139 = arith.index_cast %c1_i32 : i32 to index
    %c0_51 = arith.constant 0 : index
    %c0_52 = arith.constant 0 : index
    %140 = vector.load %arg7[%c0_50, %139, %c0_51, %c0_52] : memref<1x4x8x32xbf16, #tpu.memory_space<vmem>>, vector<1x1x8x32xbf16>
    %141 = vector.shape_cast %140 : vector<1x1x8x32xbf16> to vector<8x32xbf16>
    %cst_53 = arith.constant dense<0.000000e+00> : vector<28x32xf32>
    %142 = tpu.matmul %138, %141, %cst_53 {dimension_numbers = #tpu.dot_dimension_numbers<[1], [0], [0], [1], [0, 0, 1, 1], [], []>} : vector<28x8xbf16>, vector<8x32xbf16>, vector<28x32xf32> -> vector<28x32xf32>
    %143 = arith.addf %87, %142 : vector<28x32xf32>
    %c2_i32 = arith.constant 2 : i32
    %c0_54 = arith.constant 0 : index
    %144 = arith.index_cast %c2_i32 : i32 to index
    %c0_55 = arith.constant 0 : index
    %c0_56 = arith.constant 0 : index
    %145 = vector.load %arg5[%c0_54, %144, %c0_55, %c0_56] : memref<1x4x32x24xbf16, #tpu.memory_space<vmem>>, vector<1x1x32x24xbf16>
    %146 = vector.shape_cast %145 : vector<1x1x32x24xbf16> to vector<32x24xbf16>
    %cst_57 = arith.constant dense<0.000000e+00> : vector<28x24xf32>
    %147 = tpu.matmul %30, %146, %cst_57 {dimension_numbers = #tpu.dot_dimension_numbers<[1], [0], [0], [1], [0, 0, 1, 1], [], []>} : vector<28x32xbf16>, vector<32x24xbf16>, vector<28x24xf32> -> vector<28x24xf32>
    %c0_58 = arith.constant 0 : index
    %148 = arith.index_cast %c2_i32 : i32 to index
    %c0_59 = arith.constant 0 : index
    %c0_60 = arith.constant 0 : index
    %149 = vector.load %arg6[%c0_58, %148, %c0_59, %c0_60] : memref<1x4x1x24xf32, #tpu.memory_space<vmem>>, vector<1x1x1x24xf32>
    %150 = vector.shape_cast %149 : vector<1x1x1x24xf32> to vector<1x24xf32>
    %151 = vector.broadcast %150 : vector<1x24xf32> to vector<28x24xf32>
    %152 = arith.addf %147, %151 : vector<28x24xf32>
    %153 = vector.extract_strided_slice %152 {offsets = [0, 0], sizes = [28, 8], strides = [1, 1]} : vector<28x24xf32> to vector<28x8xf32>
    %cst_61 = arith.constant 0.353553385 : f32
    %154 = vector.broadcast %cst_61 : f32 to vector<28x8xf32>
    %155 = arith.mulf %153, %154 : vector<28x8xf32>
    %156 = arith.truncf %155 : vector<28x8xf32> to vector<28x8xbf16>
    %157 = vector.extract_strided_slice %152 {offsets = [0, 8], sizes = [28, 8], strides = [1, 1]} : vector<28x24xf32> to vector<28x8xf32>
    %158 = arith.truncf %157 : vector<28x8xf32> to vector<28x8xbf16>
    %159 = vector.extract_strided_slice %152 {offsets = [0, 16], sizes = [28, 8], strides = [1, 1]} : vector<28x24xf32> to vector<28x8xf32>
    %160 = arith.truncf %159 : vector<28x8xf32> to vector<28x8xbf16>
    %161 = vector.extract_strided_slice %156 {offsets = [0, 0], sizes = [14, 8], strides = [1, 1]} : vector<28x8xbf16> to vector<14x8xbf16>
    %162 = vector.extract_strided_slice %158 {offsets = [0, 0], sizes = [14, 8], strides = [1, 1]} : vector<28x8xbf16> to vector<14x8xbf16>
    %163 = vector.extract_strided_slice %160 {offsets = [0, 0], sizes = [14, 8], strides = [1, 1]} : vector<28x8xbf16> to vector<14x8xbf16>
    %cst_62 = arith.constant dense<0.000000e+00> : vector<14x14xf32>
    %164 = tpu.matmul %161, %162, %cst_62 {dimension_numbers = #tpu.dot_dimension_numbers<[1], [1], [0], [0], [0, 0, 1, 0], [], []>} : vector<14x8xbf16>, vector<14x8xbf16>, vector<14x14xf32> -> vector<14x14xf32>
    %cst_63 = arith.constant dense<0xFF800000> : vector<14xf32>
    %165 = vector.multi_reduction <maximumf>, %164, %cst_63 [1] : vector<14x14xf32> to vector<14xf32>
    %166 = vector.shape_cast %165 : vector<14xf32> to vector<14x1xf32>
    %167 = vector.broadcast %166 : vector<14x1xf32> to vector<14x14xf32>
    %168 = arith.subf %164, %167 : vector<14x14xf32>
    %169 = math.exp %168 : vector<14x14xf32>
    %cst_64 = arith.constant dense<0.000000e+00> : vector<14xf32>
    %170 = vector.multi_reduction <add>, %169, %cst_64 [1] : vector<14x14xf32> to vector<14xf32>
    %171 = vector.shape_cast %170 : vector<14xf32> to vector<14x1xf32>
    %172 = tpu.reciprocal %171 {approx = true} : vector<14x1xf32> -> vector<14x1xf32>
    %173 = vector.broadcast %172 : vector<14x1xf32> to vector<14x14xf32>
    %174 = arith.mulf %169, %173 : vector<14x14xf32>
    %175 = arith.truncf %174 : vector<14x14xf32> to vector<14x14xbf16>
    %cst_65 = arith.constant dense<0.000000e+00> : vector<14x8xf32>
    %176 = tpu.matmul %175, %163, %cst_65 {dimension_numbers = #tpu.dot_dimension_numbers<[1], [0], [0], [1], [0, 0, 1, 1], [], []>} : vector<14x14xbf16>, vector<14x8xbf16>, vector<14x8xf32> -> vector<14x8xf32>
    %177 = vector.extract_strided_slice %156 {offsets = [14, 0], sizes = [14, 8], strides = [1, 1]} : vector<28x8xbf16> to vector<14x8xbf16>
    %178 = vector.extract_strided_slice %158 {offsets = [14, 0], sizes = [14, 8], strides = [1, 1]} : vector<28x8xbf16> to vector<14x8xbf16>
    %179 = vector.extract_strided_slice %160 {offsets = [14, 0], sizes = [14, 8], strides = [1, 1]} : vector<28x8xbf16> to vector<14x8xbf16>
    %cst_66 = arith.constant dense<0.000000e+00> : vector<14x14xf32>
    %180 = tpu.matmul %177, %178, %cst_66 {dimension_numbers = #tpu.dot_dimension_numbers<[1], [1], [0], [0], [0, 0, 1, 0], [], []>} : vector<14x8xbf16>, vector<14x8xbf16>, vector<14x14xf32> -> vector<14x14xf32>
    %cst_67 = arith.constant dense<0xFF800000> : vector<14xf32>
    %181 = vector.multi_reduction <maximumf>, %180, %cst_67 [1] : vector<14x14xf32> to vector<14xf32>
    %182 = vector.shape_cast %181 : vector<14xf32> to vector<14x1xf32>
    %183 = vector.broadcast %182 : vector<14x1xf32> to vector<14x14xf32>
    %184 = arith.subf %180, %183 : vector<14x14xf32>
    %185 = math.exp %184 : vector<14x14xf32>
    %cst_68 = arith.constant dense<0.000000e+00> : vector<14xf32>
    %186 = vector.multi_reduction <add>, %185, %cst_68 [1] : vector<14x14xf32> to vector<14xf32>
    %187 = vector.shape_cast %186 : vector<14xf32> to vector<14x1xf32>
    %188 = tpu.reciprocal %187 {approx = true} : vector<14x1xf32> -> vector<14x1xf32>
    %189 = vector.broadcast %188 : vector<14x1xf32> to vector<14x14xf32>
    %190 = arith.mulf %185, %189 : vector<14x14xf32>
    %191 = arith.truncf %190 : vector<14x14xf32> to vector<14x14xbf16>
    %cst_69 = arith.constant dense<0.000000e+00> : vector<14x8xf32>
    %192 = tpu.matmul %191, %179, %cst_69 {dimension_numbers = #tpu.dot_dimension_numbers<[1], [0], [0], [1], [0, 0, 1, 1], [], []>} : vector<14x14xbf16>, vector<14x8xbf16>, vector<14x8xf32> -> vector<14x8xf32>
    %193 = tpu.concatenate %176, %192 in 0 : vector<14x8xf32>, vector<14x8xf32> -> vector<28x8xf32>
    %194 = arith.truncf %193 : vector<28x8xf32> to vector<28x8xbf16>
    %c0_70 = arith.constant 0 : index
    %195 = arith.index_cast %c2_i32 : i32 to index
    %c0_71 = arith.constant 0 : index
    %c0_72 = arith.constant 0 : index
    %196 = vector.load %arg7[%c0_70, %195, %c0_71, %c0_72] : memref<1x4x8x32xbf16, #tpu.memory_space<vmem>>, vector<1x1x8x32xbf16>
    %197 = vector.shape_cast %196 : vector<1x1x8x32xbf16> to vector<8x32xbf16>
    %cst_73 = arith.constant dense<0.000000e+00> : vector<28x32xf32>
    %198 = tpu.matmul %194, %197, %cst_73 {dimension_numbers = #tpu.dot_dimension_numbers<[1], [0], [0], [1], [0, 0, 1, 1], [], []>} : vector<28x8xbf16>, vector<8x32xbf16>, vector<28x32xf32> -> vector<28x32xf32>
    %199 = arith.addf %143, %198 : vector<28x32xf32>
    %c3_i32 = arith.constant 3 : i32
    %c0_74 = arith.constant 0 : index
    %200 = arith.index_cast %c3_i32 : i32 to index
    %c0_75 = arith.constant 0 : index
    %c0_76 = arith.constant 0 : index
    %201 = vector.load %arg5[%c0_74, %200, %c0_75, %c0_76] : memref<1x4x32x24xbf16, #tpu.memory_space<vmem>>, vector<1x1x32x24xbf16>
    %202 = vector.shape_cast %201 : vector<1x1x32x24xbf16> to vector<32x24xbf16>
    %cst_77 = arith.constant dense<0.000000e+00> : vector<28x24xf32>
    %203 = tpu.matmul %30, %202, %cst_77 {dimension_numbers = #tpu.dot_dimension_numbers<[1], [0], [0], [1], [0, 0, 1, 1], [], []>} : vector<28x32xbf16>, vector<32x24xbf16>, vector<28x24xf32> -> vector<28x24xf32>
    %c0_78 = arith.constant 0 : index
    %204 = arith.index_cast %c3_i32 : i32 to index
    %c0_79 = arith.constant 0 : index
    %c0_80 = arith.constant 0 : index
    %205 = vector.load %arg6[%c0_78, %204, %c0_79, %c0_80] : memref<1x4x1x24xf32, #tpu.memory_space<vmem>>, vector<1x1x1x24xf32>
    %206 = vector.shape_cast %205 : vector<1x1x1x24xf32> to vector<1x24xf32>
    %207 = vector.broadcast %206 : vector<1x24xf32> to vector<28x24xf32>
    %208 = arith.addf %203, %207 : vector<28x24xf32>
    %209 = vector.extract_strided_slice %208 {offsets = [0, 0], sizes = [28, 8], strides = [1, 1]} : vector<28x24xf32> to vector<28x8xf32>
    %cst_81 = arith.constant 0.353553385 : f32
    %210 = vector.broadcast %cst_81 : f32 to vector<28x8xf32>
    %211 = arith.mulf %209, %210 : vector<28x8xf32>
    %212 = arith.truncf %211 : vector<28x8xf32> to vector<28x8xbf16>
    %213 = vector.extract_strided_slice %208 {offsets = [0, 8], sizes = [28, 8], strides = [1, 1]} : vector<28x24xf32> to vector<28x8xf32>
    %214 = arith.truncf %213 : vector<28x8xf32> to vector<28x8xbf16>
    %215 = vector.extract_strided_slice %208 {offsets = [0, 16], sizes = [28, 8], strides = [1, 1]} : vector<28x24xf32> to vector<28x8xf32>
    %216 = arith.truncf %215 : vector<28x8xf32> to vector<28x8xbf16>
    %217 = vector.extract_strided_slice %212 {offsets = [0, 0], sizes = [14, 8], strides = [1, 1]} : vector<28x8xbf16> to vector<14x8xbf16>
    %218 = vector.extract_strided_slice %214 {offsets = [0, 0], sizes = [14, 8], strides = [1, 1]} : vector<28x8xbf16> to vector<14x8xbf16>
    %219 = vector.extract_strided_slice %216 {offsets = [0, 0], sizes = [14, 8], strides = [1, 1]} : vector<28x8xbf16> to vector<14x8xbf16>
    %cst_82 = arith.constant dense<0.000000e+00> : vector<14x14xf32>
    %220 = tpu.matmul %217, %218, %cst_82 {dimension_numbers = #tpu.dot_dimension_numbers<[1], [1], [0], [0], [0, 0, 1, 0], [], []>} : vector<14x8xbf16>, vector<14x8xbf16>, vector<14x14xf32> -> vector<14x14xf32>
    %cst_83 = arith.constant dense<0xFF800000> : vector<14xf32>
    %221 = vector.multi_reduction <maximumf>, %220, %cst_83 [1] : vector<14x14xf32> to vector<14xf32>
    %222 = vector.shape_cast %221 : vector<14xf32> to vector<14x1xf32>
    %223 = vector.broadcast %222 : vector<14x1xf32> to vector<14x14xf32>
    %224 = arith.subf %220, %223 : vector<14x14xf32>
    %225 = math.exp %224 : vector<14x14xf32>
    %cst_84 = arith.constant dense<0.000000e+00> : vector<14xf32>
    %226 = vector.multi_reduction <add>, %225, %cst_84 [1] : vector<14x14xf32> to vector<14xf32>
    %227 = vector.shape_cast %226 : vector<14xf32> to vector<14x1xf32>
    %228 = tpu.reciprocal %227 {approx = true} : vector<14x1xf32> -> vector<14x1xf32>
    %229 = vector.broadcast %228 : vector<14x1xf32> to vector<14x14xf32>
    %230 = arith.mulf %225, %229 : vector<14x14xf32>
    %231 = arith.truncf %230 : vector<14x14xf32> to vector<14x14xbf16>
    %cst_85 = arith.constant dense<0.000000e+00> : vector<14x8xf32>
    %232 = tpu.matmul %231, %219, %cst_85 {dimension_numbers = #tpu.dot_dimension_numbers<[1], [0], [0], [1], [0, 0, 1, 1], [], []>} : vector<14x14xbf16>, vector<14x8xbf16>, vector<14x8xf32> -> vector<14x8xf32>
    %233 = vector.extract_strided_slice %212 {offsets = [14, 0], sizes = [14, 8], strides = [1, 1]} : vector<28x8xbf16> to vector<14x8xbf16>
    %234 = vector.extract_strided_slice %214 {offsets = [14, 0], sizes = [14, 8], strides = [1, 1]} : vector<28x8xbf16> to vector<14x8xbf16>
    %235 = vector.extract_strided_slice %216 {offsets = [14, 0], sizes = [14, 8], strides = [1, 1]} : vector<28x8xbf16> to vector<14x8xbf16>
    %cst_86 = arith.constant dense<0.000000e+00> : vector<14x14xf32>
    %236 = tpu.matmul %233, %234, %cst_86 {dimension_numbers = #tpu.dot_dimension_numbers<[1], [1], [0], [0], [0, 0, 1, 0], [], []>} : vector<14x8xbf16>, vector<14x8xbf16>, vector<14x14xf32> -> vector<14x14xf32>
    %cst_87 = arith.constant dense<0xFF800000> : vector<14xf32>
    %237 = vector.multi_reduction <maximumf>, %236, %cst_87 [1] : vector<14x14xf32> to vector<14xf32>
    %238 = vector.shape_cast %237 : vector<14xf32> to vector<14x1xf32>
    %239 = vector.broadcast %238 : vector<14x1xf32> to vector<14x14xf32>
    %240 = arith.subf %236, %239 : vector<14x14xf32>
    %241 = math.exp %240 : vector<14x14xf32>
    %cst_88 = arith.constant dense<0.000000e+00> : vector<14xf32>
    %242 = vector.multi_reduction <add>, %241, %cst_88 [1] : vector<14x14xf32> to vector<14xf32>
    %243 = vector.shape_cast %242 : vector<14xf32> to vector<14x1xf32>
    %244 = tpu.reciprocal %243 {approx = true} : vector<14x1xf32> -> vector<14x1xf32>
    %245 = vector.broadcast %244 : vector<14x1xf32> to vector<14x14xf32>
    %246 = arith.mulf %241, %245 : vector<14x14xf32>
    %247 = arith.truncf %246 : vector<14x14xf32> to vector<14x14xbf16>
    %cst_89 = arith.constant dense<0.000000e+00> : vector<14x8xf32>
    %248 = tpu.matmul %247, %235, %cst_89 {dimension_numbers = #tpu.dot_dimension_numbers<[1], [0], [0], [1], [0, 0, 1, 1], [], []>} : vector<14x14xbf16>, vector<14x8xbf16>, vector<14x8xf32> -> vector<14x8xf32>
    %249 = tpu.concatenate %232, %248 in 0 : vector<14x8xf32>, vector<14x8xf32> -> vector<28x8xf32>
    %250 = arith.truncf %249 : vector<28x8xf32> to vector<28x8xbf16>
    %c0_90 = arith.constant 0 : index
    %251 = arith.index_cast %c3_i32 : i32 to index
    %c0_91 = arith.constant 0 : index
    %c0_92 = arith.constant 0 : index
    %252 = vector.load %arg7[%c0_90, %251, %c0_91, %c0_92] : memref<1x4x8x32xbf16, #tpu.memory_space<vmem>>, vector<1x1x8x32xbf16>
    %253 = vector.shape_cast %252 : vector<1x1x8x32xbf16> to vector<8x32xbf16>
    %cst_93 = arith.constant dense<0.000000e+00> : vector<28x32xf32>
    %254 = tpu.matmul %250, %253, %cst_93 {dimension_numbers = #tpu.dot_dimension_numbers<[1], [0], [0], [1], [0, 0, 1, 1], [], []>} : vector<28x8xbf16>, vector<8x32xbf16>, vector<28x32xf32> -> vector<28x32xf32>
    %255 = arith.addf %199, %254 : vector<28x32xf32>
    %c4_i32 = arith.constant 4 : i32
    %256 = arith.addf %3, %255 : vector<28x32xf32>
    %c0_94 = arith.constant 0 : index
    %c0_95 = arith.constant 0 : index
    %c0_96 = arith.constant 0 : index
    %257 = vector.load %arg8[%c0_94, %c0_95, %c0_96] : memref<1x1x32xf32, #tpu.memory_space<vmem>>, vector<1x1x32xf32>
    %258 = vector.shape_cast %257 : vector<1x1x32xf32> to vector<1x32xf32>
    %259 = vector.broadcast %258 : vector<1x32xf32> to vector<28x32xf32>
    %260 = arith.addf %256, %259 : vector<28x32xf32>
    %c0_97 = arith.constant 0 : index
    %c0_98 = arith.constant 0 : index
    %c0_99 = arith.constant 0 : index
    %261 = vector.load %arg9[%c0_97, %c0_98, %c0_99] : memref<1x1x32xf32, #tpu.memory_space<vmem>>, vector<1x1x32xf32>
    %262 = vector.shape_cast %261 : vector<1x1x32xf32> to vector<1x32xf32>
    %c0_100 = arith.constant 0 : index
    %c0_101 = arith.constant 0 : index
    %c0_102 = arith.constant 0 : index
    %263 = vector.load %arg10[%c0_100, %c0_101, %c0_102] : memref<1x1x32xf32, #tpu.memory_space<vmem>>, vector<1x1x32xf32>
    %264 = vector.shape_cast %263 : vector<1x1x32xf32> to vector<1x32xf32>
    %cst_103 = arith.constant dense<0.000000e+00> : vector<28xf32>
    %265 = vector.multi_reduction <add>, %260, %cst_103 [1] : vector<28x32xf32> to vector<28xf32>
    %266 = vector.shape_cast %265 : vector<28xf32> to vector<28x1xf32>
    %cst_104 = arith.constant 3.200000e+01 : f32
    %267 = vector.broadcast %cst_104 : f32 to vector<28x1xf32>
    %268 = arith.divf %266, %267 : vector<28x1xf32>
    %269 = vector.broadcast %268 : vector<28x1xf32> to vector<28x32xf32>
    %270 = arith.subf %260, %269 : vector<28x32xf32>
    %271 = arith.mulf %270, %270 : vector<28x32xf32>
    %cst_105 = arith.constant dense<0.000000e+00> : vector<28xf32>
    %272 = vector.multi_reduction <add>, %271, %cst_105 [1] : vector<28x32xf32> to vector<28xf32>
    %273 = vector.shape_cast %272 : vector<28xf32> to vector<28x1xf32>
    %cst_106 = arith.constant 3.200000e+01 : f32
    %274 = vector.broadcast %cst_106 : f32 to vector<28x1xf32>
    %275 = arith.divf %273, %274 : vector<28x1xf32>
    %276 = vector.broadcast %268 : vector<28x1xf32> to vector<28x32xf32>
    %277 = arith.subf %260, %276 : vector<28x32xf32>
    %cst_107 = arith.constant 9.99999974E-6 : f32
    %278 = vector.broadcast %cst_107 : f32 to vector<28x1xf32>
    %279 = arith.addf %275, %278 : vector<28x1xf32>
    %280 = math.rsqrt %279 : vector<28x1xf32>
    %281 = vector.broadcast %280 : vector<28x1xf32> to vector<28x32xf32>
    %282 = arith.mulf %277, %281 : vector<28x32xf32>
    %283 = vector.broadcast %262 : vector<1x32xf32> to vector<28x32xf32>
    %284 = arith.mulf %282, %283 : vector<28x32xf32>
    %285 = vector.broadcast %264 : vector<1x32xf32> to vector<28x32xf32>
    %286 = arith.addf %284, %285 : vector<28x32xf32>
    %287 = arith.truncf %286 : vector<28x32xf32> to vector<28x32xbf16>
    %c0_108 = arith.constant 0 : index
    %c0_109 = arith.constant 0 : index
    %c0_110 = arith.constant 0 : index
    %288 = vector.load %arg11[%c0_108, %c0_109, %c0_110] : memref<1x32x128xbf16, #tpu.memory_space<vmem>>, vector<1x32x128xbf16>
    %289 = vector.shape_cast %288 : vector<1x32x128xbf16> to vector<32x128xbf16>
    %cst_111 = arith.constant dense<0.000000e+00> : vector<28x128xf32>
    %290 = tpu.matmul %287, %289, %cst_111 {dimension_numbers = #tpu.dot_dimension_numbers<[1], [0], [0], [1], [0, 0, 1, 1], [], []>} : vector<28x32xbf16>, vector<32x128xbf16>, vector<28x128xf32> -> vector<28x128xf32>
    %c0_112 = arith.constant 0 : index
    %c0_113 = arith.constant 0 : index
    %c0_114 = arith.constant 0 : index
    %291 = vector.load %arg12[%c0_112, %c0_113, %c0_114] : memref<1x1x128xf32, #tpu.memory_space<vmem>>, vector<1x1x128xf32>
    %292 = vector.shape_cast %291 : vector<1x1x128xf32> to vector<1x128xf32>
    %293 = vector.broadcast %292 : vector<1x128xf32> to vector<28x128xf32>
    %294 = arith.addf %290, %293 : vector<28x128xf32>
    %cst_115 = arith.constant 5.000000e-01 : f32
    %295 = vector.broadcast %cst_115 : f32 to vector<28x128xf32>
    %296 = arith.mulf %295, %294 : vector<28x128xf32>
    %cst_116 = arith.constant 4.471500e-02 : f32
    %297 = vector.broadcast %cst_116 : f32 to vector<28x128xf32>
    %298 = arith.mulf %297, %294 : vector<28x128xf32>
    %299 = arith.mulf %298, %294 : vector<28x128xf32>
    %300 = arith.mulf %299, %294 : vector<28x128xf32>
    %301 = arith.addf %294, %300 : vector<28x128xf32>
    %cst_117 = arith.constant 0.797884583 : f32
    %302 = vector.broadcast %cst_117 : f32 to vector<28x128xf32>
    %303 = arith.mulf %302, %301 : vector<28x128xf32>
    %304 = math.tanh %303 : vector<28x128xf32>
    %cst_118 = arith.constant 1.000000e+00 : f32
    %305 = vector.broadcast %cst_118 : f32 to vector<28x128xf32>
    %306 = arith.addf %305, %304 : vector<28x128xf32>
    %307 = arith.mulf %296, %306 : vector<28x128xf32>
    %308 = arith.truncf %307 : vector<28x128xf32> to vector<28x128xbf16>
    %c0_119 = arith.constant 0 : index
    %c0_120 = arith.constant 0 : index
    %c0_121 = arith.constant 0 : index
    %309 = vector.load %arg13[%c0_119, %c0_120, %c0_121] : memref<1x128x32xbf16, #tpu.memory_space<vmem>>, vector<1x128x32xbf16>
    %310 = vector.shape_cast %309 : vector<1x128x32xbf16> to vector<128x32xbf16>
    %cst_122 = arith.constant dense<0.000000e+00> : vector<28x32xf32>
    %311 = tpu.matmul %308, %310, %cst_122 {dimension_numbers = #tpu.dot_dimension_numbers<[1], [0], [0], [1], [0, 0, 1, 1], [], []>} : vector<28x128xbf16>, vector<128x32xbf16>, vector<28x32xf32> -> vector<28x32xf32>
    %c0_123 = arith.constant 0 : index
    %c0_124 = arith.constant 0 : index
    %c0_125 = arith.constant 0 : index
    %312 = vector.load %arg14[%c0_123, %c0_124, %c0_125] : memref<1x1x32xf32, #tpu.memory_space<vmem>>, vector<1x1x32xf32>
    %313 = vector.shape_cast %312 : vector<1x1x32xf32> to vector<1x32xf32>
    %314 = vector.broadcast %313 : vector<1x32xf32> to vector<28x32xf32>
    %315 = arith.addf %311, %314 : vector<28x32xf32>
    %316 = arith.addf %260, %315 : vector<28x32xf32>
    %c0_126 = arith.constant 0 : index
    %c0_127 = arith.constant 0 : index
    %317 = vector.load %arg16[%c0_126, %c0_127] : memref<28x32xf32, #tpu.memory_space<vmem>>, vector<28x32xf32>
    tpu.vector_store %arg16[%c0_126, %c0_127], %316 {strides = array<i32>} : memref<28x32xf32, #tpu.memory_space<vmem>>, vector<28x32xf32>,
    %c1_i32_128 = arith.constant 1 : i32
    %318 = arith.cmpi eq, %arg1, %c1_i32_128 : i32
    %319 = arith.extui %318 : i1 to i32
    %c0_i32_129 = arith.constant 0 : i32
    %320 = arith.cmpi ne, %319, %c0_i32_129 : i32
    scf.if %320 {
      %321 = arith.truncf %316 : vector<28x32xf32> to vector<28x32xbf16>
      %c0_130 = arith.constant 0 : index
      %c0_131 = arith.constant 0 : index
      %c0_132 = arith.constant 0 : index
      %322 = vector.load %arg15[%c0_130, %c0_131, %c0_132] : memref<1x28x32xbf16, #tpu.memory_space<vmem>>, vector<1x28x32xbf16>
      %323 = vector.shape_cast %322 : vector<1x28x32xbf16> to vector<28x32xbf16>
      %324 = vector.shape_cast %321 : vector<28x32xbf16> to vector<1x28x32xbf16>
      tpu.vector_store %arg15[%c0_130, %c0_131, %c0_132], %324 {strides = array<i32>} : memref<1x28x32xbf16, #tpu.memory_space<vmem>>, vector<1x28x32xbf16>,
    } else {
    }
    return
  }
  func.func @transform_0(%arg0: i32, %arg1: i32) -> (i32, i32, i32) {
    %c0_i32 = arith.constant 0 : i32
    %c0_i32_0 = arith.constant 0 : i32
    %c0_i32_1 = arith.constant 0 : i32
    return %arg0, %c0_i32, %c0_i32_0 : i32, i32, i32
  }
  func.func @transform_1(%arg0: i32, %arg1: i32) -> (i32, i32, i32) {
    %c0_i32 = arith.constant 0 : i32
    %c0_i32_0 = arith.constant 0 : i32
    %c0_i32_1 = arith.constant 0 : i32
    return %arg1, %c0_i32, %c0_i32_0 : i32, i32, i32
  }
  func.func @transform_2(%arg0: i32, %arg1: i32) -> (i32, i32, i32) {
    %c0_i32 = arith.constant 0 : i32
    %c0_i32_0 = arith.constant 0 : i32
    %c0_i32_1 = arith.constant 0 : i32
    return %arg1, %c0_i32, %c0_i32_0 : i32, i32, i32
  }
  func.func @transform_3(%arg0: i32, %arg1: i32) -> (i32, i32, i32, i32) {
    %c0_i32 = arith.constant 0 : i32
    %c0_i32_0 = arith.constant 0 : i32
    %c0_i32_1 = arith.constant 0 : i32
    %c0_i32_2 = arith.constant 0 : i32
    return %arg1, %c0_i32, %c0_i32_0, %c0_i32_1 : i32, i32, i32, i32
  }
  func.func @transform_4(%arg0: i32, %arg1: i32) -> (i32, i32, i32, i32) {
    %c0_i32 = arith.constant 0 : i32
    %c0_i32_0 = arith.constant 0 : i32
    %c0_i32_1 = arith.constant 0 : i32
    %c0_i32_2 = arith.constant 0 : i32
    return %arg1, %c0_i32, %c0_i32_0, %c0_i32_1 : i32, i32, i32, i32
  }
  func.func @transform_5(%arg0: i32, %arg1: i32) -> (i32, i32, i32, i32) {
    %c0_i32 = arith.constant 0 : i32
    %c0_i32_0 = arith.constant 0 : i32
    %c0_i32_1 = arith.constant 0 : i32
    %c0_i32_2 = arith.constant 0 : i32
    return %arg1, %c0_i32, %c0_i32_0, %c0_i32_1 : i32, i32, i32, i32
  }
  func.func @transform_6(%arg0: i32, %arg1: i32) -> (i32, i32, i32) {
    %c0_i32 = arith.constant 0 : i32
    %c0_i32_0 = arith.constant 0 : i32
    %c0_i32_1 = arith.constant 0 : i32
    return %arg1, %c0_i32, %c0_i32_0 : i32, i32, i32
  }
  func.func @transform_7(%arg0: i32, %arg1: i32) -> (i32, i32, i32) {
    %c0_i32 = arith.constant 0 : i32
    %c0_i32_0 = arith.constant 0 : i32
    %c0_i32_1 = arith.constant 0 : i32
    return %arg1, %c0_i32, %c0_i32_0 : i32, i32, i32
  }
  func.func @transform_8(%arg0: i32, %arg1: i32) -> (i32, i32, i32) {
    %c0_i32 = arith.constant 0 : i32
    %c0_i32_0 = arith.constant 0 : i32
    %c0_i32_1 = arith.constant 0 : i32
    return %arg1, %c0_i32, %c0_i32_0 : i32, i32, i32
  }
  func.func @transform_9(%arg0: i32, %arg1: i32) -> (i32, i32, i32) {
    %c0_i32 = arith.constant 0 : i32
    %c0_i32_0 = arith.constant 0 : i32
    %c0_i32_1 = arith.constant 0 : i32
    return %arg1, %c0_i32, %c0_i32_0 : i32, i32, i32
  }
  func.func @transform_10(%arg0: i32, %arg1: i32) -> (i32, i32, i32) {
    %c0_i32 = arith.constant 0 : i32
    %c0_i32_0 = arith.constant 0 : i32
    %c0_i32_1 = arith.constant 0 : i32
    return %arg1, %c0_i32, %c0_i32_0 : i32, i32, i32
  }
  func.func @transform_11(%arg0: i32, %arg1: i32) -> (i32, i32, i32) {
    %c0_i32 = arith.constant 0 : i32
    %c0_i32_0 = arith.constant 0 : i32
    %c0_i32_1 = arith.constant 0 : i32
    return %arg1, %c0_i32, %c0_i32_0 : i32, i32, i32
  }
  func.func @transform_12(%arg0: i32, %arg1: i32) -> (i32, i32, i32) {
    %c0_i32 = arith.constant 0 : i32
    %c0_i32_0 = arith.constant 0 : i32
    %c0_i32_1 = arith.constant 0 : i32
    return %arg1, %c0_i32, %c0_i32_0 : i32, i32, i32
  }
  func.func @transform_13(%arg0: i32, %arg1: i32) -> (i32, i32, i32) {
    %c0_i32 = arith.constant 0 : i32
    %c0_i32_0 = arith.constant 0 : i32
    %c0_i32_1 = arith.constant 0 : i32
    return %arg0, %c0_i32, %c0_i32_0 : i32, i32, i32
  }
}

module attributes {stable_mosaic.version = 11 : i64} {
  func.func @_head_kernel(%arg0: i32, %arg1: memref<2x14x32xbf16, #tpu.memory_space<vmem>>, %arg2: memref<1x32xf32, #tpu.memory_space<vmem>>, %arg3: memref<1x32xf32, #tpu.memory_space<vmem>>, %arg4: memref<32x32xbf16, #tpu.memory_space<vmem>>, %arg5: memref<1x32xf32, #tpu.memory_space<vmem>>, %arg6: memref<32x128xbf16, #tpu.memory_space<vmem>>, %arg7: memref<1x128xf32, #tpu.memory_space<vmem>>, %arg8: memref<2x128xf32, #tpu.memory_space<vmem>>) attributes {dimension_semantics = [#tpu.dimension_semantics<parallel>], iteration_bounds = array<i64: 1>, scalar_prefetch = 0 : i64, scratch_operands = 0 : i64, tpu.core_type = #tpu.core_type<tc>, window_params = [{transform_indices = @transform_0, window_bounds = array<i64: 2, 14, 32>}, {pipeline_mode = #tpu.pipeline_mode<synchronous>, transform_indices = @transform_1, window_bounds = array<i64: 1, 32>}, {pipeline_mode = #tpu.pipeline_mode<synchronous>, transform_indices = @transform_2, window_bounds = array<i64: 1, 32>}, {pipeline_mode = #tpu.pipeline_mode<synchronous>, transform_indices = @transform_3, window_bounds = array<i64: 32, 32>}, {pipeline_mode = #tpu.pipeline_mode<synchronous>, transform_indices = @transform_4, window_bounds = array<i64: 1, 32>}, {pipeline_mode = #tpu.pipeline_mode<synchronous>, transform_indices = @transform_5, window_bounds = array<i64: 32, 128>}, {pipeline_mode = #tpu.pipeline_mode<synchronous>, transform_indices = @transform_6, window_bounds = array<i64: 1, 128>}, {transform_indices = @transform_7, window_bounds = array<i64: 2, 128>}]} {
    %c0 = arith.constant 0 : index
    %c0_0 = arith.constant 0 : index
    %c0_1 = arith.constant 0 : index
    %0 = vector.load %arg1[%c0, %c0_0, %c0_1] : memref<2x14x32xbf16, #tpu.memory_space<vmem>>, vector<2x14x32xbf16>
    %1 = arith.extf %0 : vector<2x14x32xbf16> to vector<2x14x32xf32>
    %cst = arith.constant dense<0.000000e+00> : vector<2x32xf32>
    %2 = vector.multi_reduction <add>, %1, %cst [1] : vector<2x14x32xf32> to vector<2x32xf32>
    %cst_2 = arith.constant 1.400000e+01 : f32
    %3 = vector.broadcast %cst_2 : f32 to vector<2x32xf32>
    %4 = arith.divf %2, %3 : vector<2x32xf32>
    %c0_3 = arith.constant 0 : index
    %c0_4 = arith.constant 0 : index
    %5 = vector.load %arg2[%c0_3, %c0_4] : memref<1x32xf32, #tpu.memory_space<vmem>>, vector<1x32xf32>
    %c0_5 = arith.constant 0 : index
    %c0_6 = arith.constant 0 : index
    %6 = vector.load %arg3[%c0_5, %c0_6] : memref<1x32xf32, #tpu.memory_space<vmem>>, vector<1x32xf32>
    %cst_7 = arith.constant dense<0.000000e+00> : vector<2xf32>
    %7 = vector.multi_reduction <add>, %4, %cst_7 [1] : vector<2x32xf32> to vector<2xf32>
    %8 = vector.shape_cast %7 : vector<2xf32> to vector<2x1xf32>
    %cst_8 = arith.constant 3.200000e+01 : f32
    %9 = vector.broadcast %cst_8 : f32 to vector<2x1xf32>
    %10 = arith.divf %8, %9 : vector<2x1xf32>
    %11 = vector.broadcast %10 : vector<2x1xf32> to vector<2x32xf32>
    %12 = arith.subf %4, %11 : vector<2x32xf32>
    %13 = arith.mulf %12, %12 : vector<2x32xf32>
    %cst_9 = arith.constant dense<0.000000e+00> : vector<2xf32>
    %14 = vector.multi_reduction <add>, %13, %cst_9 [1] : vector<2x32xf32> to vector<2xf32>
    %15 = vector.shape_cast %14 : vector<2xf32> to vector<2x1xf32>
    %cst_10 = arith.constant 3.200000e+01 : f32
    %16 = vector.broadcast %cst_10 : f32 to vector<2x1xf32>
    %17 = arith.divf %15, %16 : vector<2x1xf32>
    %18 = vector.broadcast %10 : vector<2x1xf32> to vector<2x32xf32>
    %19 = arith.subf %4, %18 : vector<2x32xf32>
    %cst_11 = arith.constant 9.99999974E-6 : f32
    %20 = vector.broadcast %cst_11 : f32 to vector<2x1xf32>
    %21 = arith.addf %17, %20 : vector<2x1xf32>
    %22 = math.rsqrt %21 : vector<2x1xf32>
    %23 = vector.broadcast %22 : vector<2x1xf32> to vector<2x32xf32>
    %24 = arith.mulf %19, %23 : vector<2x32xf32>
    %25 = vector.broadcast %5 : vector<1x32xf32> to vector<2x32xf32>
    %26 = arith.mulf %24, %25 : vector<2x32xf32>
    %27 = vector.broadcast %6 : vector<1x32xf32> to vector<2x32xf32>
    %28 = arith.addf %26, %27 : vector<2x32xf32>
    %29 = arith.truncf %28 : vector<2x32xf32> to vector<2x32xbf16>
    %c0_12 = arith.constant 0 : index
    %c0_13 = arith.constant 0 : index
    %30 = vector.load %arg4[%c0_12, %c0_13] : memref<32x32xbf16, #tpu.memory_space<vmem>>, vector<32x32xbf16>
    %cst_14 = arith.constant dense<0.000000e+00> : vector<2x32xf32>
    %31 = tpu.matmul %29, %30, %cst_14 {dimension_numbers = #tpu.dot_dimension_numbers<[1], [0], [0], [1], [0, 0, 1, 1], [], []>} : vector<2x32xbf16>, vector<32x32xbf16>, vector<2x32xf32> -> vector<2x32xf32>
    %c0_15 = arith.constant 0 : index
    %c0_16 = arith.constant 0 : index
    %32 = vector.load %arg5[%c0_15, %c0_16] : memref<1x32xf32, #tpu.memory_space<vmem>>, vector<1x32xf32>
    %33 = vector.broadcast %32 : vector<1x32xf32> to vector<2x32xf32>
    %34 = arith.addf %31, %33 : vector<2x32xf32>
    %cst_17 = arith.constant 5.000000e-01 : f32
    %35 = vector.broadcast %cst_17 : f32 to vector<2x32xf32>
    %36 = arith.mulf %35, %34 : vector<2x32xf32>
    %cst_18 = arith.constant 4.471500e-02 : f32
    %37 = vector.broadcast %cst_18 : f32 to vector<2x32xf32>
    %38 = arith.mulf %37, %34 : vector<2x32xf32>
    %39 = arith.mulf %38, %34 : vector<2x32xf32>
    %40 = arith.mulf %39, %34 : vector<2x32xf32>
    %41 = arith.addf %34, %40 : vector<2x32xf32>
    %cst_19 = arith.constant 0.797884583 : f32
    %42 = vector.broadcast %cst_19 : f32 to vector<2x32xf32>
    %43 = arith.mulf %42, %41 : vector<2x32xf32>
    %44 = math.tanh %43 : vector<2x32xf32>
    %cst_20 = arith.constant 1.000000e+00 : f32
    %45 = vector.broadcast %cst_20 : f32 to vector<2x32xf32>
    %46 = arith.addf %45, %44 : vector<2x32xf32>
    %47 = arith.mulf %36, %46 : vector<2x32xf32>
    %48 = arith.truncf %47 : vector<2x32xf32> to vector<2x32xbf16>
    %c0_21 = arith.constant 0 : index
    %c0_22 = arith.constant 0 : index
    %49 = vector.load %arg6[%c0_21, %c0_22] : memref<32x128xbf16, #tpu.memory_space<vmem>>, vector<32x128xbf16>
    %cst_23 = arith.constant dense<0.000000e+00> : vector<2x128xf32>
    %50 = tpu.matmul %48, %49, %cst_23 {dimension_numbers = #tpu.dot_dimension_numbers<[1], [0], [0], [1], [0, 0, 1, 1], [], []>} : vector<2x32xbf16>, vector<32x128xbf16>, vector<2x128xf32> -> vector<2x128xf32>
    %c0_24 = arith.constant 0 : index
    %c0_25 = arith.constant 0 : index
    %51 = vector.load %arg7[%c0_24, %c0_25] : memref<1x128xf32, #tpu.memory_space<vmem>>, vector<1x128xf32>
    %52 = vector.broadcast %51 : vector<1x128xf32> to vector<2x128xf32>
    %53 = arith.addf %50, %52 : vector<2x128xf32>
    %c0_26 = arith.constant 0 : index
    %c0_27 = arith.constant 0 : index
    %54 = vector.load %arg8[%c0_26, %c0_27] : memref<2x128xf32, #tpu.memory_space<vmem>>, vector<2x128xf32>
    tpu.vector_store %arg8[%c0_26, %c0_27], %53 {strides = array<i32>} : memref<2x128xf32, #tpu.memory_space<vmem>>, vector<2x128xf32>,
    return
  }
  func.func @transform_0(%arg0: i32) -> (i32, i32, i32) {
    %c0_i32 = arith.constant 0 : i32
    %c0_i32_0 = arith.constant 0 : i32
    %c0_i32_1 = arith.constant 0 : i32
    return %arg0, %c0_i32, %c0_i32_0 : i32, i32, i32
  }
  func.func @transform_1(%arg0: i32) -> (i32, i32) {
    %c0_i32 = arith.constant 0 : i32
    %c0_i32_0 = arith.constant 0 : i32
    %c0_i32_1 = arith.constant 0 : i32
    return %c0_i32, %c0_i32_0 : i32, i32
  }
  func.func @transform_2(%arg0: i32) -> (i32, i32) {
    %c0_i32 = arith.constant 0 : i32
    %c0_i32_0 = arith.constant 0 : i32
    %c0_i32_1 = arith.constant 0 : i32
    return %c0_i32, %c0_i32_0 : i32, i32
  }
  func.func @transform_3(%arg0: i32) -> (i32, i32) {
    %c0_i32 = arith.constant 0 : i32
    %c0_i32_0 = arith.constant 0 : i32
    %c0_i32_1 = arith.constant 0 : i32
    return %c0_i32, %c0_i32_0 : i32, i32
  }
  func.func @transform_4(%arg0: i32) -> (i32, i32) {
    %c0_i32 = arith.constant 0 : i32
    %c0_i32_0 = arith.constant 0 : i32
    %c0_i32_1 = arith.constant 0 : i32
    return %c0_i32, %c0_i32_0 : i32, i32
  }
  func.func @transform_5(%arg0: i32) -> (i32, i32) {
    %c0_i32 = arith.constant 0 : i32
    %c0_i32_0 = arith.constant 0 : i32
    %c0_i32_1 = arith.constant 0 : i32
    return %c0_i32, %c0_i32_0 : i32, i32
  }
  func.func @transform_6(%arg0: i32) -> (i32, i32) {
    %c0_i32 = arith.constant 0 : i32
    %c0_i32_0 = arith.constant 0 : i32
    %c0_i32_1 = arith.constant 0 : i32
    return %c0_i32, %c0_i32_0 : i32, i32
  }
  func.func @transform_7(%arg0: i32) -> (i32, i32) {
    %c0_i32 = arith.constant 0 : i32
    %c0_i32_0 = arith.constant 0 : i32
    return %arg0, %c0_i32 : i32, i32
  }
}

</mosaic_0001>

<llo_original>
// kernel: forward.4
$region0: #{forward.4}
  #allocation0 [shape = 'u32[]', space=smem, size = 0x4, offset = 0x4, fixed_abs, tag = 'smem constant byte address 0x4 - core index']
  #allocation1 [shape = 'u32[144,128]{1,0:T(1,128)}', space=vmem, size = 0x12000, scoped, tag = 'internal scratch']
  %s0 = inlined_call_operand.vmem [shape: bf16[1,8,192], index: 0, kind: input, shape index: {}]
  %s1 = inlined_call_operand.vmem [shape: bf16[192,32], index: 1, kind: input, shape index: {}]
  %s2 = inlined_call_operand.vmem [shape: f32[1,32], index: 2, kind: input, shape index: {}]
  %s3 = inlined_call_operand.vmem [shape: f32[8,32], index: 3, kind: input, shape index: {}]
  %s4 = inlined_call_operand.vmem [shape: f32[1,32], index: 4, kind: input, shape index: {}]
  %s5 = inlined_call_operand.vmem [shape: bf16[1,8,32], index: 5, kind: output, shape index: {}]
  %s6 = sld [smem:[#allocation0]]
  $region30: #{forward.4} parent=0
    _
  %s8 = ssub.s32 1, %s6
  %s9 = scalar_select 0, %s8, %s6
  // Predicated region
  $region2: #{forward.4} parent=0 // pred_check
    _
  $region3: #{forward.4} parent=0 // pred_check_branch
    %11 = sbr.rel (0) target = $region5
  $region4: #{forward.4} parent=0 // pred_region
    _
  $region5: #{forward.4} parent=0 // pred_fallthru
    _
  // Predicated region
  $region6: #{forward.4} parent=0 // pred_check
    _
  $region7: #{forward.4} parent=0 // pred_check_branch
    %13 = sbr.rel (0) target = $region9
  $region8: #{forward.4} parent=0 // pred_region
    _
  $region9: #{forward.4} parent=0 // pred_fallthru
    _
  // Predicated region
  $region10: #{forward.4} parent=0 // pred_check
    _
  $region11: #{forward.4} parent=0 // pred_check_branch
    %15 = sbr.rel (0) target = $region13
  $region12: #{forward.4} parent=0 // pred_region
    _
  $region13: #{forward.4} parent=0 // pred_fallthru
    _
  // Predicated region
  $region14: #{forward.4} parent=0 // pred_check
    _
  $region15: #{forward.4} parent=0 // pred_check_branch
    %17 = sbr.rel (0) target = $region17
  $region16: #{forward.4} parent=0 // pred_region
    _
  $region17: #{forward.4} parent=0 // pred_fallthru
    _
  // Predicated region
  $region18: #{forward.4} parent=0 // pred_check
    _
  $region19: #{forward.4} parent=0 // pred_check_branch
    %19 = sbr.rel (0) target = $region21
  $region20: #{forward.4} parent=0 // pred_region
    _
  $region21: #{forward.4} parent=0 // pred_fallthru
    _
  %v21 = vld [vmem:[%s0] sm:$0xff]
  %v22 = vld [vmem:[%s1] sm:$0xf]
  %v23 = vld [vmem:[%s1 + $0x4] sm:$0xf]
  %v24 = vld [vmem:[%s1 + $0x8] sm:$0xf]
  %v25 = vld [vmem:[%s1 + $0xc] sm:$0xf]
  %v26 = vld [vmem:[%s1 + $0x10] sm:$0xf]
  %v27 = vld [vmem:[%s1 + $0x14] sm:$0xf]
  %v28 = vld [vmem:[%s1 + $0x18] sm:$0xf]
  %v29 = vld [vmem:[%s1 + $0x1c] sm:$0xf]
  %v30 = vld [vmem:[%s1 + $0x20] sm:$0xf]
  %v31 = vld [vmem:[%s1 + $0x24] sm:$0xf]
  %v32 = vld [vmem:[%s1 + $0x28] sm:$0xf]
  %v33 = vld [vmem:[%s1 + $0x2c] sm:$0xf]
  %v34 = vld [vmem:[%s1 + $0x30] sm:$0xf]
  %v35 = vld [vmem:[%s1 + $0x34] sm:$0xf]
  %v36 = vld [vmem:[%s1 + $0x38] sm:$0xf]
  %v37 = vld [vmem:[%s1 + $0x3c] sm:$0xf]
  %v38 = vld [vmem:[%s1 + $0x40] sm:$0xf]
  %v39 = vld [vmem:[%s1 + $0x44] sm:$0xf]
  %v40 = vld [vmem:[%s1 + $0x48] sm:$0xf]
  %v41 = vld [vmem:[%s1 + $0x4c] sm:$0xf]
  %v42 = vld [vmem:[%s1 + $0x50] sm:$0xf]
  %v43 = vld [vmem:[%s1 + $0x54] sm:$0xf]
  %v44 = vld [vmem:[%s1 + $0x58] sm:$0xf]
  %v45 = vld [vmem:[%s1 + $0x5c] sm:$0xf]
  %v46 = vld [vmem:[%s2] sm:$0x1]
  %v48 = vlaneseq
  %v49 = vshrl.u32 %v48, 7
  %v50 = vsub.s32 0, %v49
  %v51 = vrot.slane %v46, %v50
  %v54 = vunpack.c.l.b16 %v21
  %v55 = vunpack.c.h.b16 %v21
  %v56 = vpack.c.b16 %v54, %v54
  %v57 = vpack.c.b16 %v55, %v55
  %v83 = vunpack.c.l.b16 %v22
  %v84 = vunpack.c.l.b16 %v23
  %v85 = vunpack.c.l.b16 %v24
  %v86 = vunpack.c.l.b16 %v25
  %v87 = vunpack.c.l.b16 %v26
  %v88 = vunpack.c.l.b16 %v27
  %v89 = vunpack.c.l.b16 %v28
  %v90 = vunpack.c.l.b16 %v29
  %v91 = vunpack.c.l.b16 %v30
  %v92 = vunpack.c.l.b16 %v31
  %v93 = vunpack.c.l.b16 %v32
  %v94 = vunpack.c.l.b16 %v33
  %v95 = vunpack.c.l.b16 %v34
  %v96 = vunpack.c.l.b16 %v35
  %v97 = vunpack.c.l.b16 %v36
  %v98 = vunpack.c.l.b16 %v37
  %v99 = vunpack.c.l.b16 %v38
  %v100 = vunpack.c.l.b16 %v39
  %v101 = vunpack.c.l.b16 %v40
  %v102 = vunpack.c.l.b16 %v41
  %v103 = vunpack.c.l.b16 %v42
  %v104 = vunpack.c.l.b16 %v43
  %v105 = vunpack.c.l.b16 %v44
  %v106 = vunpack.c.l.b16 %v45
  %v107 = vpack.c.b16 %v84, %v83
  %v108 = vpack.c.b16 %v86, %v85
  %v109 = vpack.c.b16 %v88, %v87
  %v110 = vpack.c.b16 %v90, %v89
  %v111 = vpack.c.b16 %v92, %v91
  %v112 = vpack.c.b16 %v94, %v93
  %v113 = vpack.c.b16 %v96, %v95
  %v114 = vpack.c.b16 %v98, %v97
  %v115 = vpack.c.b16 %v100, %v99
  %v116 = vpack.c.b16 %v102, %v101
  %v117 = vpack.c.b16 %v104, %v103
  %v118 = vpack.c.b16 %v106, %v105
  %vm131 = vcmask 523264
  %v133 = vsel %vm131, %v57, 0
  %135 = vmatprep.subr.bf16.mxu0 0
  %136 = vmatpush1.bf16.msra.mxu0 %v107
  %137 = vmatprep.subr.bf16.mxu0 0
  %138 = vmatpush1.bf16.msra.mxu0 %v108
  %139 = vmatprep.subr.bf16.mxu0 0
  %140 = vmatpush1.bf16.msra.mxu0 %v109
  %141 = vmatprep.subr.bf16.mxu0 0
  %142 = vmatpush1.bf16.msra.mxu0 %v110
  %143 = vmatprep.subr.bf16.mxu0 0
  %144 = vmatpush1.bf16.msra.mxu0 %v111
  %145 = vmatprep.subr.bf16.mxu0 0
  %146 = vmatpush1.bf16.msra.mxu0 %v112
  %147 = vmatprep.subr.bf16.mxu0 0
  %148 = vmatpush1.bf16.msra.mxu0 %v113
  %149 = vmatprep.subr.bf16.mxu0 0
  %150 = vmatpush1.bf16.msra.mxu0 %v114
  %151 = vmatprep.subr.bf16.mxu0 0
  %152 = vmatpush1.bf16.msra.mxu0 %v115
  %153 = vmatprep.subr.bf16.mxu0 0
  %154 = vmatpush1.bf16.msra.mxu0 %v116
  %155 = vmatprep.subr.bf16.mxu0 0
  %156 = vmatpush1.bf16.msra.mxu0 %v117
  %157 = vmatprep.subr.bf16.mxu0 0
  %158 = vmatpush1.bf16.msra.mxu0 %v118
  %159 = vmatprep.subr.bf16.mxu0 0
  %160 = vmatpush1.bf16.msra.mxu0 0
  %161 = vmatprep.subr.bf16.mxu0 0
  %162 = vmatpush1.bf16.msra.mxu0 0
  %163 = vmatprep.subr.bf16.mxu0 0
  %164 = vmatpush1.bf16.msra.mxu0 0
  %165 = vmatprep.subr.bf16.mxu0 0
  %166 = vmatpush1.bf16.msra.mxu0 0
  %167 = vmatprep.mubr.bf16.mxu0 %v133
  %168 = vmatmul.mubr.bf16.gmra.mrb[0].mxu0 %v56
  %v169 = vpop.f32.mrb[0].mxu0
  %v170 = vadd.f32 %v51, %v169
  %v171 = vpop.f32.mrb[0].mxu0
  %v172 = vpop.f32.mrb[0].mxu0
  %v173 = vpop.f32.mrb[0].mxu0
  %174 = vdwg.mxu0
  %v175 = vld [vmem:[%s3] sm:$0xff]
  %v176 = vadd.f32 %v170, %v175
  %v177 = vld [vmem:[%s4] sm:$0x1]
  %v179 = vlaneseq
  %v180 = vshrl.u32 %v179, 7
  %v181 = vsub.s32 0, %v180
  %v182 = vrot.slane %v177, %v181
  %v184 = vadd.f32 %v176, %v182
  %v185 = vpack.c.bf16 %v184, %v184
  %vm186 = vcmask 257024
  %187 = vst.msk [vmem:[%s5] sm:$0xf] %vm186, %v185
  // Predicated region
  $region22: #{forward.4} parent=0 // pred_check
    _
  $region23: #{forward.4} parent=0 // pred_check_branch
    %189 = sbr.rel (0) target = $region25
  $region24: #{forward.4} parent=0 // pred_region
    _
  $region25: #{forward.4} parent=0 // pred_fallthru
    _
  // Predicated region
  $region26: #{forward.4} parent=0 // pred_check
    _
  $region27: #{forward.4} parent=0 // pred_check_branch
    %191 = sbr.rel (0) target = $region29
  $region28: #{forward.4} parent=0 // pred_region
    _
  $region29: #{forward.4} parent=0 // pred_fallthru
    _

// kernel: forward.5
$region0: #{forward.5}
  #allocation0 [shape = 'u32[]', space=smem, size = 0x4, offset = 0x4, fixed_abs, tag = 'smem constant byte address 0x4 - core index']
  #allocation1 [shape = 'u32[144,128]{1,0:T(1,128)}', space=vmem, size = 0x12000, scoped, tag = 'internal scratch']
  %s0 = inlined_call_operand.vmem [shape: bf16[1,16,16], index: 0, kind: input, shape index: {}]
  %s1 = inlined_call_operand.vmem [shape: bf16[16,32], index: 1, kind: input, shape index: {}]
  %s2 = inlined_call_operand.vmem [shape: f32[1,32], index: 2, kind: input, shape index: {}]
  %s3 = inlined_call_operand.vmem [shape: f32[16,32], index: 3, kind: input, shape index: {}]
  %s4 = inlined_call_operand.vmem [shape: f32[1,32], index: 4, kind: input, shape index: {}]
  %s5 = inlined_call_operand.vmem [shape: bf16[1,16,32], index: 5, kind: output, shape index: {}]
  %s6 = sld [smem:[#allocation0]]
  $region30: #{forward.5} parent=0
    _
  %s8 = ssub.s32 1, %s6
  %s9 = scalar_select 0, %s8, %s6
  // Predicated region
  $region2: #{forward.5} parent=0 // pred_check
    _
  $region3: #{forward.5} parent=0 // pred_check_branch
    %11 = sbr.rel (0) target = $region5
  $region4: #{forward.5} parent=0 // pred_region
    _
  $region5: #{forward.5} parent=0 // pred_fallthru
    _
  // Predicated region
  $region6: #{forward.5} parent=0 // pred_check
    _
  $region7: #{forward.5} parent=0 // pred_check_branch
    %13 = sbr.rel (0) target = $region9
  $region8: #{forward.5} parent=0 // pred_region
    _
  $region9: #{forward.5} parent=0 // pred_fallthru
    _
  // Predicated region
  $region10: #{forward.5} parent=0 // pred_check
    _
  $region11: #{forward.5} parent=0 // pred_check_branch
    %15 = sbr.rel (0) target = $region13
  $region12: #{forward.5} parent=0 // pred_region
    _
  $region13: #{forward.5} parent=0 // pred_fallthru
    _
  // Predicated region
  $region14: #{forward.5} parent=0 // pred_check
    _
  $region15: #{forward.5} parent=0 // pred_check_branch
    %17 = sbr.rel (0) target = $region17
  $region16: #{forward.5} parent=0 // pred_region
    _
  $region17: #{forward.5} parent=0 // pred_fallthru
    _
  // Predicated region
  $region18: #{forward.5} parent=0 // pred_check
    _
  $region19: #{forward.5} parent=0 // pred_check_branch
    %19 = sbr.rel (0) target = $region21
  $region20: #{forward.5} parent=0 // pred_region
    _
  $region21: #{forward.5} parent=0 // pred_fallthru
    _
  %v21 = vld [vmem:[%s0] sm:$0xf]
  %v22 = vld [vmem:[%s0 + $0x4] sm:$0xf]
  %v23 = vld [vmem:[%s1] sm:$0xf]
  %v24 = vld [vmem:[%s1 + $0x4] sm:$0xf]
  %v25 = vld [vmem:[%s2] sm:$0x1]
  %v27 = vlaneseq
  %v28 = vshrl.u32 %v27, 7
  %v29 = vsub.s32 0, %v28
  %v30 = vrot.slane %v25, %v29
  %v34 = vunpack.c.l.b16 %v21
  %v35 = vunpack.c.l.b16 %v22
  %v36 = vpack.c.b16 %v35, %v34
  %v39 = vunpack.c.l.b16 %v23
  %v40 = vunpack.c.l.b16 %v24
  %v41 = vpack.c.b16 %v40, %v39
  %vm43 = vcmask 130048
  %v45 = vsel %vm43, %v36, 0
  %47 = vmatprep.subr.bf16.mxu0 0
  %48 = vmatpush1.bf16.msra.mxu0 %v41
  %49 = vmatprep.subr.bf16.mxu0 0
  %50 = vmatpush1.bf16.msra.mxu0 0
  %51 = vmatprep.subr.bf16.mxu0 0
  %52 = vmatpush1.bf16.msra.mxu0 0
  %53 = vmatprep.subr.bf16.mxu0 0
  %54 = vmatpush1.bf16.msra.mxu0 0
  %55 = vmatprep.subr.bf16.mxu0 0
  %56 = vmatpush1.bf16.msra.mxu0 0
  %57 = vmatprep.subr.bf16.mxu0 0
  %58 = vmatpush1.bf16.msra.mxu0 0
  %59 = vmatprep.subr.bf16.mxu0 0
  %60 = vmatpush1.bf16.msra.mxu0 0
  %61 = vmatprep.subr.bf16.mxu0 0
  %62 = vmatpush1.bf16.msra.mxu0 0
  %63 = vmatprep.subr.bf16.mxu0 0
  %64 = vmatpush1.bf16.msra.mxu0 0
  %65 = vmatprep.subr.bf16.mxu0 0
  %66 = vmatpush1.bf16.msra.mxu0 0
  %67 = vmatprep.subr.bf16.mxu0 0
  %68 = vmatpush1.bf16.msra.mxu0 0
  %69 = vmatprep.subr.bf16.mxu0 0
  %70 = vmatpush1.bf16.msra.mxu0 0
  %71 = vmatprep.subr.bf16.mxu0 0
  %72 = vmatpush1.bf16.msra.mxu0 0
  %73 = vmatprep.subr.bf16.mxu0 0
  %74 = vmatpush1.bf16.msra.mxu0 0
  %75 = vmatprep.subr.bf16.mxu0 0
  %76 = vmatpush1.bf16.msra.mxu0 0
  %77 = vmatprep.subr.bf16.mxu0 0
  %78 = vmatpush1.bf16.msra.mxu0 0
  %79 = vmatprep.mubr.bf16.mxu0 0
  %80 = vmatmul.mubr.bf16.gmra.mrb[0].mxu0 %v45
  %v81 = vpop.f32.mrb[0].mxu0
  %v82 = vadd.f32 %v30, %v81
  %v83 = vpop.f32.mrb[0].mxu0
  %v84 = vpop.f32.mrb[0].mxu0
  %v85 = vadd.f32 %v30, %v84
  %v86 = vpop.f32.mrb[0].mxu0
  %87 = vdwg.mxu0
  %v88 = vld [vmem:[%s3] sm:$0xff]
  %v89 = vld [vmem:[%s3 + $0x8] sm:$0xff]
  %v90 = vadd.f32 %v82, %v88
  %v91 = vadd.f32 %v85, %v89
  %v92 = vld [vmem:[%s4] sm:$0x1]
  %v94 = vlaneseq
  %v95 = vshrl.u32 %v94, 7
  %v96 = vsub.s32 0, %v95
  %v97 = vrot.slane %v92, %v96
  %v99 = vadd.f32 %v90, %v97
  %v100 = vadd.f32 %v91, %v97
  %v101 = vpack.c.bf16 %v100, %v99
  %v103 = vunpack.c.l.b16 %v101
  %v104 = vunpack.c.h.b16 %v101
  %v105 = vpack.c.b16 %v103, %v103
  %v106 = vpack.c.b16 %v104, %v104
  %vm109 = vcmask 257024
  %110 = vst.msk [vmem:[%s5] sm:$0xf] %vm109, %v105
  %111 = vst.msk [vmem:[%s5 + $0x4] sm:$0xf] %vm109, %v106
  // Predicated region
  $region22: #{forward.5} parent=0 // pred_check
    _
  $region23: #{forward.5} parent=0 // pred_check_branch
    %113 = sbr.rel (0) target = $region25
  $region24: #{forward.5} parent=0 // pred_region
    _
  $region25: #{forward.5} parent=0 // pred_fallthru
    _
  // Predicated region
  $region26: #{forward.5} parent=0 // pred_check
    _
  $region27: #{forward.5} parent=0 // pred_check_branch
    %115 = sbr.rel (0) target = $region29
  $region28: #{forward.5} parent=0 // pred_region
    _
  $region29: #{forward.5} parent=0 // pred_fallthru
    _

// kernel: forward.7
$region0: #{forward.7}
  #allocation0 [shape = 'u32[]', space=smem, size = 0x4, offset = 0x4, fixed_abs, tag = 'smem constant byte address 0x4 - core index']
  #allocation1 [shape = 'u32[144,128]{1,0:T(1,128)}', space=vmem, size = 0x12000, scoped, tag = 'internal scratch']
  %s0 = inlined_call_operand.vmem [shape: bf16[2,14,32], index: 0, kind: input, shape index: {}]
  %s1 = inlined_call_operand.vmem [shape: f32[1,32], index: 1, kind: input, shape index: {}]
  %s2 = inlined_call_operand.vmem [shape: f32[1,32], index: 2, kind: input, shape index: {}]
  %s3 = inlined_call_operand.vmem [shape: bf16[32,32], index: 3, kind: input, shape index: {}]
  %s4 = inlined_call_operand.vmem [shape: f32[1,32], index: 4, kind: input, shape index: {}]
  %s5 = inlined_call_operand.vmem [shape: bf16[32,128], index: 5, kind: input, shape index: {}]
  %s6 = inlined_call_operand.vmem [shape: f32[1,128], index: 6, kind: input, shape index: {}]
  %s7 = inlined_call_operand.hbm [shape: f32[2,128], index: 7, kind: output, shape index: {}]
  %s8 = sld [smem:[#allocation0]]
  $region38: #{forward.7} parent=0
    _
  %s10 = ssub.s32 1, %s8
  %s11 = scalar_select 0, %s10, %s8
  $region1: #{forward.7} parent=0
    #allocation2 [shape = 'u8[1024]{0}', space=vmem, size = 0x400, scoped, tag = 'output window, operand 0, single buffered']
    #allocation3 [shape = 's32[1]{0}', space=sflag, size = 0x4, scoped, tag = 'scoped memory for forward.7']
    %12 = vsyncpa [#allocation3], 0
    // Predicated region
    $region2: #{forward.7} parent=1 // pred_check
      _
    $region3: #{forward.7} parent=1 // pred_check_branch
      %14 = sbr.rel (0) target = $region5
    $region4: #{forward.7} parent=1 // pred_region
      _
    $region5: #{forward.7} parent=1 // pred_fallthru
      _
    // Predicated region
    $region6: #{forward.7} parent=1 // pred_check
      _
    $region7: #{forward.7} parent=1 // pred_check_branch
      %16 = sbr.rel (0) target = $region9
    $region8: #{forward.7} parent=1 // pred_region
      _
    $region9: #{forward.7} parent=1 // pred_fallthru
      _
    // Predicated region
    $region10: #{forward.7} parent=1 // pred_check
      _
    $region11: #{forward.7} parent=1 // pred_check_branch
      %18 = sbr.rel (0) target = $region13
    $region12: #{forward.7} parent=1 // pred_region
      _
    $region13: #{forward.7} parent=1 // pred_fallthru
      _
    // Predicated region
    $region14: #{forward.7} parent=1 // pred_check
      _
    $region15: #{forward.7} parent=1 // pred_check_branch
      %20 = sbr.rel (0) target = $region17
    $region16: #{forward.7} parent=1 // pred_region
      _
    $region17: #{forward.7} parent=1 // pred_fallthru
      _
    // Predicated region
    $region18: #{forward.7} parent=1 // pred_check
      _
    $region19: #{forward.7} parent=1 // pred_check_branch
      %22 = sbr.rel (0) target = $region21
    $region20: #{forward.7} parent=1 // pred_region
      _
    $region21: #{forward.7} parent=1 // pred_fallthru
      _
    // Predicated region
    $region22: #{forward.7} parent=1 // pred_check
      _
    $region23: #{forward.7} parent=1 // pred_check_branch
      %24 = sbr.rel (0) target = $region25
    $region24: #{forward.7} parent=1 // pred_region
      _
    $region25: #{forward.7} parent=1 // pred_fallthru
      _
    // Predicated region
    $region26: #{forward.7} parent=1 // pred_check
      _
    $region27: #{forward.7} parent=1 // pred_check_branch
      %26 = sbr.rel (0) target = $region29
    $region28: #{forward.7} parent=1 // pred_region
      _
    $region29: #{forward.7} parent=1 // pred_fallthru
      _
    %v28 = vld [vmem:[%s0] sm:$0xf]
    %v29 = vld [vmem:[%s0 + $0x4] sm:$0x7]
    %v30 = vld [vmem:[%s0 + $0x8] sm:$0xf]
    %v31 = vld [vmem:[%s0 + $0xc] sm:$0x7]
    %v32 = vunpack.c.l.bf16 %v28
    %v33 = vunpack.c.l.bf16 %v29
    %v34 = vunpack.c.l.bf16 %v30
    %v35 = vunpack.c.l.bf16 %v31
    %vm36 = vcmask 261120
    %v37 = vsel %vm36, %v32, 0.0
    %vm38 = vcmask 259072
    %v39 = vsel %vm38, %v33, 0.0
    %v40 = vadd.f32 %v37, %v39
    %v41 = vrot.slane %v40, 4
    %v42 = vadd.f32 %v40, %v41
    %v43 = vrot.slane %v42, 2
    %v44 = vadd.f32 %v42, %v43
    %v45 = vrot.slane %v44, 1
    %v46 = vadd.f32 %v44, %v45
    %v47 = vsel %vm36, %v34, 0.0
    %v48 = vsel %vm38, %v35, 0.0
    %v49 = vadd.f32 %v47, %v48
    %v50 = vrot.slane %v49, 4
    %v51 = vadd.f32 %v49, %v50
    %v52 = vrot.slane %v51, 2
    %v53 = vadd.f32 %v51, %v52
    %v54 = vrot.slane %v53, 1
    %v55 = vadd.f32 %v53, %v54
    %v56 = vrcp.pop 14.0
    %v57 = vmul.f32 %v46, %v56
    %v58 = vmul.f32 %v55, %v56
    %v59 = vld [vmem:[%s1] sm:$0x1]
    %v60 = vld [vmem:[%s2] sm:$0x1]
    %vm63 = vcmask 1041409
    %v64 = vsel %vm63, %v58, %v57
    %vm66 = vcmask 254976
    %v67 = vsel %vm66, %v64, 0.0
    %68 = vadd.xlane.f32.xlu0 %v67
    %v69 = vpop.xlane.xlu0 %68
    %v70 = vrcp.pop 32.0
    %v71 = vmul.f32 %v69, %v70
    %v73 = vrot.slane %v71, 1
    %v76 = vsub.f32 %v57, %v71
    %v77 = vsub.f32 %v58, %v73
    %v78 = vmul.f32 %v76, %v76
    %v79 = vmul.f32 %v77, %v77
    %v82 = vrot.slane %v79, 7
    %v83 = vsel %vm63, %v82, %v78
    %v85 = vsel %vm66, %v83, 0.0
    %86 = vadd.xlane.f32.xlu0 %v85
    %v87 = vpop.xlane.xlu0 %86
    %v88 = vmul.f32 %v87, %v70
    %v89 = vadd.f32 %v88, 1e-05
    %v90 = vrsqrt.pop %v89
    %v92 = vrot.slane %v90, 1
    %v95 = vmul.f32 %v76, %v90
    %v96 = vmul.f32 %v77, %v92
    %v98 = vlaneseq
    %v99 = vshrl.u32 %v98, 7
    %v100 = vsub.s32 0, %v99
    %v101 = vrot.slane %v59, %v100
    %v103 = vmul.f32 %v95, %v101
    %v104 = vmul.f32 %v96, %v101
    %v106 = vlaneseq
    %v107 = vshrl.u32 %v106, 7
    %v108 = vsub.s32 0, %v107
    %v109 = vrot.slane %v60, %v108
    %v111 = vadd.f32 %v103, %v109
    %v112 = vadd.f32 %v104, %v109
    %v113 = vpack.c.bf16 %v111, %v111
    %v114 = vpack.c.bf16 %v112, %v112
    %v115 = vld [vmem:[%s3] sm:$0xf]
    %v116 = vld [vmem:[%s3 + $0x4] sm:$0xf]
    %v117 = vld [vmem:[%s3 + $0x8] sm:$0xf]
    %v118 = vld [vmem:[%s3 + $0xc] sm:$0xf]
    %v119 = vld [vmem:[%s4] sm:$0x1]
    %v121 = vlaneseq
    %v122 = vshrl.u32 %v121, 7
    %v123 = vsub.s32 0, %v122
    %v124 = vrot.slane %v119, %v123
    %v128 = vunpack.c.l.b16 %v113
    %v129 = vunpack.c.l.b16 %v114
    %v130 = vrot.slane %v129, 7
    %v131 = vsel %vm63, %v130, %v128
    %v132 = vpack.c.b16 %v131, %v131
    %v137 = vunpack.c.l.b16 %v115
    %v138 = vunpack.c.l.b16 %v116
    %v139 = vunpack.c.l.b16 %v117
    %v140 = vunpack.c.l.b16 %v118
    %v141 = vpack.c.b16 %v138, %v137
    %v142 = vpack.c.b16 %v140, %v139
    %v146 = vsel %vm36, %v132, 0
    %148 = vmatprep.subr.bf16.mxu0 0
    %149 = vmatpush1.bf16.msra.mxu0 %v141
    %150 = vmatprep.subr.bf16.mxu0 0
    %151 = vmatpush1.bf16.msra.mxu0 %v142
    %152 = vmatprep.subr.bf16.mxu0 0
    %153 = vmatpush1.bf16.msra.mxu0 0
    %154 = vmatprep.subr.bf16.mxu0 0
    %155 = vmatpush1.bf16.msra.mxu0 0
    %156 = vmatprep.subr.bf16.mxu0 0
    %157 = vmatpush1.bf16.msra.mxu0 0
    %158 = vmatprep.subr.bf16.mxu0 0
    %159 = vmatpush1.bf16.msra.mxu0 0
    %160 = vmatprep.subr.bf16.mxu0 0
    %161 = vmatpush1.bf16.msra.mxu0 0
    %162 = vmatprep.subr.bf16.mxu0 0
    %163 = vmatpush1.bf16.msra.mxu0 0
    %164 = vmatprep.subr.bf16.mxu0 0
    %165 = vmatpush1.bf16.msra.mxu0 0
    %166 = vmatprep.subr.bf16.mxu0 0
    %167 = vmatpush1.bf16.msra.mxu0 0
    %168 = vmatprep.subr.bf16.mxu0 0
    %169 = vmatpush1.bf16.msra.mxu0 0
    %170 = vmatprep.subr.bf16.mxu0 0
    %171 = vmatpush1.bf16.msra.mxu0 0
    %172 = vmatprep.subr.bf16.mxu0 0
    %173 = vmatpush1.bf16.msra.mxu0 0
    %174 = vmatprep.subr.bf16.mxu0 0
    %175 = vmatpush1.bf16.msra.mxu0 0
    %176 = vmatprep.subr.bf16.mxu0 0
    %177 = vmatpush1.bf16.msra.mxu0 0
    %178 = vmatprep.subr.bf16.mxu0 0
    %179 = vmatpush1.bf16.msra.mxu0 0
    %180 = vmatprep.mubr.bf16.mxu0 0
    %181 = vmatmul.mubr.bf16.gmra.mrb[0].mxu0 %v146
    %v182 = vpop.f32.mrb[0].mxu0
    %v183 = vadd.f32 %v124, %v182
    %v184 = vpop.f32.mrb[0].mxu0
    %v185 = vpop.f32.mrb[0].mxu0
    %v186 = vpop.f32.mrb[0].mxu0
    %187 = vdwg.mxu0
    %v188 = vmul.f32 %v183, 0.5
    %v189 = vmul.f32 %v183, 0.044715
    %v190 = vmul.f32 %v189, %v183
    %v191 = vmul.f32 %v190, %v183
    %v192 = vadd.f32 %v183, %v191
    %v193 = vmul.f32 %v192, 0.7978846
    %v194 = vtanh.pop %v193
    %v195 = vadd.f32 %v194, 1.0
    %v196 = vmul.f32 %v188, %v195
    %v197 = vpack.c.bf16 %v196, %v196
    %v198 = vld [vmem:[%s5] sm:$0xf]
    %v199 = vld [vmem:[%s5 + $0x4] sm:$0xf]
    %v200 = vld [vmem:[%s5 + $0x8] sm:$0xf]
    %v201 = vld [vmem:[%s5 + $0xc] sm:$0xf]
    %v202 = vld [vmem:[%s6] sm:$0x1]
    %v204 = vlaneseq
    %v205 = vshrl.u32 %v204, 7
    %v206 = vsub.s32 0, %v205
    %v207 = vrot.slane %v202, %v206
    %v213 = vunpack.c.l.b16 %v198
    %v214 = vunpack.c.l.b16 %v199
    %v215 = vunpack.c.l.b16 %v200
    %v216 = vunpack.c.l.b16 %v201
    %v217 = vpack.c.b16 %v214, %v213
    %v218 = vpack.c.b16 %v216, %v215
    %v222 = vsel %vm36, %v197, 0
    %224 = vmatprep.subr.bf16.mxu0 0
    %225 = vmatpush1.bf16.msra.mxu0 %v217
    %226 = vmatprep.subr.bf16.mxu0 0
    %227 = vmatpush1.bf16.msra.mxu0 %v218
    %228 = vmatprep.subr.bf16.mxu0 0
    %229 = vmatpush1.bf16.msra.mxu0 0
    %230 = vmatprep.subr.bf16.mxu0 0
    %231 = vmatpush1.bf16.msra.mxu0 0
    %232 = vmatprep.subr.bf16.mxu0 0
    %233 = vmatpush1.bf16.msra.mxu0 0
    %234 = vmatprep.subr.bf16.mxu0 0
    %235 = vmatpush1.bf16.msra.mxu0 0
    %236 = vmatprep.subr.bf16.mxu0 0
    %237 = vmatpush1.bf16.msra.mxu0 0
    %238 = vmatprep.subr.bf16.mxu0 0
    %239 = vmatpush1.bf16.msra.mxu0 0
    %240 = vmatprep.subr.bf16.mxu0 0
    %241 = vmatpush1.bf16.msra.mxu0 0
    %242 = vmatprep.subr.bf16.mxu0 0
    %243 = vmatpush1.bf16.msra.mxu0 0
    %244 = vmatprep.subr.bf16.mxu0 0
    %245 = vmatpush1.bf16.msra.mxu0 0
    %246 = vmatprep.subr.bf16.mxu0 0
    %247 = vmatpush1.bf16.msra.mxu0 0
    %248 = vmatprep.subr.bf16.mxu0 0
    %249 = vmatpush1.bf16.msra.mxu0 0
    %250 = vmatprep.subr.bf16.mxu0 0
    %251 = vmatpush1.bf16.msra.mxu0 0
    %252 = vmatprep.subr.bf16.mxu0 0
    %253 = vmatpush1.bf16.msra.mxu0 0
    %254 = vmatprep.subr.bf16.mxu0 0
    %255 = vmatpush1.bf16.msra.mxu0 0
    %256 = vmatprep.mubr.bf16.mxu0 0
    %257 = vmatmul.mubr.bf16.gmra.mrb[0].mxu0 %v222
    %v258 = vpop.f32.mrb[0].mxu0
    %v259 = vadd.f32 %v207, %v258
    %v260 = vpop.f32.mrb[0].mxu0
    %v261 = vpop.f32.mrb[0].mxu0
    %v262 = vpop.f32.mrb[0].mxu0
    %263 = vdwg.mxu0
    %264 = vst [vmem:[#allocation2] sm:$0x3] %v259
    // Predicated region
    $region30: #{forward.7} parent=1 // pred_check
      _
    $region31: #{forward.7} parent=1 // pred_check_branch
      %266 = sbr.rel (0) target = $region33
    $region32: #{forward.7} parent=1 // pred_region
      %s268 = ssub.s32 32, 32
      %269 = vsyncadd [#allocation3], %s268
      %s271 = sshll.u32 [#allocation2], 4
      %s272 = int_to_ptr.vmem [resolvable:$true] %s271
      %274 = dma.vmem_to_hbm [thread:$0]  %s272, 32, %s7, [#allocation3]
    $region33: #{forward.7} parent=1 // pred_fallthru
      _
    // Predicated region
    $region34: #{forward.7} parent=1 // pred_check
      _
    $region35: #{forward.7} parent=1 // pred_check_branch
      %276 = sbr.rel (0) target = $region37
    $region36: #{forward.7} parent=1 // pred_region
      %277 = dma.done [#allocation3], 32
    $region37: #{forward.7} parent=1 // pred_fallthru
      _
    %278 = vsyncpa [#allocation3], 1

// kernel: forward.6
$region0: #{forward.6}
  #allocation0 [shape = 'u32[]', space=smem, size = 0x4, offset = 0x4, fixed_abs, tag = 'smem constant byte address 0x4 - core index']
  #allocation1 [shape = 'u32[144,128]{1,0:T(1,128)}', space=vmem, size = 0x12000, scoped, tag = 'internal scratch']
  #allocation2 [shape = 'f32[28,32]{1,0:T(8,128)}', space=vmem, size = 0x4000, scoped, tag = 'scratch operand']
  %s0 = inlined_call_operand.vmem [shape: bf16[1,28,32], index: 0, kind: input, shape index: {}, may-alias: {0,13}]
  %s1 = inlined_call_operand.vmem [shape: f32[2,1,32], index: 1, kind: input, shape index: {}]
  %s2 = inlined_call_operand.vmem [shape: f32[2,1,32], index: 2, kind: input, shape index: {}]
  %s3 = inlined_call_operand.vmem [shape: bf16[2,4,32,24], index: 3, kind: input, shape index: {}]
  %s4 = inlined_call_operand.vmem [shape: f32[2,4,1,24], index: 4, kind: input, shape index: {}]
  %s5 = inlined_call_operand.vmem [shape: bf16[2,4,8,32], index: 5, kind: input, shape index: {}]
  %s6 = inlined_call_operand.vmem [shape: f32[2,1,32], index: 6, kind: input, shape index: {}]
  %s7 = inlined_call_operand.vmem [shape: f32[2,1,32], index: 7, kind: input, shape index: {}]
  %s8 = inlined_call_operand.vmem [shape: f32[2,1,32], index: 8, kind: input, shape index: {}]
  %s9 = inlined_call_operand.vmem [shape: bf16[2,32,128], index: 9, kind: input, shape index: {}]
  %s10 = inlined_call_operand.vmem [shape: f32[2,1,128], index: 10, kind: input, shape index: {}]
  %s11 = inlined_call_operand.vmem [shape: bf16[2,128,32], index: 11, kind: input, shape index: {}]
  %s12 = inlined_call_operand.vmem [shape: f32[2,1,32], index: 12, kind: input, shape index: {}]
  %s13 = inlined_call_operand.vmem [shape: bf16[1,28,32], index: 13, kind: output, shape index: {}, may-alias: {0,13}]
  %s14 = sld [smem:[#allocation0]]
  $region93: #{forward.6} parent=0
    _
  %s16 = ssub.s32 1, %s14
  %s17 = scalar_select 0, %s16, %s14
  loop: start=0, step=1, limit=4
  $region2: #{forward.6} parent=0 // loop_pre_header
    _
  $region3: #{forward.6} parent=0 // loop_header
    %s19 = sphi 0, %s23
    %p20 = scmp.ge.s32.totalorder %s19, 4
    %s26 = sphi 0, %s38
    %s27 = sphi 0, %s34
    %s28 = sphi 0, %s26
    %s29 = sphi 0, %s27
    %s30 = sphi 0, %s28
    %s31 = sphi 0, %s29
    %s41 = sphi 0, %s43
    %s44 = sphi 0, %s41
    %s45 = sphi 0, %s44
    %s61 = sphi 0, %s45
    %s67 = sphi 0, %s69
    %s70 = sphi 0, %s67
    %s71 = sphi 0, %s70
    %s87 = sphi 0, %s71
    %s93 = sphi 0, %s95
    %s96 = sphi 0, %s93
    %s97 = sphi 0, %s96
    %s113 = sphi 0, %s97
    %s119 = sphi 0, %s121
    %s122 = sphi 0, %s119
    %s123 = sphi 0, %s122
    %s139 = sphi 0, %s123
    %s145 = sphi 0, %s147
    %s148 = sphi 0, %s145
    %s149 = sphi 0, %s148
    %s165 = sphi 0, %s149
    %s171 = sphi 0, %s173
    %s174 = sphi 0, %s171
    %s175 = sphi 0, %s174
    %s191 = sphi 0, %s175
    %s197 = sphi 0, %s199
    %s200 = sphi 0, %s197
    %s201 = sphi 0, %s200
    %s217 = sphi 0, %s201
    %s223 = sphi 0, %s225
    %s226 = sphi 0, %s223
    %s227 = sphi 0, %s226
    %s243 = sphi 0, %s227
    %s249 = sphi 0, %s251
    %s252 = sphi 0, %s249
    %s253 = sphi 0, %s252
    %s269 = sphi 0, %s253
    %s275 = sphi 0, %s277
    %s278 = sphi 0, %s275
    %s279 = sphi 0, %s278
    %s295 = sphi 0, %s279
    %s301 = sphi 0, %s303
    %s304 = sphi 0, %s301
    %s305 = sphi 0, %s304
    %s321 = sphi 0, %s305
    %s327 = sphi 0, %s329
    %s330 = sphi 0, %s327
    %s331 = sphi 0, %s330
    %s347 = sphi 0, %s331
    %s353 = sphi 0, %s355
    %s356 = sphi 0, %s353
    %s357 = sphi 0, %s356
    %s373 = sphi 0, %s357
    %s379 = sphi 0, %s381
    %s382 = sphi 0, %s379
    %s383 = sphi 0, %s382
    %s399 = sphi 0, %s383
  $region4: #{forward.6} parent=0 // loop_header_branch
    %22 = sbr.rel (%p20) target = $region8
  $region5: #{forward.6} parent=0 // loop_body
    %s24 = ssub.s32 %s19, 1
    %s25 = ssub.s32 %s19, 2
    %s32 = sadd.s32 1, %s27
    %p33 = scmp.ge.s32.totalorder %s32, 2
    %s34 = scalar_select %p33, 0, %s32
    %s35 = sadd.s32 1, %s26
    %s36 = scalar_select %p33, %s35, %s26
    %p37 = scmp.ge.s32.totalorder %s36, 1
    %s38 = scalar_select %p37, 0, %s36
    %s39 = ssub.s32 %s26, %s38
    %p40 = scmp.eq.s32.totalorder %s39, 0
    %s42 = sadd.s32 %s41, 1
    %s43 = scalar_select %p40, %s41, %s42
    %p46 = pneg %p40
    %p47 = scmp.eq.s32.totalorder %s19, 1
    %p48 = por %p46, %p47
    %p49 = scmp.ne.s32.totalorder %s41, %s44
    %p50 = scmp.eq.s32.totalorder %s19, 0
    %p51 = por %p49, %p50
    %p52 = scmp.ne.s32.totalorder %s41, %s44
    %p53 = scmp.eq.s32.totalorder %s24, 1
    %p54 = por %p52, %p53
    %p55 = scmp.ne.s32.totalorder %s44, %s45
    %p56 = scmp.eq.s32.totalorder %s24, 0
    %p57 = por %p55, %p56
    %p58 = scmp.ne.s32.totalorder %s44, %s45
    %p59 = scmp.eq.s32.totalorder %s25, 1
    %p60 = por %p58, %p59
    %p62 = scmp.ne.s32.totalorder %s45, %s61
    %p63 = scmp.eq.s32.totalorder %s25, 0
    %p64 = por %p62, %p63
    %s65 = ssub.s32 %s27, %s34
    %p66 = scmp.eq.s32.totalorder %s65, 0
    %s68 = sadd.s32 %s67, 1
    %s69 = scalar_select %p66, %s67, %s68
    %p72 = pneg %p66
    %p73 = scmp.eq.s32.totalorder %s19, 1
    %p74 = por %p72, %p73
    %p75 = scmp.ne.s32.totalorder %s67, %s70
    %p76 = scmp.eq.s32.totalorder %s19, 0
    %p77 = por %p75, %p76
    %p78 = scmp.ne.s32.totalorder %s67, %s70
    %p79 = scmp.eq.s32.totalorder %s24, 1
    %p80 = por %p78, %p79
    %p81 = scmp.ne.s32.totalorder %s70, %s71
    %p82 = scmp.eq.s32.totalorder %s24, 0
    %p83 = por %p81, %p82
    %p84 = scmp.ne.s32.totalorder %s70, %s71
    %p85 = scmp.eq.s32.totalorder %s25, 1
    %p86 = por %p84, %p85
    %p88 = scmp.ne.s32.totalorder %s71, %s87
    %p89 = scmp.eq.s32.totalorder %s25, 0
    %p90 = por %p88, %p89
    %s91 = ssub.s32 %s27, %s34
    %p92 = scmp.eq.s32.totalorder %s91, 0
    %s94 = sadd.s32 %s93, 1
    %s95 = scalar_select %p92, %s93, %s94
    %p98 = pneg %p92
    %p99 = scmp.eq.s32.totalorder %s19, 1
    %p100 = por %p98, %p99
    %p101 = scmp.ne.s32.totalorder %s93, %s96
    %p102 = scmp.eq.s32.totalorder %s19, 0
    %p103 = por %p101, %p102
    %p104 = scmp.ne.s32.totalorder %s93, %s96
    %p105 = scmp.eq.s32.totalorder %s24, 1
    %p106 = por %p104, %p105
    %p107 = scmp.ne.s32.totalorder %s96, %s97
    %p108 = scmp.eq.s32.totalorder %s24, 0
    %p109 = por %p107, %p108
    %p110 = scmp.ne.s32.totalorder %s96, %s97
    %p111 = scmp.eq.s32.totalorder %s25, 1
    %p112 = por %p110, %p111
    %p114 = scmp.ne.s32.totalorder %s97, %s113
    %p115 = scmp.eq.s32.totalorder %s25, 0
    %p116 = por %p114, %p115
    %s117 = ssub.s32 %s27, %s34
    %p118 = scmp.eq.s32.totalorder %s117, 0
    %s120 = sadd.s32 %s119, 1
    %s121 = scalar_select %p118, %s119, %s120
    %p124 = pneg %p118
    %p125 = scmp.eq.s32.totalorder %s19, 1
    %p126 = por %p124, %p125
    %p127 = scmp.ne.s32.totalorder %s119, %s122
    %p128 = scmp.eq.s32.totalorder %s19, 0
    %p129 = por %p127, %p128
    %p130 = scmp.ne.s32.totalorder %s119, %s122
    %p131 = scmp.eq.s32.totalorder %s24, 1
    %p132 = por %p130, %p131
    %p133 = scmp.ne.s32.totalorder %s122, %s123
    %p134 = scmp.eq.s32.totalorder %s24, 0
    %p135 = por %p133, %p134
    %p136 = scmp.ne.s32.totalorder %s122, %s123
    %p137 = scmp.eq.s32.totalorder %s25, 1
    %p138 = por %p136, %p137
    %p140 = scmp.ne.s32.totalorder %s123, %s139
    %p141 = scmp.eq.s32.totalorder %s25, 0
    %p142 = por %p140, %p141
    %s143 = ssub.s32 %s27, %s34
    %p144 = scmp.eq.s32.totalorder %s143, 0
    %s146 = sadd.s32 %s145, 1
    %s147 = scalar_select %p144, %s145, %s146
    %p150 = pneg %p144
    %p151 = scmp.eq.s32.totalorder %s19, 1
    %p152 = por %p150, %p151
    %p153 = scmp.ne.s32.totalorder %s145, %s148
    %p154 = scmp.eq.s32.totalorder %s19, 0
    %p155 = por %p153, %p154
    %p156 = scmp.ne.s32.totalorder %s145, %s148
    %p157 = scmp.eq.s32.totalorder %s24, 1
    %p158 = por %p156, %p157
    %p159 = scmp.ne.s32.totalorder %s148, %s149
    %p160 = scmp.eq.s32.totalorder %s24, 0
    %p161 = por %p159, %p160
    %p162 = scmp.ne.s32.totalorder %s148, %s149
    %p163 = scmp.eq.s32.totalorder %s25, 1
    %p164 = por %p162, %p163
    %p166 = scmp.ne.s32.totalorder %s149, %s165
    %p167 = scmp.eq.s32.totalorder %s25, 0
    %p168 = por %p166, %p167
    %s169 = ssub.s32 %s27, %s34
    %p170 = scmp.eq.s32.totalorder %s169, 0
    %s172 = sadd.s32 %s171, 1
    %s173 = scalar_select %p170, %s171, %s172
    %p176 = pneg %p170
    %p177 = scmp.eq.s32.totalorder %s19, 1
    %p178 = por %p176, %p177
    %p179 = scmp.ne.s32.totalorder %s171, %s174
    %p180 = scmp.eq.s32.totalorder %s19, 0
    %p181 = por %p179, %p180
    %p182 = scmp.ne.s32.totalorder %s171, %s174
    %p183 = scmp.eq.s32.totalorder %s24, 1
    %p184 = por %p182, %p183
    %p185 = scmp.ne.s32.totalorder %s174, %s175
    %p186 = scmp.eq.s32.totalorder %s24, 0
    %p187 = por %p185, %p186
    %p188 = scmp.ne.s32.totalorder %s174, %s175
    %p189 = scmp.eq.s32.totalorder %s25, 1
    %p190 = por %p188, %p189
    %p192 = scmp.ne.s32.totalorder %s175, %s191
    %p193 = scmp.eq.s32.totalorder %s25, 0
    %p194 = por %p192, %p193
    %s195 = ssub.s32 %s27, %s34
    %p196 = scmp.eq.s32.totalorder %s195, 0
    %s198 = sadd.s32 %s197, 1
    %s199 = scalar_select %p196, %s197, %s198
    %p202 = pneg %p196
    %p203 = scmp.eq.s32.totalorder %s19, 1
    %p204 = por %p202, %p203
    %p205 = scmp.ne.s32.totalorder %s197, %s200
    %p206 = scmp.eq.s32.totalorder %s19, 0
    %p207 = por %p205, %p206
    %p208 = scmp.ne.s32.totalorder %s197, %s200
    %p209 = scmp.eq.s32.totalorder %s24, 1
    %p210 = por %p208, %p209
    %p211 = scmp.ne.s32.totalorder %s200, %s201
    %p212 = scmp.eq.s32.totalorder %s24, 0
    %p213 = por %p211, %p212
    %p214 = scmp.ne.s32.totalorder %s200, %s201
    %p215 = scmp.eq.s32.totalorder %s25, 1
    %p216 = por %p214, %p215
    %p218 = scmp.ne.s32.totalorder %s201, %s217
    %p219 = scmp.eq.s32.totalorder %s25, 0
    %p220 = por %p218, %p219
    %s221 = ssub.s32 %s27, %s34
    %p222 = scmp.eq.s32.totalorder %s221, 0
    %s224 = sadd.s32 %s223, 1
    %s225 = scalar_select %p222, %s223, %s224
    %p228 = pneg %p222
    %p229 = scmp.eq.s32.totalorder %s19, 1
    %p230 = por %p228, %p229
    %p231 = scmp.ne.s32.totalorder %s223, %s226
    %p232 = scmp.eq.s32.totalorder %s19, 0
    %p233 = por %p231, %p232
    %p234 = scmp.ne.s32.totalorder %s223, %s226
    %p235 = scmp.eq.s32.totalorder %s24, 1
    %p236 = por %p234, %p235
    %p237 = scmp.ne.s32.totalorder %s226, %s227
    %p238 = scmp.eq.s32.totalorder %s24, 0
    %p239 = por %p237, %p238
    %p240 = scmp.ne.s32.totalorder %s226, %s227
    %p241 = scmp.eq.s32.totalorder %s25, 1
    %p242 = por %p240, %p241
    %p244 = scmp.ne.s32.totalorder %s227, %s243
    %p245 = scmp.eq.s32.totalorder %s25, 0
    %p246 = por %p244, %p245
    %s247 = ssub.s32 %s27, %s34
    %p248 = scmp.eq.s32.totalorder %s247, 0
    %s250 = sadd.s32 %s249, 1
    %s251 = scalar_select %p248, %s249, %s250
    %p254 = pneg %p248
    %p255 = scmp.eq.s32.totalorder %s19, 1
    %p256 = por %p254, %p255
    %p257 = scmp.ne.s32.totalorder %s249, %s252
    %p258 = scmp.eq.s32.totalorder %s19, 0
    %p259 = por %p257, %p258
    %p260 = scmp.ne.s32.totalorder %s249, %s252
    %p261 = scmp.eq.s32.totalorder %s24, 1
    %p262 = por %p260, %p261
    %p263 = scmp.ne.s32.totalorder %s252, %s253
    %p264 = scmp.eq.s32.totalorder %s24, 0
    %p265 = por %p263, %p264
    %p266 = scmp.ne.s32.totalorder %s252, %s253
    %p267 = scmp.eq.s32.totalorder %s25, 1
    %p268 = por %p266, %p267
    %p270 = scmp.ne.s32.totalorder %s253, %s269
    %p271 = scmp.eq.s32.totalorder %s25, 0
    %p272 = por %p270, %p271
    %s273 = ssub.s32 %s27, %s34
    %p274 = scmp.eq.s32.totalorder %s273, 0
    %s276 = sadd.s32 %s275, 1
    %s277 = scalar_select %p274, %s275, %s276
    %p280 = pneg %p274
    %p281 = scmp.eq.s32.totalorder %s19, 1
    %p282 = por %p280, %p281
    %p283 = scmp.ne.s32.totalorder %s275, %s278
    %p284 = scmp.eq.s32.totalorder %s19, 0
    %p285 = por %p283, %p284
    %p286 = scmp.ne.s32.totalorder %s275, %s278
    %p287 = scmp.eq.s32.totalorder %s24, 1
    %p288 = por %p286, %p287
    %p289 = scmp.ne.s32.totalorder %s278, %s279
    %p290 = scmp.eq.s32.totalorder %s24, 0
    %p291 = por %p289, %p290
    %p292 = scmp.ne.s32.totalorder %s278, %s279
    %p293 = scmp.eq.s32.totalorder %s25, 1
    %p294 = por %p292, %p293
    %p296 = scmp.ne.s32.totalorder %s279, %s295
    %p297 = scmp.eq.s32.totalorder %s25, 0
    %p298 = por %p296, %p297
    %s299 = ssub.s32 %s27, %s34
    %p300 = scmp.eq.s32.totalorder %s299, 0
    %s302 = sadd.s32 %s301, 1
    %s303 = scalar_select %p300, %s301, %s302
    %p306 = pneg %p300
    %p307 = scmp.eq.s32.totalorder %s19, 1
    %p308 = por %p306, %p307
    %p309 = scmp.ne.s32.totalorder %s301, %s304
    %p310 = scmp.eq.s32.totalorder %s19, 0
    %p311 = por %p309, %p310
    %p312 = scmp.ne.s32.totalorder %s301, %s304
    %p313 = scmp.eq.s32.totalorder %s24, 1
    %p314 = por %p312, %p313
    %p315 = scmp.ne.s32.totalorder %s304, %s305
    %p316 = scmp.eq.s32.totalorder %s24, 0
    %p317 = por %p315, %p316
    %p318 = scmp.ne.s32.totalorder %s304, %s305
    %p319 = scmp.eq.s32.totalorder %s25, 1
    %p320 = por %p318, %p319
    %p322 = scmp.ne.s32.totalorder %s305, %s321
    %p323 = scmp.eq.s32.totalorder %s25, 0
    %p324 = por %p322, %p323
    %s325 = ssub.s32 %s27, %s34
    %p326 = scmp.eq.s32.totalorder %s325, 0
    %s328 = sadd.s32 %s327, 1
    %s329 = scalar_select %p326, %s327, %s328
    %p332 = pneg %p326
    %p333 = scmp.eq.s32.totalorder %s19, 1
    %p334 = por %p332, %p333
    %p335 = scmp.ne.s32.totalorder %s327, %s330
    %p336 = scmp.eq.s32.totalorder %s19, 0
    %p337 = por %p335, %p336
    %p338 = scmp.ne.s32.totalorder %s327, %s330
    %p339 = scmp.eq.s32.totalorder %s24, 1
    %p340 = por %p338, %p339
    %p341 = scmp.ne.s32.totalorder %s330, %s331
    %p342 = scmp.eq.s32.totalorder %s24, 0
    %p343 = por %p341, %p342
    %p344 = scmp.ne.s32.totalorder %s330, %s331
    %p345 = scmp.eq.s32.totalorder %s25, 1
    %p346 = por %p344, %p345
    %p348 = scmp.ne.s32.totalorder %s331, %s347
    %p349 = scmp.eq.s32.totalorder %s25, 0
    %p350 = por %p348, %p349
    %s351 = ssub.s32 %s27, %s34
    %p352 = scmp.eq.s32.totalorder %s351, 0
    %s354 = sadd.s32 %s353, 1
    %s355 = scalar_select %p352, %s353, %s354
    %p358 = pneg %p352
    %p359 = scmp.eq.s32.totalorder %s19, 1
    %p360 = por %p358, %p359
    %p361 = scmp.ne.s32.totalorder %s353, %s356
    %p362 = scmp.eq.s32.totalorder %s19, 0
    %p363 = por %p361, %p362
    %p364 = scmp.ne.s32.totalorder %s353, %s356
    %p365 = scmp.eq.s32.totalorder %s24, 1
    %p366 = por %p364, %p365
    %p367 = scmp.ne.s32.totalorder %s356, %s357
    %p368 = scmp.eq.s32.totalorder %s24, 0
    %p369 = por %p367, %p368
    %p370 = scmp.ne.s32.totalorder %s356, %s357
    %p371 = scmp.eq.s32.totalorder %s25, 1
    %p372 = por %p370, %p371
    %p374 = scmp.ne.s32.totalorder %s357, %s373
    %p375 = scmp.eq.s32.totalorder %s25, 0
    %p376 = por %p374, %p375
    %s377 = ssub.s32 %s26, %s38
    %p378 = scmp.eq.s32.totalorder %s377, 0
    %s380 = sadd.s32 %s379, 1
    %s381 = scalar_select %p378, %s379, %s380
    %p384 = pneg %p378
    %p385 = scmp.eq.s32.totalorder %s19, 1
    %p386 = por %p384, %p385
    %p387 = scmp.ne.s32.totalorder %s379, %s382
    %p388 = scmp.eq.s32.totalorder %s19, 0
    %p389 = por %p387, %p388
    %p390 = scmp.ne.s32.totalorder %s379, %s382
    %p391 = scmp.eq.s32.totalorder %s24, 1
    %p392 = por %p390, %p391
    %p393 = scmp.ne.s32.totalorder %s382, %s383
    %p394 = scmp.eq.s32.totalorder %s24, 0
    %p395 = por %p393, %p394
    %p396 = scmp.ne.s32.totalorder %s382, %s383
    %p397 = scmp.eq.s32.totalorder %s25, 1
    %p398 = por %p396, %p397
    %p400 = scmp.ne.s32.totalorder %s383, %s399
    %p401 = scmp.eq.s32.totalorder %s25, 0
    %p402 = por %p400, %p401
    %p403 = scmp.le.s32.totalorder 1, %s19
    %p404 = scmp.lt.s32.totalorder %s19, 3
    %p405 = pnand %p403, %p404
    %p406 = pneg %p405
    // Predicated region
    $region9: #{forward.6} parent=5 // pred_check
      _
    $region10: #{forward.6} parent=5 // pred_check_branch
      %408 = sbr.rel (%p405) target = $region12
    $region11: #{forward.6} parent=5 // pred_region
      %s409 = ssub.s32 %s19, 1
      // Predicated region
      $region13: #{forward.6} parent=11 // pred_check
        %p410 = pneg %p57
      $region14: #{forward.6} parent=11 // pred_check_branch
        %412 = sbr.rel (%p410) target = $region16
      $region15: #{forward.6} parent=11 // pred_region
        %p413 = scmp.lt.s32.totalorder %s28, 0
        %s414 = scalar_select %p413, %s28, 0
        %s415 = smul.addr %s414, 4
        %s416 = smul.addr %s415, 4
        %s417 = scalar_lea.vmem %s0, %s416
      $region16: #{forward.6} parent=11 // pred_fallthru
        _
    $region12: #{forward.6} parent=5 // pred_fallthru
      _
    %p418 = scmp.lt.s32.totalorder %s19, 2
    // Predicated region
    $region17: #{forward.6} parent=5 // pred_check
      %p419 = pneg %p418
    $region18: #{forward.6} parent=5 // pred_check_branch
      %421 = sbr.rel (%p419) target = $region20
    $region19: #{forward.6} parent=5 // pred_region
      // Predicated region
      $region21: #{forward.6} parent=19 // pred_check
        %p422 = pneg %p77
      $region22: #{forward.6} parent=19 // pred_check_branch
        %424 = sbr.rel (%p422) target = $region24
      $region23: #{forward.6} parent=19 // pred_region
        %p425 = scmp.lt.s32.totalorder %s27, 1
        %s426 = scalar_select %p425, %s27, 1
        %s427 = scalar_lea.vmem %s1, %s426
      $region24: #{forward.6} parent=19 // pred_fallthru
        _
      // Predicated region
      $region25: #{forward.6} parent=19 // pred_check
        %p428 = pneg %p103
      $region26: #{forward.6} parent=19 // pred_check_branch
        %430 = sbr.rel (%p428) target = $region28
      $region27: #{forward.6} parent=19 // pred_region
        %p431 = scmp.lt.s32.totalorder %s27, 1
        %s432 = scalar_select %p431, %s27, 1
        %s433 = scalar_lea.vmem %s2, %s432
      $region28: #{forward.6} parent=19 // pred_fallthru
        _
      // Predicated region
      $region29: #{forward.6} parent=19 // pred_check
        %p434 = pneg %p129
      $region30: #{forward.6} parent=19 // pred_check_branch
        %436 = sbr.rel (%p434) target = $region32
      $region31: #{forward.6} parent=19 // pred_region
        %p437 = scmp.lt.s32.totalorder %s27, 1
        %s438 = scalar_select %p437, %s27, 1
        %s439 = smul.addr %s438, 16
        %s440 = smul.addr %s439, 4
        %s441 = scalar_lea.vmem %s3, %s440
      $region32: #{forward.6} parent=19 // pred_fallthru
        _
      // Predicated region
      $region33: #{forward.6} parent=19 // pred_check
        %p442 = pneg %p155
      $region34: #{forward.6} parent=19 // pred_check_branch
        %444 = sbr.rel (%p442) target = $region36
      $region35: #{forward.6} parent=19 // pred_region
        %p445 = scmp.lt.s32.totalorder %s27, 1
        %s446 = scalar_select %p445, %s27, 1
        %s447 = smul.addr %s446, 4
        %s448 = scalar_lea.vmem %s4, %s447
      $region36: #{forward.6} parent=19 // pred_fallthru
        _
      // Predicated region
      $region37: #{forward.6} parent=19 // pred_check
        %p449 = pneg %p181
      $region38: #{forward.6} parent=19 // pred_check_branch
        %451 = sbr.rel (%p449) target = $region40
      $region39: #{forward.6} parent=19 // pred_region
        %p452 = scmp.lt.s32.totalorder %s27, 1
        %s453 = scalar_select %p452, %s27, 1
        %s454 = smul.addr %s453, 4
        %s455 = smul.addr %s454, 4
        %s456 = scalar_lea.vmem %s5, %s455
      $region40: #{forward.6} parent=19 // pred_fallthru
        _
      // Predicated region
      $region41: #{forward.6} parent=19 // pred_check
        %p457 = pneg %p207
      $region42: #{forward.6} parent=19 // pred_check_branch
        %459 = sbr.rel (%p457) target = $region44
      $region43: #{forward.6} parent=19 // pred_region
        %p460 = scmp.lt.s32.totalorder %s27, 1
        %s461 = scalar_select %p460, %s27, 1
        %s462 = scalar_lea.vmem %s6, %s461
      $region44: #{forward.6} parent=19 // pred_fallthru
        _
      // Predicated region
      $region45: #{forward.6} parent=19 // pred_check
        %p463 = pneg %p233
      $region46: #{forward.6} parent=19 // pred_check_branch
        %465 = sbr.rel (%p463) target = $region48
      $region47: #{forward.6} parent=19 // pred_region
        %p466 = scmp.lt.s32.totalorder %s27, 1
        %s467 = scalar_select %p466, %s27, 1
        %s468 = scalar_lea.vmem %s7, %s467
      $region48: #{forward.6} parent=19 // pred_fallthru
        _
      // Predicated region
      $region49: #{forward.6} parent=19 // pred_check
        %p469 = pneg %p259
      $region50: #{forward.6} parent=19 // pred_check_branch
        %471 = sbr.rel (%p469) target = $region52
      $region51: #{forward.6} parent=19 // pred_region
        %p472 = scmp.lt.s32.totalorder %s27, 1
        %s473 = scalar_select %p472, %s27, 1
        %s474 = scalar_lea.vmem %s8, %s473
      $region52: #{forward.6} parent=19 // pred_fallthru
        _
      // Predicated region
      $region53: #{forward.6} parent=19 // pred_check
        %p475 = pneg %p285
      $region54: #{forward.6} parent=19 // pred_check_branch
        %477 = sbr.rel (%p475) target = $region56
      $region55: #{forward.6} parent=19 // pred_region
        %p478 = scmp.lt.s32.totalorder %s27, 1
        %s479 = scalar_select %p478, %s27, 1
        %s480 = smul.addr %s479, 4
        %s481 = smul.addr %s480, 4
        %s482 = scalar_lea.vmem %s9, %s481
      $region56: #{forward.6} parent=19 // pred_fallthru
        _
      // Predicated region
      $region57: #{forward.6} parent=19 // pred_check
        %p483 = pneg %p311
      $region58: #{forward.6} parent=19 // pred_check_branch
        %485 = sbr.rel (%p483) target = $region60
      $region59: #{forward.6} parent=19 // pred_region
        %p486 = scmp.lt.s32.totalorder %s27, 1
        %s487 = scalar_select %p486, %s27, 1
        %s488 = scalar_lea.vmem %s10, %s487
      $region60: #{forward.6} parent=19 // pred_fallthru
        _
      // Predicated region
      $region61: #{forward.6} parent=19 // pred_check
        %p489 = pneg %p337
      $region62: #{forward.6} parent=19 // pred_check_branch
        %491 = sbr.rel (%p489) target = $region64
      $region63: #{forward.6} parent=19 // pred_region
        %p492 = scmp.lt.s32.totalorder %s27, 1
        %s493 = scalar_select %p492, %s27, 1
        %s494 = smul.addr %s493, 16
        %s495 = smul.addr %s494, 4
        %s496 = scalar_lea.vmem %s11, %s495
      $region64: #{forward.6} parent=19 // pred_fallthru
        _
      // Predicated region
      $region65: #{forward.6} parent=19 // pred_check
        %p497 = pneg %p363
      $region66: #{forward.6} parent=19 // pred_check_branch
        %499 = sbr.rel (%p497) target = $region68
      $region67: #{forward.6} parent=19 // pred_region
        %p500 = scmp.lt.s32.totalorder %s27, 1
        %s501 = scalar_select %p500, %s27, 1
        %s502 = scalar_lea.vmem %s12, %s501
      $region68: #{forward.6} parent=19 // pred_fallthru
        _
    $region20: #{forward.6} parent=5 // pred_fallthru
      _
    %p503 = scmp.le.s32.totalorder 1, %s19
    %p504 = scmp.lt.s32.totalorder %s19, 3
    %p505 = pnand %p503, %p504
    %p506 = pneg %p505
    // Predicated region
    $region69: #{forward.6} parent=5 // pred_check
      _
    $region70: #{forward.6} parent=5 // pred_check_branch
      %508 = sbr.rel (%p505) target = $region72
    $region71: #{forward.6} parent=5 // pred_region
      %s509 = ssub.s32 %s19, 1
      %p510 = scmp.lt.s32.totalorder %s28, 0
      %s511 = scalar_select %p510, %s28, 0
      %s512 = smul.addr %s511, 4
      %s513 = smul.addr %s512, 4
      %s514 = scalar_lea.vmem %s0, %s513
      %p515 = pneg %p57
      %p516 = pneg %p54
      %p517 = scmp.lt.s32.totalorder %s29, 1
      %s518 = scalar_select %p517, %s29, 1
      %s519 = scalar_lea.vmem %s1, %s518
      %p520 = pneg %p83
      %p521 = pneg %p80
      %p522 = scmp.lt.s32.totalorder %s29, 1
      %s523 = scalar_select %p522, %s29, 1
      %s524 = scalar_lea.vmem %s2, %s523
      %p525 = pneg %p109
      %p526 = pneg %p106
      %p527 = scmp.lt.s32.totalorder %s29, 1
      %s528 = scalar_select %p527, %s29, 1
      %s529 = smul.addr %s528, 16
      %s530 = smul.addr %s529, 4
      %s531 = scalar_lea.vmem %s3, %s530
      %p532 = pneg %p135
      %p533 = pneg %p132
      %p534 = scmp.lt.s32.totalorder %s29, 1
      %s535 = scalar_select %p534, %s29, 1
      %s536 = smul.addr %s535, 4
      %s537 = scalar_lea.vmem %s4, %s536
      %p538 = pneg %p161
      %p539 = pneg %p158
      %p540 = scmp.lt.s32.totalorder %s29, 1
      %s541 = scalar_select %p540, %s29, 1
      %s542 = smul.addr %s541, 4
      %s543 = smul.addr %s542, 4
      %s544 = scalar_lea.vmem %s5, %s543
      %p545 = pneg %p187
      %p546 = pneg %p184
      %p547 = scmp.lt.s32.totalorder %s29, 1
      %s548 = scalar_select %p547, %s29, 1
      %s549 = scalar_lea.vmem %s6, %s548
      %p550 = pneg %p213
      %p551 = pneg %p210
      %p552 = scmp.lt.s32.totalorder %s29, 1
      %s553 = scalar_select %p552, %s29, 1
      %s554 = scalar_lea.vmem %s7, %s553
      %p555 = pneg %p239
      %p556 = pneg %p236
      %p557 = scmp.lt.s32.totalorder %s29, 1
      %s558 = scalar_select %p557, %s29, 1
      %s559 = scalar_lea.vmem %s8, %s558
      %p560 = pneg %p265
      %p561 = pneg %p262
      %p562 = scmp.lt.s32.totalorder %s29, 1
      %s563 = scalar_select %p562, %s29, 1
      %s564 = smul.addr %s563, 4
      %s565 = smul.addr %s564, 4
      %s566 = scalar_lea.vmem %s9, %s565
      %p567 = pneg %p291
      %p568 = pneg %p288
      %p569 = scmp.lt.s32.totalorder %s29, 1
      %s570 = scalar_select %p569, %s29, 1
      %s571 = scalar_lea.vmem %s10, %s570
      %p572 = pneg %p317
      %p573 = pneg %p314
      %p574 = scmp.lt.s32.totalorder %s29, 1
      %s575 = scalar_select %p574, %s29, 1
      %s576 = smul.addr %s575, 16
      %s577 = smul.addr %s576, 4
      %s578 = scalar_lea.vmem %s11, %s577
      %p579 = pneg %p343
      %p580 = pneg %p340
      %p581 = scmp.lt.s32.totalorder %s29, 1
      %s582 = scalar_select %p581, %s29, 1
      %s583 = scalar_lea.vmem %s12, %s582
      %p584 = pneg %p369
      %p585 = pneg %p366
      %p586 = pneg %p395
      %p587 = pneg %p392
      %p588 = scmp.lt.s32.totalorder %s28, 0
      %s589 = scalar_select %p588, %s28, 0
      %s590 = smul.addr %s589, 4
      %s591 = smul.addr %s590, 4
      %s592 = scalar_lea.vmem %s13, %s591
      %p593 = scmp.lt.s32.totalorder %s28, 0
      %s594 = scalar_select %p593, %s28, 0
      %s595 = smul.addr %s594, 4
      %s596 = smul.addr %s595, 4
      %s597 = scalar_lea.vmem %s0, %s596
      %p598 = scmp.lt.s32.totalorder %s29, 1
      %s599 = scalar_select %p598, %s29, 1
      %s600 = scalar_lea.vmem %s1, %s599
      %p601 = scmp.lt.s32.totalorder %s29, 1
      %s602 = scalar_select %p601, %s29, 1
      %s603 = scalar_lea.vmem %s2, %s602
      %p604 = scmp.lt.s32.totalorder %s29, 1
      %s605 = scalar_select %p604, %s29, 1
      %s606 = smul.addr %s605, 16
      %s607 = smul.addr %s606, 4
      %s608 = scalar_lea.vmem %s3, %s607
      %p609 = scmp.lt.s32.totalorder %s29, 1
      %s610 = scalar_select %p609, %s29, 1
      %s611 = smul.addr %s610, 4
      %s612 = scalar_lea.vmem %s4, %s611
      %p613 = scmp.lt.s32.totalorder %s29, 1
      %s614 = scalar_select %p613, %s29, 1
      %s615 = smul.addr %s614, 4
      %s616 = smul.addr %s615, 4
      %s617 = scalar_lea.vmem %s5, %s616
      %p618 = scmp.lt.s32.totalorder %s29, 1
      %s619 = scalar_select %p618, %s29, 1
      %s620 = scalar_lea.vmem %s6, %s619
      %p621 = scmp.lt.s32.totalorder %s29, 1
      %s622 = scalar_select %p621, %s29, 1
      %s623 = scalar_lea.vmem %s7, %s622
      %p624 = scmp.lt.s32.totalorder %s29, 1
      %s625 = scalar_select %p624, %s29, 1
      %s626 = scalar_lea.vmem %s8, %s625
      %p627 = scmp.lt.s32.totalorder %s29, 1
      %s628 = scalar_select %p627, %s29, 1
      %s629 = smul.addr %s628, 4
      %s630 = smul.addr %s629, 4
      %s631 = scalar_lea.vmem %s9, %s630
      %p632 = scmp.lt.s32.totalorder %s29, 1
      %s633 = scalar_select %p632, %s29, 1
      %s634 = scalar_lea.vmem %s10, %s633
      %p635 = scmp.lt.s32.totalorder %s29, 1
      %s636 = scalar_select %p635, %s29, 1
      %s637 = smul.addr %s636, 16
      %s638 = smul.addr %s637, 4
      %s639 = scalar_lea.vmem %s11, %s638
      %p640 = scmp.lt.s32.totalorder %s29, 1
      %s641 = scalar_select %p640, %s29, 1
      %s642 = scalar_lea.vmem %s12, %s641
      %p643 = scmp.lt.s32.totalorder %s28, 0
      %s644 = scalar_select %p643, %s28, 0
      %s645 = smul.addr %s644, 4
      %s646 = smul.addr %s645, 4
      %s647 = scalar_lea.vmem %s13, %s646
      %p649 = scmp.eq.s32.totalorder %s29, 0
      // Predicated region
      $region73: #{forward.6} parent=71 // pred_check
        %p650 = pneg %p649
      $region74: #{forward.6} parent=71 // pred_check_branch
        %652 = sbr.rel (%p650) target = $region76
      $region75: #{forward.6} parent=71 // pred_region
        %v653 = vld [vmem:[%s597] sm:$0xf]
        %v654 = vld [vmem:[%s597 + $0x4] sm:$0xf]
        %v655 = vld [vmem:[%s597 + $0x8] sm:$0xf]
        %v656 = vld [vmem:[%s597 + $0xc] sm:$0x3]
        %v657 = vunpack.c.l.bf16 %v653
        %v658 = vunpack.c.l.bf16 %v654
        %v659 = vunpack.c.l.bf16 %v655
        %v660 = vunpack.c.l.bf16 %v656
        %vm661 = vcmask 261120
        %662 = vst.msk [vmem:[#allocation2] sm:$0xff] %vm661, %v657
        %663 = vst.msk [vmem:[#allocation2 + $0x8] sm:$0xff] %vm661, %v658
        %664 = vst.msk [vmem:[#allocation2 + $0x10] sm:$0xff] %vm661, %v659
        %vm665 = vcmask 257024
        %666 = vst.msk [vmem:[#allocation2 + $0x18] sm:$0xf] %vm665, %v660
      $region76: #{forward.6} parent=71 // pred_fallthru
        _
      %v667 = vld [vmem:[#allocation2] sm:$0xff]
      %v668 = vld [vmem:[#allocation2 + $0x8] sm:$0xff]
      %v669 = vld [vmem:[#allocation2 + $0x10] sm:$0xff]
      %v670 = vld [vmem:[#allocation2 + $0x18] sm:$0xf]
      %v671 = vld [vmem:[%s600] sm:$0x1]
      %v672 = vld [vmem:[%s603] sm:$0x1]
      %vm673 = vcmask 261120
      %v674 = vsel %vm673, %v667, 0.0
      %675 = vadd.xlane.f32.xlu0 %v674
      %v676 = vpop.xlane.xlu0 %675
      %v677 = vsel %vm673, %v668, 0.0
      %678 = vadd.xlane.f32.xlu0 %v677
      %v679 = vpop.xlane.xlu0 %678
      %v680 = vsel %vm673, %v669, 0.0
      %681 = vadd.xlane.f32.xlu0 %v680
      %v682 = vpop.xlane.xlu0 %681
      %vm683 = vcmask 257024
      %v684 = vsel %vm683, %v670, 0.0
      %685 = vadd.xlane.f32.xlu0 %v684
      %v686 = vpop.xlane.xlu0 %685
      %v687 = vrcp.pop 32.0
      %v688 = vmul.f32 %v676, %v687
      %v689 = vmul.f32 %v679, %v687
      %v690 = vmul.f32 %v682, %v687
      %v691 = vmul.f32 %v686, %v687
      %v692 = vsub.f32 %v667, %v688
      %v693 = vsub.f32 %v668, %v689
      %v694 = vsub.f32 %v669, %v690
      %v695 = vsub.f32 %v670, %v691
      %v696 = vmul.f32 %v692, %v692
      %v697 = vmul.f32 %v693, %v693
      %v698 = vmul.f32 %v694, %v694
      %v699 = vmul.f32 %v695, %v695
      %v700 = vsel %vm673, %v696, 0.0
      %701 = vadd.xlane.f32.xlu0 %v700
      %v702 = vpop.xlane.xlu0 %701
      %v703 = vsel %vm673, %v697, 0.0
      %704 = vadd.xlane.f32.xlu0 %v703
      %v705 = vpop.xlane.xlu0 %704
      %v706 = vsel %vm673, %v698, 0.0
      %707 = vadd.xlane.f32.xlu0 %v706
      %v708 = vpop.xlane.xlu0 %707
      %v709 = vsel %vm683, %v699, 0.0
      %710 = vadd.xlane.f32.xlu0 %v709
      %v711 = vpop.xlane.xlu0 %710
      %v712 = vmul.f32 %v702, %v687
      %v713 = vmul.f32 %v705, %v687
      %v714 = vmul.f32 %v708, %v687
      %v715 = vmul.f32 %v711, %v687
      %v716 = vadd.f32 %v712, 1e-05
      %v717 = vadd.f32 %v713, 1e-05
      %v718 = vadd.f32 %v714, 1e-05
      %v719 = vadd.f32 %v715, 1e-05
      %v720 = vrsqrt.pop %v716
      %v721 = vrsqrt.pop %v717
      %v722 = vrsqrt.pop %v718
      %v723 = vrsqrt.pop %v719
      %v724 = vmul.f32 %v692, %v720
      %v725 = vmul.f32 %v693, %v721
      %v726 = vmul.f32 %v694, %v722
      %v727 = vmul.f32 %v695, %v723
      %v729 = vlaneseq
      %v730 = vshrl.u32 %v729, 7
      %v731 = vsub.s32 0, %v730
      %v732 = vrot.slane %v671, %v731
      %v734 = vmul.f32 %v724, %v732
      %v735 = vmul.f32 %v725, %v732
      %v736 = vmul.f32 %v726, %v732
      %v737 = vmul.f32 %v727, %v732
      %v739 = vlaneseq
      %v740 = vshrl.u32 %v739, 7
      %v741 = vsub.s32 0, %v740
      %v742 = vrot.slane %v672, %v741
      %v744 = vadd.f32 %v734, %v742
      %v745 = vadd.f32 %v735, %v742
      %v746 = vadd.f32 %v736, %v742
      %v747 = vadd.f32 %v737, %v742
      %v748 = vpack.c.bf16 %v745, %v744
      %v749 = vpack.c.bf16 %v747, %v746
      %v750 = vld [vmem:[%s608] sm:$0xf]
      %v751 = vld [vmem:[%s608 + $0x4] sm:$0xf]
      %v752 = vld [vmem:[%s608 + $0x8] sm:$0xf]
      %v753 = vld [vmem:[%s608 + $0xc] sm:$0xf]
      %v754 = vld [vmem:[%s612] sm:$0x1]
      %v756 = vlaneseq
      %v757 = vshrl.u32 %v756, 7
      %v758 = vsub.s32 0, %v757
      %v759 = vrot.slane %v754, %v758
      %v765 = vunpack.c.l.b16 %v750
      %v766 = vunpack.c.l.b16 %v751
      %v767 = vunpack.c.l.b16 %v752
      %v768 = vunpack.c.l.b16 %v753
      %v769 = vpack.c.b16 %v766, %v765
      %v770 = vpack.c.b16 %v768, %v767
      %v774 = vsel %vm673, %v748, 0
      %v777 = vsel %vm673, %v749, 0
      %779 = vmatprep.subr.bf16.mxu0 0
      %780 = vmatpush1.bf16.msra.mxu0 %v769
      %781 = vmatprep.subr.bf16.mxu0 0
      %782 = vmatpush1.bf16.msra.mxu0 %v770
      %783 = vmatprep.subr.bf16.mxu0 0
      %784 = vmatpush1.bf16.msra.mxu0 0
      %785 = vmatprep.subr.bf16.mxu0 0
      %786 = vmatpush1.bf16.msra.mxu0 0
      %787 = vmatprep.subr.bf16.mxu0 0
      %788 = vmatpush1.bf16.msra.mxu0 0
      %789 = vmatprep.subr.bf16.mxu0 0
      %790 = vmatpush1.bf16.msra.mxu0 0
      %791 = vmatprep.subr.bf16.mxu0 0
      %792 = vmatpush1.bf16.msra.mxu0 0
      %793 = vmatprep.subr.bf16.mxu0 0
      %794 = vmatpush1.bf16.msra.mxu0 0
      %795 = vmatprep.subr.bf16.mxu0 0
      %796 = vmatpush1.bf16.msra.mxu0 0
      %797 = vmatprep.subr.bf16.mxu0 0
      %798 = vmatpush1.bf16.msra.mxu0 0
      %799 = vmatprep.subr.bf16.mxu0 0
      %800 = vmatpush1.bf16.msra.mxu0 0
      %801 = vmatprep.subr.bf16.mxu0 0
      %802 = vmatpush1.bf16.msra.mxu0 0
      %803 = vmatprep.subr.bf16.mxu0 0
      %804 = vmatpush1.bf16.msra.mxu0 0
      %805 = vmatprep.subr.bf16.mxu0 0
      %806 = vmatpush1.bf16.msra.mxu0 0
      %807 = vmatprep.subr.bf16.mxu0 0
      %808 = vmatpush1.bf16.msra.mxu0 0
      %809 = vmatprep.subr.bf16.mxu0 0
      %810 = vmatpush1.bf16.msra.mxu0 0
      %811 = vmatprep.mubr.bf16.mxu0 0
      %812 = vmatmul.mubr.bf16.gmra.mrb[0].mxu0 %v774
      %v813 = vpop.f32.mrb[0].mxu0
      %v814 = vadd.f32 %v759, %v813
      %v815 = vpop.f32.mrb[0].mxu0
      %v816 = vpop.f32.mrb[0].mxu0
      %v817 = vadd.f32 %v759, %v816
      %v818 = vpop.f32.mrb[0].mxu0
      %819 = vmatprep.mubr.bf16.mxu0 0
      %820 = vmatmul.mubr.bf16.gmra.mrb[0].mxu0 %v777
      %v821 = vpop.f32.mrb[0].mxu0
      %v822 = vadd.f32 %v759, %v821
      %v823 = vpop.f32.mrb[0].mxu0
      %v824 = vpop.f32.mrb[0].mxu0
      %v825 = vadd.f32 %v759, %v824
      %v826 = vpop.f32.mrb[0].mxu0
      %827 = vdwg.mxu0
      %v828 = vmul.f32 %v814, 0.35355338
      %v829 = vmul.f32 %v817, 0.35355338
      %v830 = vmul.f32 %v822, 0.35355338
      %v831 = vmul.f32 %v825, 0.35355338
      %v832 = vpack.c.bf16 %v829, %v828
      %v833 = vpack.c.bf16 %v831, %v830
      %v834 = vpack.c.bf16 %v817, %v814
      %v835 = vpack.c.bf16 %v825, %v822
      %837 = vrot.lane.b32.xlu0 %v834, 120
      %v838 = vpop.permute.xlu0 %837
      %vm839 = vcmask 64512
      %v841 = vsel %vm839, %v832, 0
      %v844 = vsel %vm839, %v838, 0
      %846 = vmatprep.subr.bf16.mxu0 0
      %847 = vmatpush1.bf16.xpose.msra.mxu0 %v844
      %848 = vmatprep.subr.bf16.mxu0 0
      %849 = vmatpush1.bf16.xpose.msra.mxu0 0
      %850 = vmatprep.subr.bf16.mxu0 0
      %851 = vmatpush1.bf16.xpose.msra.mxu0 0
      %852 = vmatprep.subr.bf16.mxu0 0
      %853 = vmatpush1.bf16.xpose.msra.mxu0 0
      %854 = vmatprep.subr.bf16.mxu0 0
      %855 = vmatpush1.bf16.xpose.msra.mxu0 0
      %856 = vmatprep.subr.bf16.mxu0 0
      %857 = vmatpush1.bf16.xpose.msra.mxu0 0
      %858 = vmatprep.subr.bf16.mxu0 0
      %859 = vmatpush1.bf16.xpose.msra.mxu0 0
      %860 = vmatprep.subr.bf16.mxu0 0
      %861 = vmatpush1.bf16.xpose.msra.mxu0 0
      %862 = vmatprep.subr.bf16.mxu0 0
      %863 = vmatpush1.bf16.xpose.msra.mxu0 0
      %864 = vmatprep.subr.bf16.mxu0 0
      %865 = vmatpush1.bf16.xpose.msra.mxu0 0
      %866 = vmatprep.subr.bf16.mxu0 0
      %867 = vmatpush1.bf16.xpose.msra.mxu0 0
      %868 = vmatprep.subr.bf16.mxu0 0
      %869 = vmatpush1.bf16.xpose.msra.mxu0 0
      %870 = vmatprep.subr.bf16.mxu0 0
      %871 = vmatpush1.bf16.xpose.msra.mxu0 0
      %872 = vmatprep.subr.bf16.mxu0 0
      %873 = vmatpush1.bf16.xpose.msra.mxu0 0
      %874 = vmatprep.subr.bf16.mxu0 0
      %875 = vmatpush1.bf16.xpose.msra.mxu0 0
      %876 = vmatprep.subr.bf16.mxu0 0
      %877 = vmatpush1.bf16.xpose.msra.mxu0 0
      %878 = vmatprep.mubr.bf16.mxu0 0
      %879 = vmatmul.mubr.bf16.gmra.mrb[0].mxu0 %v841
      %v880 = vpop.f32.mrb[0].mxu0
      %v881 = vadd.f32 0.0, %v880
      %v882 = vpop.f32.mrb[0].mxu0
      %v883 = vpop.f32.mrb[0].mxu0
      %v884 = vadd.f32 0.0, %v883
      %v885 = vpop.f32.mrb[0].mxu0
      %886 = vdwg.mxu0
      %vm887 = vcmask 113664
      %v888 = vsel %vm887, %v881, -inf
      %889 = vmax.xlane.f32.xlu0 %v888
      %v890 = vpop.xlane.xlu0 %889
      %vm891 = vcmask 111616
      %v892 = vsel %vm891, %v884, -inf
      %893 = vmax.xlane.f32.xlu0 %v892
      %v894 = vpop.xlane.xlu0 %893
      %v895 = vsub.f32 %v881, %v890
      %v896 = vsub.f32 %v884, %v894
      %v897 = vmul.f32 %v895, 1.442695
      %v898 = vpow.pop %v897
      %v899 = vmul.f32 %v896, 1.442695
      %v900 = vpow.pop %v899
      %v901 = vsel %vm887, %v898, 0.0
      %902 = vadd.xlane.f32.xlu0 %v901
      %v903 = vpop.xlane.xlu0 %902
      %v904 = vsel %vm891, %v900, 0.0
      %905 = vadd.xlane.f32.xlu0 %v904
      %v906 = vpop.xlane.xlu0 %905
      %v907 = vrcp.pop %v903
      %v908 = vrcp.pop %v906
      %v909 = vmul.f32 %v898, %v907
      %v910 = vmul.f32 %v900, %v908
      %v911 = vpack.c.bf16 %v910, %v909
      %912 = vrot.lane.b32.xlu0 %v834, 112
      %v913 = vpop.permute.xlu0 %912
      %v915 = vsel %vm887, %v911, 0
      %vm917 = vcmask 1046528
      %v919 = vsel %vm917, %v913, 0
      %921 = vmatprep.subr.bf16.mxu0 0
      %922 = vmatpush1.bf16.msra.mxu0 %v919
      %923 = vmatprep.subr.bf16.mxu0 0
      %924 = vmatpush1.bf16.msra.mxu0 0
      %925 = vmatprep.subr.bf16.mxu0 0
      %926 = vmatpush1.bf16.msra.mxu0 0
      %927 = vmatprep.subr.bf16.mxu0 0
      %928 = vmatpush1.bf16.msra.mxu0 0
      %929 = vmatprep.subr.bf16.mxu0 0
      %930 = vmatpush1.bf16.msra.mxu0 0
      %931 = vmatprep.subr.bf16.mxu0 0
      %932 = vmatpush1.bf16.msra.mxu0 0
      %933 = vmatprep.subr.bf16.mxu0 0
      %934 = vmatpush1.bf16.msra.mxu0 0
      %935 = vmatprep.subr.bf16.mxu0 0
      %936 = vmatpush1.bf16.msra.mxu0 0
      %937 = vmatprep.subr.bf16.mxu0 0
      %938 = vmatpush1.bf16.msra.mxu0 0
      %939 = vmatprep.subr.bf16.mxu0 0
      %940 = vmatpush1.bf16.msra.mxu0 0
      %941 = vmatprep.subr.bf16.mxu0 0
      %942 = vmatpush1.bf16.msra.mxu0 0
      %943 = vmatprep.subr.bf16.mxu0 0
      %944 = vmatpush1.bf16.msra.mxu0 0
      %945 = vmatprep.subr.bf16.mxu0 0
      %946 = vmatpush1.bf16.msra.mxu0 0
      %947 = vmatprep.subr.bf16.mxu0 0
      %948 = vmatpush1.bf16.msra.mxu0 0
      %949 = vmatprep.subr.bf16.mxu0 0
      %950 = vmatpush1.bf16.msra.mxu0 0
      %951 = vmatprep.subr.bf16.mxu0 0
      %952 = vmatpush1.bf16.msra.mxu0 0
      %953 = vmatprep.mubr.bf16.mxu0 0
      %954 = vmatmul.mubr.bf16.gmra.mrb[0].mxu0 %v915
      %v955 = vpop.f32.mrb[0].mxu0
      %v956 = vadd.f32 0.0, %v955
      %v957 = vpop.f32.mrb[0].mxu0
      %v958 = vpop.f32.mrb[0].mxu0
      %v959 = vadd.f32 0.0, %v958
      %v960 = vpop.f32.mrb[0].mxu0
      %961 = vdwg.mxu0
      %vm964 = vcmask 1040384
      %v965 = vrot.slane %v832, 7
      %v966 = vrot.slane %v833, 7
      %v967 = vsel %vm964, %v965, %v966
      %v969 = vrot.slane %v834, 7
      %v970 = vrot.slane %v835, 7
      %v971 = vsel %vm964, %v969, %v970
      %972 = vrot.lane.b32.xlu0 %v971, 120
      %v973 = vpop.permute.xlu0 %972
      %v975 = vsel %vm839, %v967, 0
      %v978 = vsel %vm839, %v973, 0
      %980 = vmatprep.subr.bf16.mxu0 0
      %981 = vmatpush1.bf16.xpose.msra.mxu0 %v978
      %982 = vmatprep.subr.bf16.mxu0 0
      %983 = vmatpush1.bf16.xpose.msra.mxu0 0
      %984 = vmatprep.subr.bf16.mxu0 0
      %985 = vmatpush1.bf16.xpose.msra.mxu0 0
      %986 = vmatprep.subr.bf16.mxu0 0
      %987 = vmatpush1.bf16.xpose.msra.mxu0 0
      %988 = vmatprep.subr.bf16.mxu0 0
      %989 = vmatpush1.bf16.xpose.msra.mxu0 0
      %990 = vmatprep.subr.bf16.mxu0 0
      %991 = vmatpush1.bf16.xpose.msra.mxu0 0
      %992 = vmatprep.subr.bf16.mxu0 0
      %993 = vmatpush1.bf16.xpose.msra.mxu0 0
      %994 = vmatprep.subr.bf16.mxu0 0
      %995 = vmatpush1.bf16.xpose.msra.mxu0 0
      %996 = vmatprep.subr.bf16.mxu0 0
      %997 = vmatpush1.bf16.xpose.msra.mxu0 0
      %998 = vmatprep.subr.bf16.mxu0 0
      %999 = vmatpush1.bf16.xpose.msra.mxu0 0
      %1000 = vmatprep.subr.bf16.mxu0 0
      %1001 = vmatpush1.bf16.xpose.msra.mxu0 0
      %1002 = vmatprep.subr.bf16.mxu0 0
      %1003 = vmatpush1.bf16.xpose.msra.mxu0 0
      %1004 = vmatprep.subr.bf16.mxu0 0
      %1005 = vmatpush1.bf16.xpose.msra.mxu0 0
      %1006 = vmatprep.subr.bf16.mxu0 0
      %1007 = vmatpush1.bf16.xpose.msra.mxu0 0
      %1008 = vmatprep.subr.bf16.mxu0 0
      %1009 = vmatpush1.bf16.xpose.msra.mxu0 0
      %1010 = vmatprep.subr.bf16.mxu0 0
      %1011 = vmatpush1.bf16.xpose.msra.mxu0 0
      %1012 = vmatprep.mubr.bf16.mxu0 0
      %1013 = vmatmul.mubr.bf16.gmra.mrb[0].mxu0 %v975
      %v1014 = vpop.f32.mrb[0].mxu0
      %v1015 = vadd.f32 0.0, %v1014
      %v1016 = vpop.f32.mrb[0].mxu0
      %v1017 = vpop.f32.mrb[0].mxu0
      %v1018 = vadd.f32 0.0, %v1017
      %v1019 = vpop.f32.mrb[0].mxu0
      %1020 = vdwg.mxu0
      %v1021 = vsel %vm887, %v1015, -inf
      %1022 = vmax.xlane.f32.xlu0 %v1021
      %v1023 = vpop.xlane.xlu0 %1022
      %v1024 = vsel %vm891, %v1018, -inf
      %1025 = vmax.xlane.f32.xlu0 %v1024
      %v1026 = vpop.xlane.xlu0 %1025
      %v1027 = vsub.f32 %v1015, %v1023
      %v1028 = vsub.f32 %v1018, %v1026
      %v1029 = vmul.f32 %v1027, 1.442695
      %v1030 = vpow.pop %v1029
      %v1031 = vmul.f32 %v1028, 1.442695
      %v1032 = vpow.pop %v1031
      %v1033 = vsel %vm887, %v1030, 0.0
      %1034 = vadd.xlane.f32.xlu0 %v1033
      %v1035 = vpop.xlane.xlu0 %1034
      %v1036 = vsel %vm891, %v1032, 0.0
      %1037 = vadd.xlane.f32.xlu0 %v1036
      %v1038 = vpop.xlane.xlu0 %1037
      %v1039 = vrcp.pop %v1035
      %v1040 = vrcp.pop %v1038
      %v1041 = vmul.f32 %v1030, %v1039
      %v1042 = vmul.f32 %v1032, %v1040
      %v1043 = vpack.c.bf16 %v1042, %v1041
      %1044 = vrot.lane.b32.xlu0 %v971, 112
      %v1045 = vpop.permute.xlu0 %1044
      %v1047 = vsel %vm887, %v1043, 0
      %v1050 = vsel %vm917, %v1045, 0
      %1052 = vmatprep.subr.bf16.mxu0 0
      %1053 = vmatpush1.bf16.msra.mxu0 %v1050
      %1054 = vmatprep.subr.bf16.mxu0 0
      %1055 = vmatpush1.bf16.msra.mxu0 0
      %1056 = vmatprep.subr.bf16.mxu0 0
      %1057 = vmatpush1.bf16.msra.mxu0 0
      %1058 = vmatprep.subr.bf16.mxu0 0
      %1059 = vmatpush1.bf16.msra.mxu0 0
      %1060 = vmatprep.subr.bf16.mxu0 0
      %1061 = vmatpush1.bf16.msra.mxu0 0
      %1062 = vmatprep.subr.bf16.mxu0 0
      %1063 = vmatpush1.bf16.msra.mxu0 0
      %1064 = vmatprep.subr.bf16.mxu0 0
      %1065 = vmatpush1.bf16.msra.mxu0 0
      %1066 = vmatprep.subr.bf16.mxu0 0
      %1067 = vmatpush1.bf16.msra.mxu0 0
      %1068 = vmatprep.subr.bf16.mxu0 0
      %1069 = vmatpush1.bf16.msra.mxu0 0
      %1070 = vmatprep.subr.bf16.mxu0 0
      %1071 = vmatpush1.bf16.msra.mxu0 0
      %1072 = vmatprep.subr.bf16.mxu0 0
      %1073 = vmatpush1.bf16.msra.mxu0 0
      %1074 = vmatprep.subr.bf16.mxu0 0
      %1075 = vmatpush1.bf16.msra.mxu0 0
      %1076 = vmatprep.subr.bf16.mxu0 0
      %1077 = vmatpush1.bf16.msra.mxu0 0
      %1078 = vmatprep.subr.bf16.mxu0 0
      %1079 = vmatpush1.bf16.msra.mxu0 0
      %1080 = vmatprep.subr.bf16.mxu0 0
      %1081 = vmatpush1.bf16.msra.mxu0 0
      %1082 = vmatprep.subr.bf16.mxu0 0
      %1083 = vmatpush1.bf16.msra.mxu0 0
      %1084 = vmatprep.mubr.bf16.mxu0 0
      %1085 = vmatmul.mubr.bf16.gmra.mrb[0].mxu0 %v1047
      %v1086 = vpop.f32.mrb[0].mxu0
      %v1087 = vadd.f32 0.0, %v1086
      %v1088 = vpop.f32.mrb[0].mxu0
      %v1089 = vpop.f32.mrb[0].mxu0
      %v1090 = vadd.f32 0.0, %v1089
      %v1091 = vpop.f32.mrb[0].mxu0
      %1092 = vdwg.mxu0
      %vm1095 = vcmask 1045504
      %v1096 = vrot.slane %v1087, 2
      %v1097 = vrot.slane %v1090, 2
      %v1098 = vsel %vm1095, %v1096, %v1097
      %v1102 = vsel %vm1095, %v959, %v1096
      %v1103 = vpack.c.bf16 %v1102, %v956
      %v1104 = vpack.c.bf16 %v1097, %v1098
      %v1105 = vld [vmem:[%s617] sm:$0xf]
      %s1106 = scalar_lea.vmem %s608, 16
      %v1107 = vld [vmem:[%s1106] sm:$0xf]
      %v1108 = vld [vmem:[%s1106 + $0x4] sm:$0xf]
      %v1109 = vld [vmem:[%s1106 + $0x8] sm:$0xf]
      %v1110 = vld [vmem:[%s1106 + $0xc] sm:$0xf]
      %s1111 = scalar_lea.vmem %s612, 1
      %v1112 = vld [vmem:[%s1111] sm:$0x1]
      %v1114 = vlaneseq
      %v1115 = vshrl.u32 %v1114, 7
      %v1116 = vsub.s32 0, %v1115
      %v1117 = vrot.slane %v1112, %v1116
      %v1123 = vunpack.c.l.b16 %v1107
      %v1124 = vunpack.c.l.b16 %v1108
      %v1125 = vunpack.c.l.b16 %v1109
      %v1126 = vunpack.c.l.b16 %v1110
      %v1127 = vpack.c.b16 %v1124, %v1123
      %v1128 = vpack.c.b16 %v1126, %v1125
      %1131 = vmatprep.subr.bf16.mxu0 0
      %1132 = vmatpush1.bf16.msra.mxu0 %v1127
      %1133 = vmatprep.subr.bf16.mxu0 0
      %1134 = vmatpush1.bf16.msra.mxu0 %v1128
      %1135 = vmatprep.subr.bf16.mxu0 0
      %1136 = vmatpush1.bf16.msra.mxu0 0
      %1137 = vmatprep.subr.bf16.mxu0 0
      %1138 = vmatpush1.bf16.msra.mxu0 0
      %1139 = vmatprep.subr.bf16.mxu0 0
      %1140 = vmatpush1.bf16.msra.mxu0 0
      %1141 = vmatprep.subr.bf16.mxu0 0
      %1142 = vmatpush1.bf16.msra.mxu0 0
      %1143 = vmatprep.subr.bf16.mxu0 0
      %1144 = vmatpush1.bf16.msra.mxu0 0
      %1145 = vmatprep.subr.bf16.mxu0 0
      %1146 = vmatpush1.bf16.msra.mxu0 0
      %1147 = vmatprep.subr.bf16.mxu0 0
      %1148 = vmatpush1.bf16.msra.mxu0 0
      %1149 = vmatprep.subr.bf16.mxu0 0
      %1150 = vmatpush1.bf16.msra.mxu0 0
      %1151 = vmatprep.subr.bf16.mxu0 0
      %1152 = vmatpush1.bf16.msra.mxu0 0
      %1153 = vmatprep.subr.bf16.mxu0 0
      %1154 = vmatpush1.bf16.msra.mxu0 0
      %1155 = vmatprep.subr.bf16.mxu0 0
      %1156 = vmatpush1.bf16.msra.mxu0 0
      %1157 = vmatprep.subr.bf16.mxu0 0
      %1158 = vmatpush1.bf16.msra.mxu0 0
      %1159 = vmatprep.subr.bf16.mxu0 0
      %1160 = vmatpush1.bf16.msra.mxu0 0
      %1161 = vmatprep.subr.bf16.mxu0 0
      %1162 = vmatpush1.bf16.msra.mxu0 0
      %1163 = vmatprep.mubr.bf16.mxu0 0
      %1164 = vmatmul.mubr.bf16.gmra.mrb[0].mxu0 %v774
      %v1165 = vpop.f32.mrb[0].mxu0
      %v1166 = vadd.f32 %v1117, %v1165
      %v1167 = vpop.f32.mrb[0].mxu0
      %v1168 = vpop.f32.mrb[0].mxu0
      %v1169 = vadd.f32 %v1117, %v1168
      %v1170 = vpop.f32.mrb[0].mxu0
      %1171 = vmatprep.mubr.bf16.mxu0 0
      %1172 = vmatmul.mubr.bf16.gmra.mrb[0].mxu0 %v777
      %v1173 = vpop.f32.mrb[0].mxu0
      %v1174 = vadd.f32 %v1117, %v1173
      %v1175 = vpop.f32.mrb[0].mxu0
      %v1176 = vpop.f32.mrb[0].mxu0
      %v1177 = vadd.f32 %v1117, %v1176
      %v1178 = vpop.f32.mrb[0].mxu0
      %1179 = vdwg.mxu0
      %v1180 = vmul.f32 %v1166, 0.35355338
      %v1181 = vmul.f32 %v1169, 0.35355338
      %v1182 = vmul.f32 %v1174, 0.35355338
      %v1183 = vmul.f32 %v1177, 0.35355338
      %v1184 = vpack.c.bf16 %v1181, %v1180
      %v1185 = vpack.c.bf16 %v1183, %v1182
      %v1186 = vpack.c.bf16 %v1169, %v1166
      %v1187 = vpack.c.bf16 %v1177, %v1174
      %1189 = vrot.lane.b32.xlu0 %v1186, 120
      %v1190 = vpop.permute.xlu0 %1189
      %v1192 = vsel %vm839, %v1184, 0
      %v1195 = vsel %vm839, %v1190, 0
      %1197 = vmatprep.subr.bf16.mxu0 0
      %1198 = vmatpush1.bf16.xpose.msra.mxu0 %v1195
      %1199 = vmatprep.subr.bf16.mxu0 0
      %1200 = vmatpush1.bf16.xpose.msra.mxu0 0
      %1201 = vmatprep.subr.bf16.mxu0 0
      %1202 = vmatpush1.bf16.xpose.msra.mxu0 0
      %1203 = vmatprep.subr.bf16.mxu0 0
      %1204 = vmatpush1.bf16.xpose.msra.mxu0 0
      %1205 = vmatprep.subr.bf16.mxu0 0
      %1206 = vmatpush1.bf16.xpose.msra.mxu0 0
      %1207 = vmatprep.subr.bf16.mxu0 0
      %1208 = vmatpush1.bf16.xpose.msra.mxu0 0
      %1209 = vmatprep.subr.bf16.mxu0 0
      %1210 = vmatpush1.bf16.xpose.msra.mxu0 0
      %1211 = vmatprep.subr.bf16.mxu0 0
      %1212 = vmatpush1.bf16.xpose.msra.mxu0 0
      %1213 = vmatprep.subr.bf16.mxu0 0
      %1214 = vmatpush1.bf16.xpose.msra.mxu0 0
      %1215 = vmatprep.subr.bf16.mxu0 0
      %1216 = vmatpush1.bf16.xpose.msra.mxu0 0
      %1217 = vmatprep.subr.bf16.mxu0 0
      %1218 = vmatpush1.bf16.xpose.msra.mxu0 0
      %1219 = vmatprep.subr.bf16.mxu0 0
      %1220 = vmatpush1.bf16.xpose.msra.mxu0 0
      %1221 = vmatprep.subr.bf16.mxu0 0
      %1222 = vmatpush1.bf16.xpose.msra.mxu0 0
      %1223 = vmatprep.subr.bf16.mxu0 0
      %1224 = vmatpush1.bf16.xpose.msra.mxu0 0
      %1225 = vmatprep.subr.bf16.mxu0 0
      %1226 = vmatpush1.bf16.xpose.msra.mxu0 0
      %1227 = vmatprep.subr.bf16.mxu0 0
      %1228 = vmatpush1.bf16.xpose.msra.mxu0 0
      %1229 = vmatprep.mubr.bf16.mxu0 0
      %1230 = vmatmul.mubr.bf16.gmra.mrb[0].mxu0 %v1192
      %v1231 = vpop.f32.mrb[0].mxu0
      %v1232 = vadd.f32 0.0, %v1231
      %v1233 = vpop.f32.mrb[0].mxu0
      %v1234 = vpop.f32.mrb[0].mxu0
      %v1235 = vadd.f32 0.0, %v1234
      %v1236 = vpop.f32.mrb[0].mxu0
      %1237 = vdwg.mxu0
      %v1238 = vsel %vm887, %v1232, -inf
      %1239 = vmax.xlane.f32.xlu0 %v1238
      %v1240 = vpop.xlane.xlu0 %1239
      %v1241 = vsel %vm891, %v1235, -inf
      %1242 = vmax.xlane.f32.xlu0 %v1241
      %v1243 = vpop.xlane.xlu0 %1242
      %v1244 = vsub.f32 %v1232, %v1240
      %v1245 = vsub.f32 %v1235, %v1243
      %v1246 = vmul.f32 %v1244, 1.442695
      %v1247 = vpow.pop %v1246
      %v1248 = vmul.f32 %v1245, 1.442695
      %v1249 = vpow.pop %v1248
      %v1250 = vsel %vm887, %v1247, 0.0
      %1251 = vadd.xlane.f32.xlu0 %v1250
      %v1252 = vpop.xlane.xlu0 %1251
      %v1253 = vsel %vm891, %v1249, 0.0
      %1254 = vadd.xlane.f32.xlu0 %v1253
      %v1255 = vpop.xlane.xlu0 %1254
      %v1256 = vrcp.pop %v1252
      %v1257 = vrcp.pop %v1255
      %v1258 = vmul.f32 %v1247, %v1256
      %v1259 = vmul.f32 %v1249, %v1257
      %v1260 = vpack.c.bf16 %v1259, %v1258
      %1261 = vrot.lane.b32.xlu0 %v1186, 112
      %v1262 = vpop.permute.xlu0 %1261
      %v1264 = vsel %vm887, %v1260, 0
      %v1267 = vsel %vm917, %v1262, 0
      %1269 = vmatprep.subr.bf16.mxu0 0
      %1270 = vmatpush1.bf16.msra.mxu0 %v1267
      %1271 = vmatprep.subr.bf16.mxu0 0
      %1272 = vmatpush1.bf16.msra.mxu0 0
      %1273 = vmatprep.subr.bf16.mxu0 0
      %1274 = vmatpush1.bf16.msra.mxu0 0
      %1275 = vmatprep.subr.bf16.mxu0 0
      %1276 = vmatpush1.bf16.msra.mxu0 0
      %1277 = vmatprep.subr.bf16.mxu0 0
      %1278 = vmatpush1.bf16.msra.mxu0 0
      %1279 = vmatprep.subr.bf16.mxu0 0
      %1280 = vmatpush1.bf16.msra.mxu0 0
      %1281 = vmatprep.subr.bf16.mxu0 0
      %1282 = vmatpush1.bf16.msra.mxu0 0
      %1283 = vmatprep.subr.bf16.mxu0 0
      %1284 = vmatpush1.bf16.msra.mxu0 0
      %1285 = vmatprep.subr.bf16.mxu0 0
      %1286 = vmatpush1.bf16.msra.mxu0 0
      %1287 = vmatprep.subr.bf16.mxu0 0
      %1288 = vmatpush1.bf16.msra.mxu0 0
      %1289 = vmatprep.subr.bf16.mxu0 0
      %1290 = vmatpush1.bf16.msra.mxu0 0
      %1291 = vmatprep.subr.bf16.mxu0 0
      %1292 = vmatpush1.bf16.msra.mxu0 0
      %1293 = vmatprep.subr.bf16.mxu0 0
      %1294 = vmatpush1.bf16.msra.mxu0 0
      %1295 = vmatprep.subr.bf16.mxu0 0
      %1296 = vmatpush1.bf16.msra.mxu0 0
      %1297 = vmatprep.subr.bf16.mxu0 0
      %1298 = vmatpush1.bf16.msra.mxu0 0
      %1299 = vmatprep.subr.bf16.mxu0 0
      %1300 = vmatpush1.bf16.msra.mxu0 0
      %1301 = vmatprep.mubr.bf16.mxu0 0
      %1302 = vmatmul.mubr.bf16.gmra.mrb[0].mxu0 %v1264
      %v1303 = vpop.f32.mrb[0].mxu0
      %v1304 = vadd.f32 0.0, %v1303
      %v1305 = vpop.f32.mrb[0].mxu0
      %v1306 = vpop.f32.mrb[0].mxu0
      %v1307 = vadd.f32 0.0, %v1306
      %v1308 = vpop.f32.mrb[0].mxu0
      %1309 = vdwg.mxu0
      %v1312 = vrot.slane %v1184, 7
      %v1313 = vrot.slane %v1185, 7
      %v1314 = vsel %vm964, %v1312, %v1313
      %v1316 = vrot.slane %v1186, 7
      %v1317 = vrot.slane %v1187, 7
      %v1318 = vsel %vm964, %v1316, %v1317
      %1319 = vrot.lane.b32.xlu0 %v1318, 120
      %v1320 = vpop.permute.xlu0 %1319
      %v1322 = vsel %vm839, %v1314, 0
      %v1325 = vsel %vm839, %v1320, 0
      %1327 = vmatprep.subr.bf16.mxu0 0
      %1328 = vmatpush1.bf16.xpose.msra.mxu0 %v1325
      %1329 = vmatprep.subr.bf16.mxu0 0
      %1330 = vmatpush1.bf16.xpose.msra.mxu0 0
      %1331 = vmatprep.subr.bf16.mxu0 0
      %1332 = vmatpush1.bf16.xpose.msra.mxu0 0
      %1333 = vmatprep.subr.bf16.mxu0 0
      %1334 = vmatpush1.bf16.xpose.msra.mxu0 0
      %1335 = vmatprep.subr.bf16.mxu0 0
      %1336 = vmatpush1.bf16.xpose.msra.mxu0 0
      %1337 = vmatprep.subr.bf16.mxu0 0
      %1338 = vmatpush1.bf16.xpose.msra.mxu0 0
      %1339 = vmatprep.subr.bf16.mxu0 0
      %1340 = vmatpush1.bf16.xpose.msra.mxu0 0
      %1341 = vmatprep.subr.bf16.mxu0 0
      %1342 = vmatpush1.bf16.xpose.msra.mxu0 0
      %1343 = vmatprep.subr.bf16.mxu0 0
      %1344 = vmatpush1.bf16.xpose.msra.mxu0 0
      %1345 = vmatprep.subr.bf16.mxu0 0
      %1346 = vmatpush1.bf16.xpose.msra.mxu0 0
      %1347 = vmatprep.subr.bf16.mxu0 0
      %1348 = vmatpush1.bf16.xpose.msra.mxu0 0
      %1349 = vmatprep.subr.bf16.mxu0 0
      %1350 = vmatpush1.bf16.xpose.msra.mxu0 0
      %1351 = vmatprep.subr.bf16.mxu0 0
      %1352 = vmatpush1.bf16.xpose.msra.mxu0 0
      %1353 = vmatprep.subr.bf16.mxu0 0
      %1354 = vmatpush1.bf16.xpose.msra.mxu0 0
      %1355 = vmatprep.subr.bf16.mxu0 0
      %1356 = vmatpush1.bf16.xpose.msra.mxu0 0
      %1357 = vmatprep.subr.bf16.mxu0 0
      %1358 = vmatpush1.bf16.xpose.msra.mxu0 0
      %1359 = vmatprep.mubr.bf16.mxu0 0
      %1360 = vmatmul.mubr.bf16.gmra.mrb[0].mxu0 %v1322
      %v1361 = vpop.f32.mrb[0].mxu0
      %v1362 = vadd.f32 0.0, %v1361
      %v1363 = vpop.f32.mrb[0].mxu0
      %v1364 = vpop.f32.mrb[0].mxu0
      %v1365 = vadd.f32 0.0, %v1364
      %v1366 = vpop.f32.mrb[0].mxu0
      %1367 = vdwg.mxu0
      %v1368 = vsel %vm887, %v1362, -inf
      %1369 = vmax.xlane.f32.xlu0 %v1368
      %v1370 = vpop.xlane.xlu0 %1369
      %v1371 = vsel %vm891, %v1365, -inf
      %1372 = vmax.xlane.f32.xlu0 %v1371
      %v1373 = vpop.xlane.xlu0 %1372
      %v1374 = vsub.f32 %v1362, %v1370
      %v1375 = vsub.f32 %v1365, %v1373
      %v1376 = vmul.f32 %v1374, 1.442695
      %v1377 = vpow.pop %v1376
      %v1378 = vmul.f32 %v1375, 1.442695
      %v1379 = vpow.pop %v1378
      %v1380 = vsel %vm887, %v1377, 0.0
      %1381 = vadd.xlane.f32.xlu0 %v1380
      %v1382 = vpop.xlane.xlu0 %1381
      %v1383 = vsel %vm891, %v1379, 0.0
      %1384 = vadd.xlane.f32.xlu0 %v1383
      %v1385 = vpop.xlane.xlu0 %1384
      %v1386 = vrcp.pop %v1382
      %v1387 = vrcp.pop %v1385
      %v1388 = vmul.f32 %v1377, %v1386
      %v1389 = vmul.f32 %v1379, %v1387
      %v1390 = vpack.c.bf16 %v1389, %v1388
      %1391 = vrot.lane.b32.xlu0 %v1318, 112
      %v1392 = vpop.permute.xlu0 %1391
      %v1394 = vsel %vm887, %v1390, 0
      %v1397 = vsel %vm917, %v1392, 0
      %1399 = vmatprep.subr.bf16.mxu0 0
      %1400 = vmatpush1.bf16.msra.mxu0 %v1397
      %1401 = vmatprep.subr.bf16.mxu0 0
      %1402 = vmatpush1.bf16.msra.mxu0 0
      %1403 = vmatprep.subr.bf16.mxu0 0
      %1404 = vmatpush1.bf16.msra.mxu0 0
      %1405 = vmatprep.subr.bf16.mxu0 0
      %1406 = vmatpush1.bf16.msra.mxu0 0
      %1407 = vmatprep.subr.bf16.mxu0 0
      %1408 = vmatpush1.bf16.msra.mxu0 0
      %1409 = vmatprep.subr.bf16.mxu0 0
      %1410 = vmatpush1.bf16.msra.mxu0 0
      %1411 = vmatprep.subr.bf16.mxu0 0
      %1412 = vmatpush1.bf16.msra.mxu0 0
      %1413 = vmatprep.subr.bf16.mxu0 0
      %1414 = vmatpush1.bf16.msra.mxu0 0
      %1415 = vmatprep.subr.bf16.mxu0 0
      %1416 = vmatpush1.bf16.msra.mxu0 0
      %1417 = vmatprep.subr.bf16.mxu0 0
      %1418 = vmatpush1.bf16.msra.mxu0 0
      %1419 = vmatprep.subr.bf16.mxu0 0
      %1420 = vmatpush1.bf16.msra.mxu0 0
      %1421 = vmatprep.subr.bf16.mxu0 0
      %1422 = vmatpush1.bf16.msra.mxu0 0
      %1423 = vmatprep.subr.bf16.mxu0 0
      %1424 = vmatpush1.bf16.msra.mxu0 0
      %1425 = vmatprep.subr.bf16.mxu0 0
      %1426 = vmatpush1.bf16.msra.mxu0 0
      %1427 = vmatprep.subr.bf16.mxu0 0
      %1428 = vmatpush1.bf16.msra.mxu0 0
      %1429 = vmatprep.subr.bf16.mxu0 0
      %1430 = vmatpush1.bf16.msra.mxu0 0
      %1431 = vmatprep.mubr.bf16.mxu0 0
      %1432 = vmatmul.mubr.bf16.gmra.mrb[0].mxu0 %v1394
      %v1433 = vpop.f32.mrb[0].mxu0
      %v1434 = vadd.f32 0.0, %v1433
      %v1435 = vpop.f32.mrb[0].mxu0
      %v1436 = vpop.f32.mrb[0].mxu0
      %v1437 = vadd.f32 0.0, %v1436
      %v1438 = vpop.f32.mrb[0].mxu0
      %1439 = vdwg.mxu0
      %v1442 = vrot.slane %v1434, 2
      %v1443 = vrot.slane %v1437, 2
      %v1444 = vsel %vm1095, %v1442, %v1443
      %v1448 = vsel %vm1095, %v1307, %v1442
      %v1449 = vpack.c.bf16 %v1448, %v1304
      %v1450 = vpack.c.bf16 %v1443, %v1444
      %s1451 = scalar_lea.vmem %s617, 4
      %v1452 = vld [vmem:[%s1451] sm:$0xf]
      %v1454 = vsel %vm839, %v1449, 0
      %v1457 = vsel %vm839, %v1450, 0
      %vm1459 = vcmask 1043456
      %v1461 = vsel %vm1459, %v1452, 0
      %1463 = vmatprep.subr.bf16.mxu0 0
      %1464 = vmatpush1.bf16.msra.mxu0 %v1461
      %1465 = vmatprep.subr.bf16.mxu0 0
      %1466 = vmatpush1.bf16.msra.mxu0 0
      %1467 = vmatprep.subr.bf16.mxu0 0
      %1468 = vmatpush1.bf16.msra.mxu0 0
      %1469 = vmatprep.subr.bf16.mxu0 0
      %1470 = vmatpush1.bf16.msra.mxu0 0
      %1471 = vmatprep.subr.bf16.mxu0 0
      %1472 = vmatpush1.bf16.msra.mxu0 0
      %1473 = vmatprep.subr.bf16.mxu0 0
      %1474 = vmatpush1.bf16.msra.mxu0 0
      %1475 = vmatprep.subr.bf16.mxu0 0
      %1476 = vmatpush1.bf16.msra.mxu0 0
      %1477 = vmatprep.subr.bf16.mxu0 0
      %1478 = vmatpush1.bf16.msra.mxu0 0
      %1479 = vmatprep.subr.bf16.mxu0 0
      %1480 = vmatpush1.bf16.msra.mxu0 0
      %1481 = vmatprep.subr.bf16.mxu0 0
      %1482 = vmatpush1.bf16.msra.mxu0 0
      %1483 = vmatprep.subr.bf16.mxu0 0
      %1484 = vmatpush1.bf16.msra.mxu0 0
      %1485 = vmatprep.subr.bf16.mxu0 0
      %1486 = vmatpush1.bf16.msra.mxu0 0
      %1487 = vmatprep.subr.bf16.mxu0 0
      %1488 = vmatpush1.bf16.msra.mxu0 0
      %1489 = vmatprep.subr.bf16.mxu0 0
      %1490 = vmatpush1.bf16.msra.mxu0 0
      %1491 = vmatprep.subr.bf16.mxu0 0
      %1492 = vmatpush1.bf16.msra.mxu0 0
      %1493 = vmatprep.subr.bf16.mxu0 0
      %1494 = vmatpush1.bf16.msra.mxu0 0
      %1495 = vmatprep.mubr.bf16.mxu0 0
      %1496 = vmatmul.mubr.bf16.gmra.mrb[0].mxu0 %v1454
      %v1497 = vpop.f32.mrb[0].mxu0
      %v1498 = vadd.f32 0.0, %v1497
      %v1499 = vpop.f32.mrb[0].mxu0
      %v1500 = vpop.f32.mrb[0].mxu0
      %v1501 = vadd.f32 0.0, %v1500
      %v1502 = vpop.f32.mrb[0].mxu0
      %1503 = vmatprep.mubr.bf16.mxu0 0
      %1504 = vmatmul.mubr.bf16.gmra.mrb[0].mxu0 %v1457
      %v1505 = vpop.f32.mrb[0].mxu0
      %v1506 = vadd.f32 0.0, %v1505
      %v1507 = vpop.f32.mrb[0].mxu0
      %v1508 = vpop.f32.mrb[0].mxu0
      %v1509 = vadd.f32 0.0, %v1508
      %v1510 = vpop.f32.mrb[0].mxu0
      %1511 = vdwg.mxu0
      %v1513 = vsel %vm839, %v1103, 0
      %v1516 = vsel %vm839, %v1104, 0
      %v1519 = vsel %vm1459, %v1105, 0
      %1521 = vmatprep.subr.bf16.mxu0 0
      %1522 = vmatpush1.bf16.msra.mxu0 %v1519
      %1523 = vmatprep.subr.bf16.mxu0 0
      %1524 = vmatpush1.bf16.msra.mxu0 0
      %1525 = vmatprep.subr.bf16.mxu0 0
      %1526 = vmatpush1.bf16.msra.mxu0 0
      %1527 = vmatprep.subr.bf16.mxu0 0
      %1528 = vmatpush1.bf16.msra.mxu0 0
      %1529 = vmatprep.subr.bf16.mxu0 0
      %1530 = vmatpush1.bf16.msra.mxu0 0
      %1531 = vmatprep.subr.bf16.mxu0 0
      %1532 = vmatpush1.bf16.msra.mxu0 0
      %1533 = vmatprep.subr.bf16.mxu0 0
      %1534 = vmatpush1.bf16.msra.mxu0 0
      %1535 = vmatprep.subr.bf16.mxu0 0
      %1536 = vmatpush1.bf16.msra.mxu0 0
      %1537 = vmatprep.subr.bf16.mxu0 0
      %1538 = vmatpush1.bf16.msra.mxu0 0
      %1539 = vmatprep.subr.bf16.mxu0 0
      %1540 = vmatpush1.bf16.msra.mxu0 0
      %1541 = vmatprep.subr.bf16.mxu0 0
      %1542 = vmatpush1.bf16.msra.mxu0 0
      %1543 = vmatprep.subr.bf16.mxu0 0
      %1544 = vmatpush1.bf16.msra.mxu0 0
      %1545 = vmatprep.subr.bf16.mxu0 0
      %1546 = vmatpush1.bf16.msra.mxu0 0
      %1547 = vmatprep.subr.bf16.mxu0 0
      %1548 = vmatpush1.bf16.msra.mxu0 0
      %1549 = vmatprep.subr.bf16.mxu0 0
      %1550 = vmatpush1.bf16.msra.mxu0 0
      %1551 = vmatprep.subr.bf16.mxu0 0
      %1552 = vmatpush1.bf16.msra.mxu0 0
      %1553 = vmatprep.mubr.bf16.mxu0 0
      %1554 = vmatmul.mubr.bf16.gmra.mrb[0].mxu0 %v1513
      %v1555 = vpop.f32.mrb[0].mxu0
      %v1556 = vadd.f32 %v1498, %v1555
      %v1557 = vpop.f32.mrb[0].mxu0
      %v1558 = vpop.f32.mrb[0].mxu0
      %v1559 = vadd.f32 %v1501, %v1558
      %v1560 = vpop.f32.mrb[0].mxu0
      %1561 = vmatprep.mubr.bf16.mxu0 0
      %1562 = vmatmul.mubr.bf16.gmra.mrb[0].mxu0 %v1516
      %v1563 = vpop.f32.mrb[0].mxu0
      %v1564 = vadd.f32 %v1506, %v1563
      %v1565 = vpop.f32.mrb[0].mxu0
      %v1566 = vpop.f32.mrb[0].mxu0
      %v1567 = vadd.f32 %v1509, %v1566
      %v1568 = vpop.f32.mrb[0].mxu0
      %1569 = vdwg.mxu0
      %s1570 = scalar_lea.vmem %s608, 32
      %v1571 = vld [vmem:[%s1570] sm:$0xf]
      %v1572 = vld [vmem:[%s1570 + $0x4] sm:$0xf]
      %v1573 = vld [vmem:[%s1570 + $0x8] sm:$0xf]
      %v1574 = vld [vmem:[%s1570 + $0xc] sm:$0xf]
      %s1575 = scalar_lea.vmem %s612, 2
      %v1576 = vld [vmem:[%s1575] sm:$0x1]
      %v1578 = vlaneseq
      %v1579 = vshrl.u32 %v1578, 7
      %v1580 = vsub.s32 0, %v1579
      %v1581 = vrot.slane %v1576, %v1580
      %v1587 = vunpack.c.l.b16 %v1571
      %v1588 = vunpack.c.l.b16 %v1572
      %v1589 = vunpack.c.l.b16 %v1573
      %v1590 = vunpack.c.l.b16 %v1574
      %v1591 = vpack.c.b16 %v1588, %v1587
      %v1592 = vpack.c.b16 %v1590, %v1589
      %1595 = vmatprep.subr.bf16.mxu0 0
      %1596 = vmatpush1.bf16.msra.mxu0 %v1591
      %1597 = vmatprep.subr.bf16.mxu0 0
      %1598 = vmatpush1.bf16.msra.mxu0 %v1592
      %1599 = vmatprep.subr.bf16.mxu0 0
      %1600 = vmatpush1.bf16.msra.mxu0 0
      %1601 = vmatprep.subr.bf16.mxu0 0
      %1602 = vmatpush1.bf16.msra.mxu0 0
      %1603 = vmatprep.subr.bf16.mxu0 0
      %1604 = vmatpush1.bf16.msra.mxu0 0
      %1605 = vmatprep.subr.bf16.mxu0 0
      %1606 = vmatpush1.bf16.msra.mxu0 0
      %1607 = vmatprep.subr.bf16.mxu0 0
      %1608 = vmatpush1.bf16.msra.mxu0 0
      %1609 = vmatprep.subr.bf16.mxu0 0
      %1610 = vmatpush1.bf16.msra.mxu0 0
      %1611 = vmatprep.subr.bf16.mxu0 0
      %1612 = vmatpush1.bf16.msra.mxu0 0
      %1613 = vmatprep.subr.bf16.mxu0 0
      %1614 = vmatpush1.bf16.msra.mxu0 0
      %1615 = vmatprep.subr.bf16.mxu0 0
      %1616 = vmatpush1.bf16.msra.mxu0 0
      %1617 = vmatprep.subr.bf16.mxu0 0
      %1618 = vmatpush1.bf16.msra.mxu0 0
      %1619 = vmatprep.subr.bf16.mxu0 0
      %1620 = vmatpush1.bf16.msra.mxu0 0
      %1621 = vmatprep.subr.bf16.mxu0 0
      %1622 = vmatpush1.bf16.msra.mxu0 0
      %1623 = vmatprep.subr.bf16.mxu0 0
      %1624 = vmatpush1.bf16.msra.mxu0 0
      %1625 = vmatprep.subr.bf16.mxu0 0
      %1626 = vmatpush1.bf16.msra.mxu0 0
      %1627 = vmatprep.mubr.bf16.mxu0 0
      %1628 = vmatmul.mubr.bf16.gmra.mrb[0].mxu0 %v774
      %v1629 = vpop.f32.mrb[0].mxu0
      %v1630 = vadd.f32 %v1581, %v1629
      %v1631 = vpop.f32.mrb[0].mxu0
      %v1632 = vpop.f32.mrb[0].mxu0
      %v1633 = vadd.f32 %v1581, %v1632
      %v1634 = vpop.f32.mrb[0].mxu0
      %1635 = vmatprep.mubr.bf16.mxu0 0
      %1636 = vmatmul.mubr.bf16.gmra.mrb[0].mxu0 %v777
      %v1637 = vpop.f32.mrb[0].mxu0
      %v1638 = vadd.f32 %v1581, %v1637
      %v1639 = vpop.f32.mrb[0].mxu0
      %v1640 = vpop.f32.mrb[0].mxu0
      %v1641 = vadd.f32 %v1581, %v1640
      %v1642 = vpop.f32.mrb[0].mxu0
      %1643 = vdwg.mxu0
      %v1644 = vmul.f32 %v1630, 0.35355338
      %v1645 = vmul.f32 %v1633, 0.35355338
      %v1646 = vmul.f32 %v1638, 0.35355338
      %v1647 = vmul.f32 %v1641, 0.35355338
      %v1648 = vpack.c.bf16 %v1645, %v1644
      %v1649 = vpack.c.bf16 %v1647, %v1646
      %v1650 = vpack.c.bf16 %v1633, %v1630
      %v1651 = vpack.c.bf16 %v1641, %v1638
      %1653 = vrot.lane.b32.xlu0 %v1650, 120
      %v1654 = vpop.permute.xlu0 %1653
      %v1656 = vsel %vm839, %v1648, 0
      %v1659 = vsel %vm839, %v1654, 0
      %1661 = vmatprep.subr.bf16.mxu0 0
      %1662 = vmatpush1.bf16.xpose.msra.mxu0 %v1659
      %1663 = vmatprep.subr.bf16.mxu0 0
      %1664 = vmatpush1.bf16.xpose.msra.mxu0 0
      %1665 = vmatprep.subr.bf16.mxu0 0
      %1666 = vmatpush1.bf16.xpose.msra.mxu0 0
      %1667 = vmatprep.subr.bf16.mxu0 0
      %1668 = vmatpush1.bf16.xpose.msra.mxu0 0
      %1669 = vmatprep.subr.bf16.mxu0 0
      %1670 = vmatpush1.bf16.xpose.msra.mxu0 0
      %1671 = vmatprep.subr.bf16.mxu0 0
      %1672 = vmatpush1.bf16.xpose.msra.mxu0 0
      %1673 = vmatprep.subr.bf16.mxu0 0
      %1674 = vmatpush1.bf16.xpose.msra.mxu0 0
      %1675 = vmatprep.subr.bf16.mxu0 0
      %1676 = vmatpush1.bf16.xpose.msra.mxu0 0
      %1677 = vmatprep.subr.bf16.mxu0 0
      %1678 = vmatpush1.bf16.xpose.msra.mxu0 0
      %1679 = vmatprep.subr.bf16.mxu0 0
      %1680 = vmatpush1.bf16.xpose.msra.mxu0 0
      %1681 = vmatprep.subr.bf16.mxu0 0
      %1682 = vmatpush1.bf16.xpose.msra.mxu0 0
      %1683 = vmatprep.subr.bf16.mxu0 0
      %1684 = vmatpush1.bf16.xpose.msra.mxu0 0
      %1685 = vmatprep.subr.bf16.mxu0 0
      %1686 = vmatpush1.bf16.xpose.msra.mxu0 0
      %1687 = vmatprep.subr.bf16.mxu0 0
      %1688 = vmatpush1.bf16.xpose.msra.mxu0 0
      %1689 = vmatprep.subr.bf16.mxu0 0
      %1690 = vmatpush1.bf16.xpose.msra.mxu0 0
      %1691 = vmatprep.subr.bf16.mxu0 0
      %1692 = vmatpush1.bf16.xpose.msra.mxu0 0
      %1693 = vmatprep.mubr.bf16.mxu0 0
      %1694 = vmatmul.mubr.bf16.gmra.mrb[0].mxu0 %v1656
      %v1695 = vpop.f32.mrb[0].mxu0
      %v1696 = vadd.f32 0.0, %v1695
      %v1697 = vpop.f32.mrb[0].mxu0
      %v1698 = vpop.f32.mrb[0].mxu0
      %v1699 = vadd.f32 0.0, %v1698
      %v1700 = vpop.f32.mrb[0].mxu0
      %1701 = vdwg.mxu0
      %v1702 = vsel %vm887, %v1696, -inf
      %1703 = vmax.xlane.f32.xlu0 %v1702
      %v1704 = vpop.xlane.xlu0 %1703
      %v1705 = vsel %vm891, %v1699, -inf
      %1706 = vmax.xlane.f32.xlu0 %v1705
      %v1707 = vpop.xlane.xlu0 %1706
      %v1708 = vsub.f32 %v1696, %v1704
      %v1709 = vsub.f32 %v1699, %v1707
      %v1710 = vmul.f32 %v1708, 1.442695
      %v1711 = vpow.pop %v1710
      %v1712 = vmul.f32 %v1709, 1.442695
      %v1713 = vpow.pop %v1712
      %v1714 = vsel %vm887, %v1711, 0.0
      %1715 = vadd.xlane.f32.xlu0 %v1714
      %v1716 = vpop.xlane.xlu0 %1715
      %v1717 = vsel %vm891, %v1713, 0.0
      %1718 = vadd.xlane.f32.xlu0 %v1717
      %v1719 = vpop.xlane.xlu0 %1718
      %v1720 = vrcp.pop %v1716
      %v1721 = vrcp.pop %v1719
      %v1722 = vmul.f32 %v1711, %v1720
      %v1723 = vmul.f32 %v1713, %v1721
      %v1724 = vpack.c.bf16 %v1723, %v1722
      %1725 = vrot.lane.b32.xlu0 %v1650, 112
      %v1726 = vpop.permute.xlu0 %1725
      %v1728 = vsel %vm887, %v1724, 0
      %v1731 = vsel %vm917, %v1726, 0
      %1733 = vmatprep.subr.bf16.mxu0 0
      %1734 = vmatpush1.bf16.msra.mxu0 %v1731
      %1735 = vmatprep.subr.bf16.mxu0 0
      %1736 = vmatpush1.bf16.msra.mxu0 0
      %1737 = vmatprep.subr.bf16.mxu0 0
      %1738 = vmatpush1.bf16.msra.mxu0 0
      %1739 = vmatprep.subr.bf16.mxu0 0
      %1740 = vmatpush1.bf16.msra.mxu0 0
      %1741 = vmatprep.subr.bf16.mxu0 0
      %1742 = vmatpush1.bf16.msra.mxu0 0
      %1743 = vmatprep.subr.bf16.mxu0 0
      %1744 = vmatpush1.bf16.msra.mxu0 0
      %1745 = vmatprep.subr.bf16.mxu0 0
      %1746 = vmatpush1.bf16.msra.mxu0 0
      %1747 = vmatprep.subr.bf16.mxu0 0
      %1748 = vmatpush1.bf16.msra.mxu0 0
      %1749 = vmatprep.subr.bf16.mxu0 0
      %1750 = vmatpush1.bf16.msra.mxu0 0
      %1751 = vmatprep.subr.bf16.mxu0 0
      %1752 = vmatpush1.bf16.msra.mxu0 0
      %1753 = vmatprep.subr.bf16.mxu0 0
      %1754 = vmatpush1.bf16.msra.mxu0 0
      %1755 = vmatprep.subr.bf16.mxu0 0
      %1756 = vmatpush1.bf16.msra.mxu0 0
      %1757 = vmatprep.subr.bf16.mxu0 0
      %1758 = vmatpush1.bf16.msra.mxu0 0
      %1759 = vmatprep.subr.bf16.mxu0 0
      %1760 = vmatpush1.bf16.msra.mxu0 0
      %1761 = vmatprep.subr.bf16.mxu0 0
      %1762 = vmatpush1.bf16.msra.mxu0 0
      %1763 = vmatprep.subr.bf16.mxu0 0
      %1764 = vmatpush1.bf16.msra.mxu0 0
      %1765 = vmatprep.mubr.bf16.mxu0 0
      %1766 = vmatmul.mubr.bf16.gmra.mrb[0].mxu0 %v1728
      %v1767 = vpop.f32.mrb[0].mxu0
      %v1768 = vadd.f32 0.0, %v1767
      %v1769 = vpop.f32.mrb[0].mxu0
      %v1770 = vpop.f32.mrb[0].mxu0
      %v1771 = vadd.f32 0.0, %v1770
      %v1772 = vpop.f32.mrb[0].mxu0
      %1773 = vdwg.mxu0
      %v1776 = vrot.slane %v1648, 7
      %v1777 = vrot.slane %v1649, 7
      %v1778 = vsel %vm964, %v1776, %v1777
      %v1780 = vrot.slane %v1650, 7
      %v1781 = vrot.slane %v1651, 7
      %v1782 = vsel %vm964, %v1780, %v1781
      %1783 = vrot.lane.b32.xlu0 %v1782, 120
      %v1784 = vpop.permute.xlu0 %1783
      %v1786 = vsel %vm839, %v1778, 0
      %v1789 = vsel %vm839, %v1784, 0
      %1791 = vmatprep.subr.bf16.mxu0 0
      %1792 = vmatpush1.bf16.xpose.msra.mxu0 %v1789
      %1793 = vmatprep.subr.bf16.mxu0 0
      %1794 = vmatpush1.bf16.xpose.msra.mxu0 0
      %1795 = vmatprep.subr.bf16.mxu0 0
      %1796 = vmatpush1.bf16.xpose.msra.mxu0 0
      %1797 = vmatprep.subr.bf16.mxu0 0
      %1798 = vmatpush1.bf16.xpose.msra.mxu0 0
      %1799 = vmatprep.subr.bf16.mxu0 0
      %1800 = vmatpush1.bf16.xpose.msra.mxu0 0
      %1801 = vmatprep.subr.bf16.mxu0 0
      %1802 = vmatpush1.bf16.xpose.msra.mxu0 0
      %1803 = vmatprep.subr.bf16.mxu0 0
      %1804 = vmatpush1.bf16.xpose.msra.mxu0 0
      %1805 = vmatprep.subr.bf16.mxu0 0
      %1806 = vmatpush1.bf16.xpose.msra.mxu0 0
      %1807 = vmatprep.subr.bf16.mxu0 0
      %1808 = vmatpush1.bf16.xpose.msra.mxu0 0
      %1809 = vmatprep.subr.bf16.mxu0 0
      %1810 = vmatpush1.bf16.xpose.msra.mxu0 0
      %1811 = vmatprep.subr.bf16.mxu0 0
      %1812 = vmatpush1.bf16.xpose.msra.mxu0 0
      %1813 = vmatprep.subr.bf16.mxu0 0
      %1814 = vmatpush1.bf16.xpose.msra.mxu0 0
      %1815 = vmatprep.subr.bf16.mxu0 0
      %1816 = vmatpush1.bf16.xpose.msra.mxu0 0
      %1817 = vmatprep.subr.bf16.mxu0 0
      %1818 = vmatpush1.bf16.xpose.msra.mxu0 0
      %1819 = vmatprep.subr.bf16.mxu0 0
      %1820 = vmatpush1.bf16.xpose.msra.mxu0 0
      %1821 = vmatprep.subr.bf16.mxu0 0
      %1822 = vmatpush1.bf16.xpose.msra.mxu0 0
      %1823 = vmatprep.mubr.bf16.mxu0 0
      %1824 = vmatmul.mubr.bf16.gmra.mrb[0].mxu0 %v1786
      %v1825 = vpop.f32.mrb[0].mxu0
      %v1826 = vadd.f32 0.0, %v1825
      %v1827 = vpop.f32.mrb[0].mxu0
      %v1828 = vpop.f32.mrb[0].mxu0
      %v1829 = vadd.f32 0.0, %v1828
      %v1830 = vpop.f32.mrb[0].mxu0
      %1831 = vdwg.mxu0
      %v1832 = vsel %vm887, %v1826, -inf
      %1833 = vmax.xlane.f32.xlu0 %v1832
      %v1834 = vpop.xlane.xlu0 %1833
      %v1835 = vsel %vm891, %v1829, -inf
      %1836 = vmax.xlane.f32.xlu0 %v1835
      %v1837 = vpop.xlane.xlu0 %1836
      %v1838 = vsub.f32 %v1826, %v1834
      %v1839 = vsub.f32 %v1829, %v1837
      %v1840 = vmul.f32 %v1838, 1.442695
      %v1841 = vpow.pop %v1840
      %v1842 = vmul.f32 %v1839, 1.442695
      %v1843 = vpow.pop %v1842
      %v1844 = vsel %vm887, %v1841, 0.0
      %1845 = vadd.xlane.f32.xlu0 %v1844
      %v1846 = vpop.xlane.xlu0 %1845
      %v1847 = vsel %vm891, %v1843, 0.0
      %1848 = vadd.xlane.f32.xlu0 %v1847
      %v1849 = vpop.xlane.xlu0 %1848
      %v1850 = vrcp.pop %v1846
      %v1851 = vrcp.pop %v1849
      %v1852 = vmul.f32 %v1841, %v1850
      %v1853 = vmul.f32 %v1843, %v1851
      %v1854 = vpack.c.bf16 %v1853, %v1852
      %1855 = vrot.lane.b32.xlu0 %v1782, 112
      %v1856 = vpop.permute.xlu0 %1855
      %v1858 = vsel %vm887, %v1854, 0
      %v1861 = vsel %vm917, %v1856, 0
      %1863 = vmatprep.subr.bf16.mxu0 0
      %1864 = vmatpush1.bf16.msra.mxu0 %v1861
      %1865 = vmatprep.subr.bf16.mxu0 0
      %1866 = vmatpush1.bf16.msra.mxu0 0
      %1867 = vmatprep.subr.bf16.mxu0 0
      %1868 = vmatpush1.bf16.msra.mxu0 0
      %1869 = vmatprep.subr.bf16.mxu0 0
      %1870 = vmatpush1.bf16.msra.mxu0 0
      %1871 = vmatprep.subr.bf16.mxu0 0
      %1872 = vmatpush1.bf16.msra.mxu0 0
      %1873 = vmatprep.subr.bf16.mxu0 0
      %1874 = vmatpush1.bf16.msra.mxu0 0
      %1875 = vmatprep.subr.bf16.mxu0 0
      %1876 = vmatpush1.bf16.msra.mxu0 0
      %1877 = vmatprep.subr.bf16.mxu0 0
      %1878 = vmatpush1.bf16.msra.mxu0 0
      %1879 = vmatprep.subr.bf16.mxu0 0
      %1880 = vmatpush1.bf16.msra.mxu0 0
      %1881 = vmatprep.subr.bf16.mxu0 0
      %1882 = vmatpush1.bf16.msra.mxu0 0
      %1883 = vmatprep.subr.bf16.mxu0 0
      %1884 = vmatpush1.bf16.msra.mxu0 0
      %1885 = vmatprep.subr.bf16.mxu0 0
      %1886 = vmatpush1.bf16.msra.mxu0 0
      %1887 = vmatprep.subr.bf16.mxu0 0
      %1888 = vmatpush1.bf16.msra.mxu0 0
      %1889 = vmatprep.subr.bf16.mxu0 0
      %1890 = vmatpush1.bf16.msra.mxu0 0
      %1891 = vmatprep.subr.bf16.mxu0 0
      %1892 = vmatpush1.bf16.msra.mxu0 0
      %1893 = vmatprep.subr.bf16.mxu0 0
      %1894 = vmatpush1.bf16.msra.mxu0 0
      %1895 = vmatprep.mubr.bf16.mxu0 0
      %1896 = vmatmul.mubr.bf16.gmra.mrb[0].mxu0 %v1858
      %v1897 = vpop.f32.mrb[0].mxu0
      %v1898 = vadd.f32 0.0, %v1897
      %v1899 = vpop.f32.mrb[0].mxu0
      %v1900 = vpop.f32.mrb[0].mxu0
      %v1901 = vadd.f32 0.0, %v1900
      %v1902 = vpop.f32.mrb[0].mxu0
      %1903 = vdwg.mxu0
      %v1906 = vrot.slane %v1898, 2
      %v1907 = vrot.slane %v1901, 2
      %v1908 = vsel %vm1095, %v1906, %v1907
      %v1912 = vsel %vm1095, %v1771, %v1906
      %v1913 = vpack.c.bf16 %v1912, %v1768
      %v1914 = vpack.c.bf16 %v1907, %v1908
      %s1915 = scalar_lea.vmem %s617, 8
      %v1916 = vld [vmem:[%s1915] sm:$0xf]
      %v1918 = vsel %vm839, %v1913, 0
      %v1921 = vsel %vm839, %v1914, 0
      %v1924 = vsel %vm1459, %v1916, 0
      %1926 = vmatprep.subr.bf16.mxu0 0
      %1927 = vmatpush1.bf16.msra.mxu0 %v1924
      %1928 = vmatprep.subr.bf16.mxu0 0
      %1929 = vmatpush1.bf16.msra.mxu0 0
      %1930 = vmatprep.subr.bf16.mxu0 0
      %1931 = vmatpush1.bf16.msra.mxu0 0
      %1932 = vmatprep.subr.bf16.mxu0 0
      %1933 = vmatpush1.bf16.msra.mxu0 0
      %1934 = vmatprep.subr.bf16.mxu0 0
      %1935 = vmatpush1.bf16.msra.mxu0 0
      %1936 = vmatprep.subr.bf16.mxu0 0
      %1937 = vmatpush1.bf16.msra.mxu0 0
      %1938 = vmatprep.subr.bf16.mxu0 0
      %1939 = vmatpush1.bf16.msra.mxu0 0
      %1940 = vmatprep.subr.bf16.mxu0 0
      %1941 = vmatpush1.bf16.msra.mxu0 0
      %1942 = vmatprep.subr.bf16.mxu0 0
      %1943 = vmatpush1.bf16.msra.mxu0 0
      %1944 = vmatprep.subr.bf16.mxu0 0
      %1945 = vmatpush1.bf16.msra.mxu0 0
      %1946 = vmatprep.subr.bf16.mxu0 0
      %1947 = vmatpush1.bf16.msra.mxu0 0
      %1948 = vmatprep.subr.bf16.mxu0 0
      %1949 = vmatpush1.bf16.msra.mxu0 0
      %1950 = vmatprep.subr.bf16.mxu0 0
      %1951 = vmatpush1.bf16.msra.mxu0 0
      %1952 = vmatprep.subr.bf16.mxu0 0
      %1953 = vmatpush1.bf16.msra.mxu0 0
      %1954 = vmatprep.subr.bf16.mxu0 0
      %1955 = vmatpush1.bf16.msra.mxu0 0
      %1956 = vmatprep.subr.bf16.mxu0 0
      %1957 = vmatpush1.bf16.msra.mxu0 0
      %1958 = vmatprep.mubr.bf16.mxu0 0
      %1959 = vmatmul.mubr.bf16.gmra.mrb[0].mxu0 %v1918
      %v1960 = vpop.f32.mrb[0].mxu0
      %v1961 = vadd.f32 0.0, %v1960
      %v1962 = vpop.f32.mrb[0].mxu0
      %v1963 = vpop.f32.mrb[0].mxu0
      %v1964 = vadd.f32 0.0, %v1963
      %v1965 = vpop.f32.mrb[0].mxu0
      %1966 = vmatprep.mubr.bf16.mxu0 0
      %1967 = vmatmul.mubr.bf16.gmra.mrb[0].mxu0 %v1921
      %v1968 = vpop.f32.mrb[0].mxu0
      %v1969 = vadd.f32 0.0, %v1968
      %v1970 = vpop.f32.mrb[0].mxu0
      %v1971 = vpop.f32.mrb[0].mxu0
      %v1972 = vadd.f32 0.0, %v1971
      %v1973 = vpop.f32.mrb[0].mxu0
      %1974 = vdwg.mxu0
      %v1975 = vadd.f32 %v1556, %v1961
      %v1976 = vadd.f32 %v1559, %v1964
      %v1977 = vadd.f32 %v1564, %v1969
      %v1978 = vadd.f32 %v1567, %v1972
      %s1979 = scalar_lea.vmem %s608, 48
      %v1980 = vld [vmem:[%s1979] sm:$0xf]
      %v1981 = vld [vmem:[%s1979 + $0x4] sm:$0xf]
      %v1982 = vld [vmem:[%s1979 + $0x8] sm:$0xf]
      %v1983 = vld [vmem:[%s1979 + $0xc] sm:$0xf]
      %s1984 = scalar_lea.vmem %s612, 3
      %v1985 = vld [vmem:[%s1984] sm:$0x1]
      %v1987 = vlaneseq
      %v1988 = vshrl.u32 %v1987, 7
      %v1989 = vsub.s32 0, %v1988
      %v1990 = vrot.slane %v1985, %v1989
      %v1996 = vunpack.c.l.b16 %v1980
      %v1997 = vunpack.c.l.b16 %v1981
      %v1998 = vunpack.c.l.b16 %v1982
      %v1999 = vunpack.c.l.b16 %v1983
      %v2000 = vpack.c.b16 %v1997, %v1996
      %v2001 = vpack.c.b16 %v1999, %v1998
      %2004 = vmatprep.subr.bf16.mxu0 0
      %2005 = vmatpush1.bf16.msra.mxu0 %v2000
      %2006 = vmatprep.subr.bf16.mxu0 0
      %2007 = vmatpush1.bf16.msra.mxu0 %v2001
      %2008 = vmatprep.subr.bf16.mxu0 0
      %2009 = vmatpush1.bf16.msra.mxu0 0
      %2010 = vmatprep.subr.bf16.mxu0 0
      %2011 = vmatpush1.bf16.msra.mxu0 0
      %2012 = vmatprep.subr.bf16.mxu0 0
      %2013 = vmatpush1.bf16.msra.mxu0 0
      %2014 = vmatprep.subr.bf16.mxu0 0
      %2015 = vmatpush1.bf16.msra.mxu0 0
      %2016 = vmatprep.subr.bf16.mxu0 0
      %2017 = vmatpush1.bf16.msra.mxu0 0
      %2018 = vmatprep.subr.bf16.mxu0 0
      %2019 = vmatpush1.bf16.msra.mxu0 0
      %2020 = vmatprep.subr.bf16.mxu0 0
      %2021 = vmatpush1.bf16.msra.mxu0 0
      %2022 = vmatprep.subr.bf16.mxu0 0
      %2023 = vmatpush1.bf16.msra.mxu0 0
      %2024 = vmatprep.subr.bf16.mxu0 0
      %2025 = vmatpush1.bf16.msra.mxu0 0
      %2026 = vmatprep.subr.bf16.mxu0 0
      %2027 = vmatpush1.bf16.msra.mxu0 0
      %2028 = vmatprep.subr.bf16.mxu0 0
      %2029 = vmatpush1.bf16.msra.mxu0 0
      %2030 = vmatprep.subr.bf16.mxu0 0
      %2031 = vmatpush1.bf16.msra.mxu0 0
      %2032 = vmatprep.subr.bf16.mxu0 0
      %2033 = vmatpush1.bf16.msra.mxu0 0
      %2034 = vmatprep.subr.bf16.mxu0 0
      %2035 = vmatpush1.bf16.msra.mxu0 0
      %2036 = vmatprep.mubr.bf16.mxu0 0
      %2037 = vmatmul.mubr.bf16.gmra.mrb[0].mxu0 %v774
      %v2038 = vpop.f32.mrb[0].mxu0
      %v2039 = vadd.f32 %v1990, %v2038
      %v2040 = vpop.f32.mrb[0].mxu0
      %v2041 = vpop.f32.mrb[0].mxu0
      %v2042 = vadd.f32 %v1990, %v2041
      %v2043 = vpop.f32.mrb[0].mxu0
      %2044 = vmatprep.mubr.bf16.mxu0 0
      %2045 = vmatmul.mubr.bf16.gmra.mrb[0].mxu0 %v777
      %v2046 = vpop.f32.mrb[0].mxu0
      %v2047 = vadd.f32 %v1990, %v2046
      %v2048 = vpop.f32.mrb[0].mxu0
      %v2049 = vpop.f32.mrb[0].mxu0
      %v2050 = vadd.f32 %v1990, %v2049
      %v2051 = vpop.f32.mrb[0].mxu0
      %2052 = vdwg.mxu0
      %v2053 = vmul.f32 %v2039, 0.35355338
      %v2054 = vmul.f32 %v2042, 0.35355338
      %v2055 = vmul.f32 %v2047, 0.35355338
      %v2056 = vmul.f32 %v2050, 0.35355338
      %v2057 = vpack.c.bf16 %v2054, %v2053
      %v2058 = vpack.c.bf16 %v2056, %v2055
      %v2059 = vpack.c.bf16 %v2042, %v2039
      %v2060 = vpack.c.bf16 %v2050, %v2047
      %2062 = vrot.lane.b32.xlu0 %v2059, 120
      %v2063 = vpop.permute.xlu0 %2062
      %v2065 = vsel %vm839, %v2057, 0
      %v2068 = vsel %vm839, %v2063, 0
      %2070 = vmatprep.subr.bf16.mxu0 0
      %2071 = vmatpush1.bf16.xpose.msra.mxu0 %v2068
      %2072 = vmatprep.subr.bf16.mxu0 0
      %2073 = vmatpush1.bf16.xpose.msra.mxu0 0
      %2074 = vmatprep.subr.bf16.mxu0 0
      %2075 = vmatpush1.bf16.xpose.msra.mxu0 0
      %2076 = vmatprep.subr.bf16.mxu0 0
      %2077 = vmatpush1.bf16.xpose.msra.mxu0 0
      %2078 = vmatprep.subr.bf16.mxu0 0
      %2079 = vmatpush1.bf16.xpose.msra.mxu0 0
      %2080 = vmatprep.subr.bf16.mxu0 0
      %2081 = vmatpush1.bf16.xpose.msra.mxu0 0
      %2082 = vmatprep.subr.bf16.mxu0 0
      %2083 = vmatpush1.bf16.xpose.msra.mxu0 0
      %2084 = vmatprep.subr.bf16.mxu0 0
      %2085 = vmatpush1.bf16.xpose.msra.mxu0 0
      %2086 = vmatprep.subr.bf16.mxu0 0
      %2087 = vmatpush1.bf16.xpose.msra.mxu0 0
      %2088 = vmatprep.subr.bf16.mxu0 0
      %2089 = vmatpush1.bf16.xpose.msra.mxu0 0
      %2090 = vmatprep.subr.bf16.mxu0 0
      %2091 = vmatpush1.bf16.xpose.msra.mxu0 0
      %2092 = vmatprep.subr.bf16.mxu0 0
      %2093 = vmatpush1.bf16.xpose.msra.mxu0 0
      %2094 = vmatprep.subr.bf16.mxu0 0
      %2095 = vmatpush1.bf16.xpose.msra.mxu0 0
      %2096 = vmatprep.subr.bf16.mxu0 0
      %2097 = vmatpush1.bf16.xpose.msra.mxu0 0
      %2098 = vmatprep.subr.bf16.mxu0 0
      %2099 = vmatpush1.bf16.xpose.msra.mxu0 0
      %2100 = vmatprep.subr.bf16.mxu0 0
      %2101 = vmatpush1.bf16.xpose.msra.mxu0 0
      %2102 = vmatprep.mubr.bf16.mxu0 0
      %2103 = vmatmul.mubr.bf16.gmra.mrb[0].mxu0 %v2065
      %v2104 = vpop.f32.mrb[0].mxu0
      %v2105 = vadd.f32 0.0, %v2104
      %v2106 = vpop.f32.mrb[0].mxu0
      %v2107 = vpop.f32.mrb[0].mxu0
      %v2108 = vadd.f32 0.0, %v2107
      %v2109 = vpop.f32.mrb[0].mxu0
      %2110 = vdwg.mxu0
      %v2111 = vsel %vm887, %v2105, -inf
      %2112 = vmax.xlane.f32.xlu0 %v2111
      %v2113 = vpop.xlane.xlu0 %2112
      %v2114 = vsel %vm891, %v2108, -inf
      %2115 = vmax.xlane.f32.xlu0 %v2114
      %v2116 = vpop.xlane.xlu0 %2115
      %v2117 = vsub.f32 %v2105, %v2113
      %v2118 = vsub.f32 %v2108, %v2116
      %v2119 = vmul.f32 %v2117, 1.442695
      %v2120 = vpow.pop %v2119
      %v2121 = vmul.f32 %v2118, 1.442695
      %v2122 = vpow.pop %v2121
      %v2123 = vsel %vm887, %v2120, 0.0
      %2124 = vadd.xlane.f32.xlu0 %v2123
      %v2125 = vpop.xlane.xlu0 %2124
      %v2126 = vsel %vm891, %v2122, 0.0
      %2127 = vadd.xlane.f32.xlu0 %v2126
      %v2128 = vpop.xlane.xlu0 %2127
      %v2129 = vrcp.pop %v2125
      %v2130 = vrcp.pop %v2128
      %v2131 = vmul.f32 %v2120, %v2129
      %v2132 = vmul.f32 %v2122, %v2130
      %v2133 = vpack.c.bf16 %v2132, %v2131
      %2134 = vrot.lane.b32.xlu0 %v2059, 112
      %v2135 = vpop.permute.xlu0 %2134
      %v2137 = vsel %vm887, %v2133, 0
      %v2140 = vsel %vm917, %v2135, 0
      %2142 = vmatprep.subr.bf16.mxu0 0
      %2143 = vmatpush1.bf16.msra.mxu0 %v2140
      %2144 = vmatprep.subr.bf16.mxu0 0
      %2145 = vmatpush1.bf16.msra.mxu0 0
      %2146 = vmatprep.subr.bf16.mxu0 0
      %2147 = vmatpush1.bf16.msra.mxu0 0
      %2148 = vmatprep.subr.bf16.mxu0 0
      %2149 = vmatpush1.bf16.msra.mxu0 0
      %2150 = vmatprep.subr.bf16.mxu0 0
      %2151 = vmatpush1.bf16.msra.mxu0 0
      %2152 = vmatprep.subr.bf16.mxu0 0
      %2153 = vmatpush1.bf16.msra.mxu0 0
      %2154 = vmatprep.subr.bf16.mxu0 0
      %2155 = vmatpush1.bf16.msra.mxu0 0
      %2156 = vmatprep.subr.bf16.mxu0 0
      %2157 = vmatpush1.bf16.msra.mxu0 0
      %2158 = vmatprep.subr.bf16.mxu0 0
      %2159 = vmatpush1.bf16.msra.mxu0 0
      %2160 = vmatprep.subr.bf16.mxu0 0
      %2161 = vmatpush1.bf16.msra.mxu0 0
      %2162 = vmatprep.subr.bf16.mxu0 0
      %2163 = vmatpush1.bf16.msra.mxu0 0
      %2164 = vmatprep.subr.bf16.mxu0 0
      %2165 = vmatpush1.bf16.msra.mxu0 0
      %2166 = vmatprep.subr.bf16.mxu0 0
      %2167 = vmatpush1.bf16.msra.mxu0 0
      %2168 = vmatprep.subr.bf16.mxu0 0
      %2169 = vmatpush1.bf16.msra.mxu0 0
      %2170 = vmatprep.subr.bf16.mxu0 0
      %2171 = vmatpush1.bf16.msra.mxu0 0
      %2172 = vmatprep.subr.bf16.mxu0 0
      %2173 = vmatpush1.bf16.msra.mxu0 0
      %2174 = vmatprep.mubr.bf16.mxu0 0
      %2175 = vmatmul.mubr.bf16.gmra.mrb[0].mxu0 %v2137
      %v2176 = vpop.f32.mrb[0].mxu0
      %v2177 = vadd.f32 0.0, %v2176
      %v2178 = vpop.f32.mrb[0].mxu0
      %v2179 = vpop.f32.mrb[0].mxu0
      %v2180 = vadd.f32 0.0, %v2179
      %v2181 = vpop.f32.mrb[0].mxu0
      %2182 = vdwg.mxu0
      %v2185 = vrot.slane %v2057, 7
      %v2186 = vrot.slane %v2058, 7
      %v2187 = vsel %vm964, %v2185, %v2186
      %v2189 = vrot.slane %v2059, 7
      %v2190 = vrot.slane %v2060, 7
      %v2191 = vsel %vm964, %v2189, %v2190
      %2192 = vrot.lane.b32.xlu0 %v2191, 120
      %v2193 = vpop.permute.xlu0 %2192
      %v2195 = vsel %vm839, %v2187, 0
      %v2198 = vsel %vm839, %v2193, 0
      %2200 = vmatprep.subr.bf16.mxu0 0
      %2201 = vmatpush1.bf16.xpose.msra.mxu0 %v2198
      %2202 = vmatprep.subr.bf16.mxu0 0
      %2203 = vmatpush1.bf16.xpose.msra.mxu0 0
      %2204 = vmatprep.subr.bf16.mxu0 0
      %2205 = vmatpush1.bf16.xpose.msra.mxu0 0
      %2206 = vmatprep.subr.bf16.mxu0 0
      %2207 = vmatpush1.bf16.xpose.msra.mxu0 0
      %2208 = vmatprep.subr.bf16.mxu0 0
      %2209 = vmatpush1.bf16.xpose.msra.mxu0 0
      %2210 = vmatprep.subr.bf16.mxu0 0
      %2211 = vmatpush1.bf16.xpose.msra.mxu0 0
      %2212 = vmatprep.subr.bf16.mxu0 0
      %2213 = vmatpush1.bf16.xpose.msra.mxu0 0
      %2214 = vmatprep.subr.bf16.mxu0 0
      %2215 = vmatpush1.bf16.xpose.msra.mxu0 0
      %2216 = vmatprep.subr.bf16.mxu0 0
      %2217 = vmatpush1.bf16.xpose.msra.mxu0 0
      %2218 = vmatprep.subr.bf16.mxu0 0
      %2219 = vmatpush1.bf16.xpose.msra.mxu0 0
      %2220 = vmatprep.subr.bf16.mxu0 0
      %2221 = vmatpush1.bf16.xpose.msra.mxu0 0
      %2222 = vmatprep.subr.bf16.mxu0 0
      %2223 = vmatpush1.bf16.xpose.msra.mxu0 0
      %2224 = vmatprep.subr.bf16.mxu0 0
      %2225 = vmatpush1.bf16.xpose.msra.mxu0 0
      %2226 = vmatprep.subr.bf16.mxu0 0
      %2227 = vmatpush1.bf16.xpose.msra.mxu0 0
      %2228 = vmatprep.subr.bf16.mxu0 0
      %2229 = vmatpush1.bf16.xpose.msra.mxu0 0
      %2230 = vmatprep.subr.bf16.mxu0 0
      %2231 = vmatpush1.bf16.xpose.msra.mxu0 0
      %2232 = vmatprep.mubr.bf16.mxu0 0
      %2233 = vmatmul.mubr.bf16.gmra.mrb[0].mxu0 %v2195
      %v2234 = vpop.f32.mrb[0].mxu0
      %v2235 = vadd.f32 0.0, %v2234
      %v2236 = vpop.f32.mrb[0].mxu0
      %v2237 = vpop.f32.mrb[0].mxu0
      %v2238 = vadd.f32 0.0, %v2237
      %v2239 = vpop.f32.mrb[0].mxu0
      %2240 = vdwg.mxu0
      %v2241 = vsel %vm887, %v2235, -inf
      %2242 = vmax.xlane.f32.xlu0 %v2241
      %v2243 = vpop.xlane.xlu0 %2242
      %v2244 = vsel %vm891, %v2238, -inf
      %2245 = vmax.xlane.f32.xlu0 %v2244
      %v2246 = vpop.xlane.xlu0 %2245
      %v2247 = vsub.f32 %v2235, %v2243
      %v2248 = vsub.f32 %v2238, %v2246
      %v2249 = vmul.f32 %v2247, 1.442695
      %v2250 = vpow.pop %v2249
      %v2251 = vmul.f32 %v2248, 1.442695
      %v2252 = vpow.pop %v2251
      %v2253 = vsel %vm887, %v2250, 0.0
      %2254 = vadd.xlane.f32.xlu0 %v2253
      %v2255 = vpop.xlane.xlu0 %2254
      %v2256 = vsel %vm891, %v2252, 0.0
      %2257 = vadd.xlane.f32.xlu0 %v2256
      %v2258 = vpop.xlane.xlu0 %2257
      %v2259 = vrcp.pop %v2255
      %v2260 = vrcp.pop %v2258
      %v2261 = vmul.f32 %v2250, %v2259
      %v2262 = vmul.f32 %v2252, %v2260
      %v2263 = vpack.c.bf16 %v2262, %v2261
      %2264 = vrot.lane.b32.xlu0 %v2191, 112
      %v2265 = vpop.permute.xlu0 %2264
      %v2267 = vsel %vm887, %v2263, 0
      %v2270 = vsel %vm917, %v2265, 0
      %2272 = vmatprep.subr.bf16.mxu0 0
      %2273 = vmatpush1.bf16.msra.mxu0 %v2270
      %2274 = vmatprep.subr.bf16.mxu0 0
      %2275 = vmatpush1.bf16.msra.mxu0 0
      %2276 = vmatprep.subr.bf16.mxu0 0
      %2277 = vmatpush1.bf16.msra.mxu0 0
      %2278 = vmatprep.subr.bf16.mxu0 0
      %2279 = vmatpush1.bf16.msra.mxu0 0
      %2280 = vmatprep.subr.bf16.mxu0 0
      %2281 = vmatpush1.bf16.msra.mxu0 0
      %2282 = vmatprep.subr.bf16.mxu0 0
      %2283 = vmatpush1.bf16.msra.mxu0 0
      %2284 = vmatprep.subr.bf16.mxu0 0
      %2285 = vmatpush1.bf16.msra.mxu0 0
      %2286 = vmatprep.subr.bf16.mxu0 0
      %2287 = vmatpush1.bf16.msra.mxu0 0
      %2288 = vmatprep.subr.bf16.mxu0 0
      %2289 = vmatpush1.bf16.msra.mxu0 0
      %2290 = vmatprep.subr.bf16.mxu0 0
      %2291 = vmatpush1.bf16.msra.mxu0 0
      %2292 = vmatprep.subr.bf16.mxu0 0
      %2293 = vmatpush1.bf16.msra.mxu0 0
      %2294 = vmatprep.subr.bf16.mxu0 0
      %2295 = vmatpush1.bf16.msra.mxu0 0
      %2296 = vmatprep.subr.bf16.mxu0 0
      %2297 = vmatpush1.bf16.msra.mxu0 0
      %2298 = vmatprep.subr.bf16.mxu0 0
      %2299 = vmatpush1.bf16.msra.mxu0 0
      %2300 = vmatprep.subr.bf16.mxu0 0
      %2301 = vmatpush1.bf16.msra.mxu0 0
      %2302 = vmatprep.subr.bf16.mxu0 0
      %2303 = vmatpush1.bf16.msra.mxu0 0
      %2304 = vmatprep.mubr.bf16.mxu0 0
      %2305 = vmatmul.mubr.bf16.gmra.mrb[0].mxu0 %v2267
      %v2306 = vpop.f32.mrb[0].mxu0
      %v2307 = vadd.f32 0.0, %v2306
      %v2308 = vpop.f32.mrb[0].mxu0
      %v2309 = vpop.f32.mrb[0].mxu0
      %v2310 = vadd.f32 0.0, %v2309
      %v2311 = vpop.f32.mrb[0].mxu0
      %2312 = vdwg.mxu0
      %v2315 = vrot.slane %v2307, 2
      %v2316 = vrot.slane %v2310, 2
      %v2317 = vsel %vm1095, %v2315, %v2316
      %v2321 = vsel %vm1095, %v2180, %v2315
      %v2322 = vpack.c.bf16 %v2321, %v2177
      %v2323 = vpack.c.bf16 %v2316, %v2317
      %s2324 = scalar_lea.vmem %s617, 12
      %v2325 = vld [vmem:[%s2324] sm:$0xf]
      %v2327 = vsel %vm839, %v2322, 0
      %v2330 = vsel %vm839, %v2323, 0
      %v2333 = vsel %vm1459, %v2325, 0
      %2335 = vmatprep.subr.bf16.mxu0 0
      %2336 = vmatpush1.bf16.msra.mxu0 %v2333
      %2337 = vmatprep.subr.bf16.mxu0 0
      %2338 = vmatpush1.bf16.msra.mxu0 0
      %2339 = vmatprep.subr.bf16.mxu0 0
      %2340 = vmatpush1.bf16.msra.mxu0 0
      %2341 = vmatprep.subr.bf16.mxu0 0
      %2342 = vmatpush1.bf16.msra.mxu0 0
      %2343 = vmatprep.subr.bf16.mxu0 0
      %2344 = vmatpush1.bf16.msra.mxu0 0
      %2345 = vmatprep.subr.bf16.mxu0 0
      %2346 = vmatpush1.bf16.msra.mxu0 0
      %2347 = vmatprep.subr.bf16.mxu0 0
      %2348 = vmatpush1.bf16.msra.mxu0 0
      %2349 = vmatprep.subr.bf16.mxu0 0
      %2350 = vmatpush1.bf16.msra.mxu0 0
      %2351 = vmatprep.subr.bf16.mxu0 0
      %2352 = vmatpush1.bf16.msra.mxu0 0
      %2353 = vmatprep.subr.bf16.mxu0 0
      %2354 = vmatpush1.bf16.msra.mxu0 0
      %2355 = vmatprep.subr.bf16.mxu0 0
      %2356 = vmatpush1.bf16.msra.mxu0 0
      %2357 = vmatprep.subr.bf16.mxu0 0
      %2358 = vmatpush1.bf16.msra.mxu0 0
      %2359 = vmatprep.subr.bf16.mxu0 0
      %2360 = vmatpush1.bf16.msra.mxu0 0
      %2361 = vmatprep.subr.bf16.mxu0 0
      %2362 = vmatpush1.bf16.msra.mxu0 0
      %2363 = vmatprep.subr.bf16.mxu0 0
      %2364 = vmatpush1.bf16.msra.mxu0 0
      %2365 = vmatprep.subr.bf16.mxu0 0
      %2366 = vmatpush1.bf16.msra.mxu0 0
      %2367 = vmatprep.mubr.bf16.mxu0 0
      %2368 = vmatmul.mubr.bf16.gmra.mrb[0].mxu0 %v2327
      %v2369 = vpop.f32.mrb[0].mxu0
      %v2370 = vadd.f32 0.0, %v2369
      %v2371 = vpop.f32.mrb[0].mxu0
      %v2372 = vpop.f32.mrb[0].mxu0
      %v2373 = vadd.f32 0.0, %v2372
      %v2374 = vpop.f32.mrb[0].mxu0
      %2375 = vmatprep.mubr.bf16.mxu0 0
      %2376 = vmatmul.mubr.bf16.gmra.mrb[0].mxu0 %v2330
      %v2377 = vpop.f32.mrb[0].mxu0
      %v2378 = vadd.f32 0.0, %v2377
      %v2379 = vpop.f32.mrb[0].mxu0
      %v2380 = vpop.f32.mrb[0].mxu0
      %v2381 = vadd.f32 0.0, %v2380
      %v2382 = vpop.f32.mrb[0].mxu0
      %2383 = vdwg.mxu0
      %v2384 = vadd.f32 %v1975, %v2370
      %v2385 = vadd.f32 %v1976, %v2373
      %v2386 = vadd.f32 %v1977, %v2378
      %v2387 = vadd.f32 %v1978, %v2381
      %v2388 = vadd.f32 %v667, %v2384
      %v2389 = vadd.f32 %v668, %v2385
      %v2390 = vadd.f32 %v669, %v2386
      %v2391 = vadd.f32 %v670, %v2387
      %v2392 = vld [vmem:[%s620] sm:$0x1]
      %v2394 = vlaneseq
      %v2395 = vshrl.u32 %v2394, 7
      %v2396 = vsub.s32 0, %v2395
      %v2397 = vrot.slane %v2392, %v2396
      %v2399 = vadd.f32 %v2388, %v2397
      %v2400 = vadd.f32 %v2389, %v2397
      %v2401 = vadd.f32 %v2390, %v2397
      %v2402 = vadd.f32 %v2391, %v2397
      %v2403 = vld [vmem:[%s623] sm:$0x1]
      %v2404 = vld [vmem:[%s626] sm:$0x1]
      %v2405 = vsel %vm673, %v2399, 0.0
      %2406 = vadd.xlane.f32.xlu0 %v2405
      %v2407 = vpop.xlane.xlu0 %2406
      %v2408 = vsel %vm673, %v2400, 0.0
      %2409 = vadd.xlane.f32.xlu0 %v2408
      %v2410 = vpop.xlane.xlu0 %2409
      %v2411 = vsel %vm673, %v2401, 0.0
      %2412 = vadd.xlane.f32.xlu0 %v2411
      %v2413 = vpop.xlane.xlu0 %2412
      %v2414 = vsel %vm683, %v2402, 0.0
      %2415 = vadd.xlane.f32.xlu0 %v2414
      %v2416 = vpop.xlane.xlu0 %2415
      %v2417 = vmul.f32 %v2407, %v687
      %v2418 = vmul.f32 %v2410, %v687
      %v2419 = vmul.f32 %v2413, %v687
      %v2420 = vmul.f32 %v2416, %v687
      %v2421 = vsub.f32 %v2399, %v2417
      %v2422 = vsub.f32 %v2400, %v2418
      %v2423 = vsub.f32 %v2401, %v2419
      %v2424 = vsub.f32 %v2402, %v2420
      %v2425 = vmul.f32 %v2421, %v2421
      %v2426 = vmul.f32 %v2422, %v2422
      %v2427 = vmul.f32 %v2423, %v2423
      %v2428 = vmul.f32 %v2424, %v2424
      %v2429 = vsel %vm673, %v2425, 0.0
      %2430 = vadd.xlane.f32.xlu0 %v2429
      %v2431 = vpop.xlane.xlu0 %2430
      %v2432 = vsel %vm673, %v2426, 0.0
      %2433 = vadd.xlane.f32.xlu0 %v2432
      %v2434 = vpop.xlane.xlu0 %2433
      %v2435 = vsel %vm673, %v2427, 0.0
      %2436 = vadd.xlane.f32.xlu0 %v2435
      %v2437 = vpop.xlane.xlu0 %2436
      %v2438 = vsel %vm683, %v2428, 0.0
      %2439 = vadd.xlane.f32.xlu0 %v2438
      %v2440 = vpop.xlane.xlu0 %2439
      %v2441 = vmul.f32 %v2431, %v687
      %v2442 = vmul.f32 %v2434, %v687
      %v2443 = vmul.f32 %v2437, %v687
      %v2444 = vmul.f32 %v2440, %v687
      %v2445 = vadd.f32 %v2441, 1e-05
      %v2446 = vadd.f32 %v2442, 1e-05
      %v2447 = vadd.f32 %v2443, 1e-05
      %v2448 = vadd.f32 %v2444, 1e-05
      %v2449 = vrsqrt.pop %v2445
      %v2450 = vrsqrt.pop %v2446
      %v2451 = vrsqrt.pop %v2447
      %v2452 = vrsqrt.pop %v2448
      %v2453 = vmul.f32 %v2421, %v2449
      %v2454 = vmul.f32 %v2422, %v2450
      %v2455 = vmul.f32 %v2423, %v2451
      %v2456 = vmul.f32 %v2424, %v2452
      %v2458 = vlaneseq
      %v2459 = vshrl.u32 %v2458, 7
      %v2460 = vsub.s32 0, %v2459
      %v2461 = vrot.slane %v2403, %v2460
      %v2463 = vmul.f32 %v2453, %v2461
      %v2464 = vmul.f32 %v2454, %v2461
      %v2465 = vmul.f32 %v2455, %v2461
      %v2466 = vmul.f32 %v2456, %v2461
      %v2468 = vlaneseq
      %v2469 = vshrl.u32 %v2468, 7
      %v2470 = vsub.s32 0, %v2469
      %v2471 = vrot.slane %v2404, %v2470
      %v2473 = vadd.f32 %v2463, %v2471
      %v2474 = vadd.f32 %v2464, %v2471
      %v2475 = vadd.f32 %v2465, %v2471
      %v2476 = vadd.f32 %v2466, %v2471
      %v2477 = vpack.c.bf16 %v2474, %v2473
      %v2478 = vpack.c.bf16 %v2476, %v2475
      %v2479 = vld [vmem:[%s631] sm:$0xf]
      %v2480 = vld [vmem:[%s631 + $0x4] sm:$0xf]
      %v2481 = vld [vmem:[%s631 + $0x8] sm:$0xf]
      %v2482 = vld [vmem:[%s631 + $0xc] sm:$0xf]
      %v2483 = vld [vmem:[%s634] sm:$0x1]
      %v2485 = vlaneseq
      %v2486 = vshrl.u32 %v2485, 7
      %v2487 = vsub.s32 0, %v2486
      %v2488 = vrot.slane %v2483, %v2487
      %v2494 = vunpack.c.l.b16 %v2479
      %v2495 = vunpack.c.l.b16 %v2480
      %v2496 = vunpack.c.l.b16 %v2481
      %v2497 = vunpack.c.l.b16 %v2482
      %v2498 = vpack.c.b16 %v2495, %v2494
      %v2499 = vpack.c.b16 %v2497, %v2496
      %v2503 = vsel %vm673, %v2477, 0
      %v2506 = vsel %vm673, %v2478, 0
      %2508 = vmatprep.subr.bf16.mxu0 0
      %2509 = vmatpush1.bf16.msra.mxu0 %v2498
      %2510 = vmatprep.subr.bf16.mxu0 0
      %2511 = vmatpush1.bf16.msra.mxu0 %v2499
      %2512 = vmatprep.subr.bf16.mxu0 0
      %2513 = vmatpush1.bf16.msra.mxu0 0
      %2514 = vmatprep.subr.bf16.mxu0 0
      %2515 = vmatpush1.bf16.msra.mxu0 0
      %2516 = vmatprep.subr.bf16.mxu0 0
      %2517 = vmatpush1.bf16.msra.mxu0 0
      %2518 = vmatprep.subr.bf16.mxu0 0
      %2519 = vmatpush1.bf16.msra.mxu0 0
      %2520 = vmatprep.subr.bf16.mxu0 0
      %2521 = vmatpush1.bf16.msra.mxu0 0
      %2522 = vmatprep.subr.bf16.mxu0 0
      %2523 = vmatpush1.bf16.msra.mxu0 0
      %2524 = vmatprep.subr.bf16.mxu0 0
      %2525 = vmatpush1.bf16.msra.mxu0 0
      %2526 = vmatprep.subr.bf16.mxu0 0
      %2527 = vmatpush1.bf16.msra.mxu0 0
      %2528 = vmatprep.subr.bf16.mxu0 0
      %2529 = vmatpush1.bf16.msra.mxu0 0
      %2530 = vmatprep.subr.bf16.mxu0 0
      %2531 = vmatpush1.bf16.msra.mxu0 0
      %2532 = vmatprep.subr.bf16.mxu0 0
      %2533 = vmatpush1.bf16.msra.mxu0 0
      %2534 = vmatprep.subr.bf16.mxu0 0
      %2535 = vmatpush1.bf16.msra.mxu0 0
      %2536 = vmatprep.subr.bf16.mxu0 0
      %2537 = vmatpush1.bf16.msra.mxu0 0
      %2538 = vmatprep.subr.bf16.mxu0 0
      %2539 = vmatpush1.bf16.msra.mxu0 0
      %2540 = vmatprep.mubr.bf16.mxu0 0
      %2541 = vmatmul.mubr.bf16.gmra.mrb[0].mxu0 %v2503
      %v2542 = vpop.f32.mrb[0].mxu0
      %v2543 = vadd.f32 %v2488, %v2542
      %v2544 = vpop.f32.mrb[0].mxu0
      %v2545 = vpop.f32.mrb[0].mxu0
      %v2546 = vadd.f32 %v2488, %v2545
      %v2547 = vpop.f32.mrb[0].mxu0
      %2548 = vmatprep.mubr.bf16.mxu0 0
      %2549 = vmatmul.mubr.bf16.gmra.mrb[0].mxu0 %v2506
      %v2550 = vpop.f32.mrb[0].mxu0
      %v2551 = vadd.f32 %v2488, %v2550
      %v2552 = vpop.f32.mrb[0].mxu0
      %v2553 = vpop.f32.mrb[0].mxu0
      %v2554 = vadd.f32 %v2488, %v2553
      %v2555 = vpop.f32.mrb[0].mxu0
      %2556 = vdwg.mxu0
      %v2557 = vmul.f32 %v2543, 0.5
      %v2558 = vmul.f32 %v2546, 0.5
      %v2559 = vmul.f32 %v2551, 0.5
      %v2560 = vmul.f32 %v2554, 0.5
      %v2561 = vmul.f32 %v2543, 0.044715
      %v2562 = vmul.f32 %v2546, 0.044715
      %v2563 = vmul.f32 %v2551, 0.044715
      %v2564 = vmul.f32 %v2554, 0.044715
      %v2565 = vmul.f32 %v2561, %v2543
      %v2566 = vmul.f32 %v2562, %v2546
      %v2567 = vmul.f32 %v2563, %v2551
      %v2568 = vmul.f32 %v2564, %v2554
      %v2569 = vmul.f32 %v2565, %v2543
      %v2570 = vmul.f32 %v2566, %v2546
      %v2571 = vmul.f32 %v2567, %v2551
      %v2572 = vmul.f32 %v2568, %v2554
      %v2573 = vadd.f32 %v2543, %v2569
      %v2574 = vadd.f32 %v2546, %v2570
      %v2575 = vadd.f32 %v2551, %v2571
      %v2576 = vadd.f32 %v2554, %v2572
      %v2577 = vmul.f32 %v2573, 0.7978846
      %v2578 = vmul.f32 %v2574, 0.7978846
      %v2579 = vmul.f32 %v2575, 0.7978846
      %v2580 = vmul.f32 %v2576, 0.7978846
      %v2581 = vtanh.pop %v2577
      %v2582 = vtanh.pop %v2578
      %v2583 = vtanh.pop %v2579
      %v2584 = vtanh.pop %v2580
      %v2585 = vadd.f32 %v2581, 1.0
      %v2586 = vadd.f32 %v2582, 1.0
      %v2587 = vadd.f32 %v2583, 1.0
      %v2588 = vadd.f32 %v2584, 1.0
      %v2589 = vmul.f32 %v2557, %v2585
      %v2590 = vmul.f32 %v2558, %v2586
      %v2591 = vmul.f32 %v2559, %v2587
      %v2592 = vmul.f32 %v2560, %v2588
      %v2593 = vpack.c.bf16 %v2590, %v2589
      %v2594 = vpack.c.bf16 %v2592, %v2591
      %v2595 = vld [vmem:[%s639] sm:$0xf]
      %v2596 = vld [vmem:[%s639 + $0x4] sm:$0xf]
      %v2597 = vld [vmem:[%s639 + $0x8] sm:$0xf]
      %v2598 = vld [vmem:[%s639 + $0xc] sm:$0xf]
      %v2599 = vld [vmem:[%s639 + $0x10] sm:$0xf]
      %v2600 = vld [vmem:[%s639 + $0x14] sm:$0xf]
      %v2601 = vld [vmem:[%s639 + $0x18] sm:$0xf]
      %v2602 = vld [vmem:[%s639 + $0x1c] sm:$0xf]
      %v2603 = vld [vmem:[%s639 + $0x20] sm:$0xf]
      %v2604 = vld [vmem:[%s639 + $0x24] sm:$0xf]
      %v2605 = vld [vmem:[%s639 + $0x28] sm:$0xf]
      %v2606 = vld [vmem:[%s639 + $0x2c] sm:$0xf]
      %v2607 = vld [vmem:[%s639 + $0x30] sm:$0xf]
      %v2608 = vld [vmem:[%s639 + $0x34] sm:$0xf]
      %v2609 = vld [vmem:[%s639 + $0x38] sm:$0xf]
      %v2610 = vld [vmem:[%s639 + $0x3c] sm:$0xf]
      %v2611 = vld [vmem:[%s642] sm:$0x1]
      %v2613 = vlaneseq
      %v2614 = vshrl.u32 %v2613, 7
      %v2615 = vsub.s32 0, %v2614
      %v2616 = vrot.slane %v2611, %v2615
      %v2634 = vunpack.c.l.b16 %v2595
      %v2635 = vunpack.c.l.b16 %v2596
      %v2636 = vunpack.c.l.b16 %v2597
      %v2637 = vunpack.c.l.b16 %v2598
      %v2638 = vunpack.c.l.b16 %v2599
      %v2639 = vunpack.c.l.b16 %v2600
      %v2640 = vunpack.c.l.b16 %v2601
      %v2641 = vunpack.c.l.b16 %v2602
      %v2642 = vunpack.c.l.b16 %v2603
      %v2643 = vunpack.c.l.b16 %v2604
      %v2644 = vunpack.c.l.b16 %v2605
      %v2645 = vunpack.c.l.b16 %v2606
      %v2646 = vunpack.c.l.b16 %v2607
      %v2647 = vunpack.c.l.b16 %v2608
      %v2648 = vunpack.c.l.b16 %v2609
      %v2649 = vunpack.c.l.b16 %v2610
      %v2650 = vpack.c.b16 %v2635, %v2634
      %v2651 = vpack.c.b16 %v2637, %v2636
      %v2652 = vpack.c.b16 %v2639, %v2638
      %v2653 = vpack.c.b16 %v2641, %v2640
      %v2654 = vpack.c.b16 %v2643, %v2642
      %v2655 = vpack.c.b16 %v2645, %v2644
      %v2656 = vpack.c.b16 %v2647, %v2646
      %v2657 = vpack.c.b16 %v2649, %v2648
      %2666 = vmatprep.subr.bf16.mxu0 0
      %2667 = vmatpush1.bf16.msra.mxu0 %v2650
      %2668 = vmatprep.subr.bf16.mxu0 0
      %2669 = vmatpush1.bf16.msra.mxu0 %v2651
      %2670 = vmatprep.subr.bf16.mxu0 0
      %2671 = vmatpush1.bf16.msra.mxu0 %v2652
      %2672 = vmatprep.subr.bf16.mxu0 0
      %2673 = vmatpush1.bf16.msra.mxu0 %v2653
      %2674 = vmatprep.subr.bf16.mxu0 0
      %2675 = vmatpush1.bf16.msra.mxu0 %v2654
      %2676 = vmatprep.subr.bf16.mxu0 0
      %2677 = vmatpush1.bf16.msra.mxu0 %v2655
      %2678 = vmatprep.subr.bf16.mxu0 0
      %2679 = vmatpush1.bf16.msra.mxu0 %v2656
      %2680 = vmatprep.subr.bf16.mxu0 0
      %2681 = vmatpush1.bf16.msra.mxu0 %v2657
      %2682 = vmatprep.subr.bf16.mxu0 0
      %2683 = vmatpush1.bf16.msra.mxu0 0
      %2684 = vmatprep.subr.bf16.mxu0 0
      %2685 = vmatpush1.bf16.msra.mxu0 0
      %2686 = vmatprep.subr.bf16.mxu0 0
      %2687 = vmatpush1.bf16.msra.mxu0 0
      %2688 = vmatprep.subr.bf16.mxu0 0
      %2689 = vmatpush1.bf16.msra.mxu0 0
      %2690 = vmatprep.subr.bf16.mxu0 0
      %2691 = vmatpush1.bf16.msra.mxu0 0
      %2692 = vmatprep.subr.bf16.mxu0 0
      %2693 = vmatpush1.bf16.msra.mxu0 0
      %2694 = vmatprep.subr.bf16.mxu0 0
      %2695 = vmatpush1.bf16.msra.mxu0 0
      %2696 = vmatprep.subr.bf16.mxu0 0
      %2697 = vmatpush1.bf16.msra.mxu0 0
      %2698 = vmatprep.mubr.bf16.mxu0 0
      %2699 = vmatmul.mubr.bf16.gmra.mrb[0].mxu0 %v2593
      %v2700 = vpop.f32.mrb[0].mxu0
      %v2701 = vadd.f32 %v2616, %v2700
      %v2702 = vpop.f32.mrb[0].mxu0
      %v2703 = vpop.f32.mrb[0].mxu0
      %v2704 = vadd.f32 %v2616, %v2703
      %v2705 = vpop.f32.mrb[0].mxu0
      %2706 = vmatprep.mubr.bf16.mxu0 0
      %2707 = vmatmul.mubr.bf16.gmra.mrb[0].mxu0 %v2594
      %v2708 = vpop.f32.mrb[0].mxu0
      %v2709 = vadd.f32 %v2616, %v2708
      %v2710 = vpop.f32.mrb[0].mxu0
      %v2711 = vpop.f32.mrb[0].mxu0
      %v2712 = vadd.f32 %v2616, %v2711
      %v2713 = vpop.f32.mrb[0].mxu0
      %2714 = vdwg.mxu0
      %v2715 = vadd.f32 %v2399, %v2701
      %v2716 = vadd.f32 %v2400, %v2704
      %v2717 = vadd.f32 %v2401, %v2709
      %v2718 = vadd.f32 %v2402, %v2712
      %2719 = vst.msk [vmem:[#allocation2] sm:$0xff] %vm673, %v2715
      %2720 = vst.msk [vmem:[#allocation2 + $0x8] sm:$0xff] %vm673, %v2716
      %2721 = vst.msk [vmem:[#allocation2 + $0x10] sm:$0xff] %vm673, %v2717
      %2722 = vst.msk [vmem:[#allocation2 + $0x18] sm:$0xf] %vm683, %v2718
      %p2723 = scmp.eq.s32.totalorder %s29, 1
      // Predicated region
      $region77: #{forward.6} parent=71 // pred_check
        %p2724 = pneg %p2723
      $region78: #{forward.6} parent=71 // pred_check_branch
        %2726 = sbr.rel (%p2724) target = $region80
      $region79: #{forward.6} parent=71 // pred_region
        %v2727 = vpack.c.bf16 %v2716, %v2715
        %v2728 = vpack.c.bf16 %v2718, %v2717
        %v2731 = vunpack.c.l.b16 %v2727
        %v2732 = vunpack.c.h.b16 %v2727
        %v2733 = vunpack.c.l.b16 %v2728
        %v2734 = vunpack.c.h.b16 %v2728
        %v2735 = vpack.c.b16 %v2731, %v2731
        %v2736 = vpack.c.b16 %v2732, %v2732
        %v2737 = vpack.c.b16 %v2733, %v2733
        %v2738 = vpack.c.b16 %v2734, %v2734
        %2743 = vst.msk [vmem:[%s647] sm:$0xf] %vm683, %v2735
        %2744 = vst.msk [vmem:[%s647 + $0x4] sm:$0xf] %vm683, %v2736
        %2745 = vst.msk [vmem:[%s647 + $0x8] sm:$0xf] %vm683, %v2737
        %vm2746 = vcmask 254976
        %2747 = vst.msk [vmem:[%s647 + $0xc] sm:$0x3] %vm2746, %v2738
      $region80: #{forward.6} parent=71 // pred_fallthru
        _
      %p2748 = scmp.lt.s32.totalorder %s28, 0
      %s2749 = scalar_select %p2748, %s28, 0
      %s2750 = smul.addr %s2749, 4
      %s2751 = smul.addr %s2750, 4
      %s2752 = scalar_lea.vmem %s13, %s2751
      // Predicated region
      $region81: #{forward.6} parent=71 // pred_check
        %p2753 = pneg %p392
      $region82: #{forward.6} parent=71 // pred_check_branch
        %2755 = sbr.rel (%p2753) target = $region84
      $region83: #{forward.6} parent=71 // pred_region
        _
      $region84: #{forward.6} parent=71 // pred_fallthru
        _
      // Predicated region
      $region85: #{forward.6} parent=71 // pred_check
        %p2756 = pneg %p392
      $region86: #{forward.6} parent=71 // pred_check_branch
        %2758 = sbr.rel (%p2756) target = $region88
      $region87: #{forward.6} parent=71 // pred_region
        %p2759 = scmp.lt.s32.totalorder %s28, 0
        %s2760 = scalar_select %p2759, %s28, 0
        %s2761 = smul.addr %s2760, 4
        %s2762 = smul.addr %s2761, 4
        %s2763 = scalar_lea.vmem %s13, %s2762
      $region88: #{forward.6} parent=71 // pred_fallthru
        _
    $region72: #{forward.6} parent=5 // pred_fallthru
      _
    %p2764 = scmp.le.s32.totalorder 2, %s19
    // Predicated region
    $region89: #{forward.6} parent=5 // pred_check
      %p2765 = pneg %p2764
    $region90: #{forward.6} parent=5 // pred_check_branch
      %2767 = sbr.rel (%p2765) target = $region92
    $region91: #{forward.6} parent=5 // pred_region
      %s2768 = ssub.s32 %s19, 2
    $region92: #{forward.6} parent=5 // pred_fallthru
      _
  $region6: #{forward.6} parent=0 // loop_footer
    %s23 = sadd.s32 1, %s19
  $region7: #{forward.6} parent=0 // loop_footer_branch
    %18 = sbr.rel target = $region3
  $region8: #{forward.6} parent=0 // loop_exit
    _

</llo_original>
